<compile_context>
chip_gen: v7x
topology: tpu7x:2x2x1
jax: 0.10.0
libtpu: 0.0.40
codegen_flags: <defaults>
</compile_context>

<pallas_src>
import functools

import jax
import jax.numpy as jnp
from jax.experimental import pallas as pl
from jax.experimental.pallas import tpu as pltpu

LN_EPS = 1e-5  # torch.nn.LayerNorm default


def _layernorm(x, gamma, beta):
    mu = jnp.mean(x, axis=-1, keepdims=True)
    xc = x - mu
    var = jnp.mean(xc * xc, axis=-1, keepdims=True)
    return xc * jax.lax.rsqrt(var + LN_EPS) * gamma + beta


def block_kernel(x_ref, wqkv_ref, wproj_ref, w1_ref, w2_ref, vec_ref, o_ref,
                 *, n_head):
    Bb, T, C = x_ref.shape           # block of batch elements
    R = Bb * T                       # flattened token rows fed to the MXU
    H = C // n_head
    F = w1_ref.shape[1]
    scale = H ** -0.5

    # Packed LayerNorm / bias vectors (see wrapper for row order).
    g1 = vec_ref[0:1, :C]
    b1 = vec_ref[1:2, :C]
    g2 = vec_ref[2:3, :C]
    b2 = vec_ref[3:4, :C]
    bp = vec_ref[4:5, :C]            # attention output-proj bias
    bo = vec_ref[5:6, :C]            # fc2 bias
    bh = vec_ref[6:7, :F]            # fc1 bias

    x = x_ref[...].reshape(R, C).astype(jnp.float32)        # (R, C)

    # ---- LayerNorm 1 (f32) --------------------------------------------------
    h1 = _layernorm(x, g1, b1)

    # ---- fused QKV projection: bf16 operands, f32 accumulation --------------
    qkv = jnp.dot(h1.astype(jnp.bfloat16), wqkv_ref[...],
                  preferred_element_type=jnp.float32)        # (R, 3C)
    q = qkv[:, 0 * C:1 * C] * scale   # scale folded into q, not (T,T) logits
    k = qkv[:, 1 * C:2 * C]
    v = qkv[:, 2 * C:3 * C]

    # ---- head-batched attention (non-causal; dropout = identity) ------------
    # Stack the per-head lane slices onto a leading batch axis so the scores,
    # softmax and PV product each run once over (n_head*Bb) batched problems.
    def split_heads(t):
        t3 = t.reshape(Bb, T, C)
        return jnp.concatenate(
            [t3[:, :, h * H:(h + 1) * H] for h in range(n_head)], axis=0)

    qh = split_heads(q).astype(jnp.bfloat16)                 # (n_head*Bb, T, H)
    kh = split_heads(k).astype(jnp.bfloat16)
    vh = split_heads(v).astype(jnp.bfloat16)

    s = jnp.einsum('bqd,bkd->bqk', qh, kh,
                   preferred_element_type=jnp.float32)       # (n_head*Bb, T, T)
    s = s - jnp.max(s, axis=-1, keepdims=True)
    p = jnp.exp(s)
    p = p * pl.reciprocal(jnp.sum(p, axis=-1, keepdims=True), approx=True)
    o = jnp.einsum('bqk,bkd->bqd', p.astype(jnp.bfloat16), vh,
                   preferred_element_type=jnp.float32)       # (n_head*Bb, T, H)

    # Reassemble heads onto the lane axis -> (R, C) lane-dense.
    attn = jnp.concatenate(
        [o[h * Bb:(h + 1) * Bb].reshape(R, H) for h in range(n_head)], axis=-1)

    # ---- output projection + residual ----------------------------------------
    x = x + jnp.dot(attn.astype(jnp.bfloat16), wproj_ref[...],
                    preferred_element_type=jnp.float32) + bp

    # ---- LayerNorm 2 ----------------------------------------------------------
    h2 = _layernorm(x, g2, b2)

    # ---- FeedForward (fc1 -> ReLU -> fc2) + residual --------------------------
    ff = jnp.dot(h2.astype(jnp.bfloat16), w1_ref[...],
                 preferred_element_type=jnp.float32)
    ff = jnp.maximum(ff + bh, 0.0)
    x = x + jnp.dot(ff.astype(jnp.bfloat16), w2_ref[...],
                    preferred_element_type=jnp.float32) + bo

    o_ref[...] = x.reshape(Bb, T, C).astype(o_ref.dtype)


def transformer_block(x, w_qkv, w_proj, b_proj, g1, b1, g2, b2,
                      w1, bf1, w2, bf2, *, n_head, b_blk=None):
    """x: (B, T, C). Weights pre-transposed for `x @ W`. Returns (B, T, C)."""
    B, T, C = x.shape
    F = w1.shape[1]

    # Batch-block so each grid step feeds ~128 MXU rows (B_blk*T).  (On v6e /
    # v7x, 256 rows would be even better when B allows it without collapsing
    # the grid below 2 steps.)
    if b_blk is None:
        b_blk = max(1, min(B, 128 // max(T, 1)))
        while B % b_blk:
            b_blk -= 1
        if B // b_blk < 2 and B > 1:   # keep >= 2 parallel steps for v7x's 2 TCs
            b_blk = max(1, b_blk // 2)
            while B % b_blk:
                b_blk -= 1
    assert B % b_blk == 0

    # Weight matrices go to HBM/VMEM as bf16 (f32 accumulation in-kernel).
    w_qkv_b = w_qkv.astype(jnp.bfloat16)
    w_proj_b = w_proj.astype(jnp.bfloat16)
    w1_b = w1.astype(jnp.bfloat16)
    w2_b = w2.astype(jnp.bfloat16)

    # Pack the seven small vectors into one (8, max(C,F)) f32 array.
    fmax = max(C, F)

    def pad(vv):
        return jnp.pad(vv.astype(jnp.float32), ((0, 0), (0, fmax - vv.shape[1])))

    vecs = jnp.concatenate(
        [pad(g1), pad(b1), pad(g2), pad(b2), pad(b_proj), pad(bf2), pad(bf1),
         jnp.zeros((1, fmax), jnp.float32)], axis=0)          # (8, fmax)

    const2 = lambda b: (0, 0)

    return pl.pallas_call(
        functools.partial(block_kernel, n_head=n_head),
        out_shape=jax.ShapeDtypeStruct((B, T, C), x.dtype),
        grid_spec=pltpu.PrefetchScalarGridSpec(
            num_scalar_prefetch=0,
            grid=(B // b_blk,),
            in_specs=[
                pl.BlockSpec((b_blk, T, C), lambda b: (b, 0, 0)),  # x
                pl.BlockSpec((C, 3 * C), const2),                  # fused Wqkv
                pl.BlockSpec((C, C), const2),                      # Wproj
                pl.BlockSpec((C, F), const2),                      # fc1 W
                pl.BlockSpec((F, C), const2),                      # fc2 W
                pl.BlockSpec((8, fmax), const2),                   # packed vecs
            ],
            out_specs=pl.BlockSpec((b_blk, T, C), lambda b: (b, 0, 0)),
        ),
        compiler_params=pltpu.CompilerParams(
            dimension_semantics=("parallel",),
            # Scaling guard: explicit scoped-VMEM limit well inside v7x's
            # 64 MiB physical VMEM (actual use here is ~1-2 MB).
            vmem_limit_bytes=32 * 1024 * 1024,
        ),
    )(x, w_qkv_b, w_proj_b, w1_b, w2_b, vecs)


def reference_block(x, head_weights, w_proj, b_proj, g1, b1, g2, b2,
                    w1, bf1, w2, bf2):
    """Pure-JAX mirror of the PyTorch Block.forward (eval mode)."""
    def ln(y, g, b):
        mu = y.mean(-1, keepdims=True)
        var = ((y - mu) ** 2).mean(-1, keepdims=True)
        return (y - mu) / jnp.sqrt(var + LN_EPS) * g + b

    h1 = ln(x, g1, b1)
    outs = []
    for wq, wk, wv in head_weights:
        q = h1 @ wq
        k = h1 @ wk
        v = h1 @ wv
        s = (q @ jnp.swapaxes(k, -2, -1)) * (k.shape[-1] ** -0.5)
        p = jax.nn.softmax(s, axis=-1)
        outs.append(p @ v)
    attn = jnp.concatenate(outs, axis=-1) @ w_proj + b_proj
    x = x + attn
    h2 = ln(x, g2, b2)
    ff = jax.nn.relu(h2 @ w1 + bf1) @ w2 + bf2
    return x + ff


if __name__ == "__main__":
    # Block hyperparameters (lane-dense: n_embd = 128).
    n_embd = 128
    n_head = 4
    head_size = n_embd // n_head
    block_size = 16          # sequence length T
    ff_hidden_dim = 256
    # B=16 with T=16 lets the kernel pack 8 batch elements (128 token rows)
    # per grid step while still running 2 parallel grid steps.
    B, T, C = 16, block_size, n_embd
    dt = jnp.float32

    keys = jax.random.split(jax.random.PRNGKey(0), 1 + 3 * n_head + 10)
    x = jax.random.normal(keys[0], (B, T, C), dtype=dt)

    sc = n_embd ** -0.5
    # Per-head weights stored pre-transposed (C, head_size) so x @ W applies.
    head_weights = []
    for h in range(n_head):
        wq = jax.random.normal(keys[1 + 3 * h + 0], (C, head_size), dt) * sc
        wk = jax.random.normal(keys[1 + 3 * h + 1], (C, head_size), dt) * sc
        wv = jax.random.normal(keys[1 + 3 * h + 2], (C, head_size), dt) * sc
        head_weights.append((wq, wk, wv))

    off = 1 + 3 * n_head
    w_proj = jax.random.normal(keys[off + 0], (C, C), dt) * sc
    b_proj = 0.1 * jax.random.normal(keys[off + 1], (1, C), dt)
    g1 = 1.0 + 0.1 * jax.random.normal(keys[off + 2], (1, C), dt)
    b1 = 0.1 * jax.random.normal(keys[off + 3], (1, C), dt)
    g2 = 1.0 + 0.1 * jax.random.normal(keys[off + 4], (1, C), dt)
    b2 = 0.1 * jax.random.normal(keys[off + 5], (1, C), dt)
    w1 = jax.random.normal(keys[off + 6], (C, ff_hidden_dim), dt) * sc
    bf1 = 0.1 * jax.random.normal(keys[off + 7], (1, ff_hidden_dim), dt)
    w2 = jax.random.normal(keys[off + 8], (ff_hidden_dim, C), dt) * (ff_hidden_dim ** -0.5)
    bf2 = 0.1 * jax.random.normal(keys[off + 9], (1, C), dt)

    # Fused QKV weight: [Wq_all | Wk_all | Wv_all], each (C, C) grouped by head.
    w_q_all = jnp.concatenate([hw[0] for hw in head_weights], axis=1)
    w_k_all = jnp.concatenate([hw[1] for hw in head_weights], axis=1)
    w_v_all = jnp.concatenate([hw[2] for hw in head_weights], axis=1)
    w_qkv = jnp.concatenate([w_q_all, w_k_all, w_v_all], axis=1)   # (C, 3C)

    out = transformer_block(x, w_qkv, w_proj, b_proj, g1, b1, g2, b2,
                            w1, bf1, w2, bf2, n_head=n_head)
    out = jax.block_until_ready(out)

    ref = reference_block(x, head_weights, w_proj, b_proj, g1, b1, g2, b2,
                          w1, bf1, w2, bf2)

    assert out.shape == (B, T, C)
    # Tolerance covers bf16 matmul operands (f32 accumulation) and the
    # EUP-approx reciprocal in the softmax denominator vs. the exact f32 ref.
    assert jnp.allclose(out, ref, atol=5e-2, rtol=5e-2)

    print("KERNEL_OK")
</pallas_src>

<mosaic_0001>
module attributes {stable_mosaic.version = 11 : i64} {
  func.func @block_kernel(%arg0: i32, %arg1: memref<8x16x128xf32, #tpu.memory_space<vmem>>, %arg2: memref<128x384xbf16, #tpu.memory_space<vmem>>, %arg3: memref<128x128xbf16, #tpu.memory_space<vmem>>, %arg4: memref<128x256xbf16, #tpu.memory_space<vmem>>, %arg5: memref<256x128xbf16, #tpu.memory_space<vmem>>, %arg6: memref<8x256xf32, #tpu.memory_space<vmem>>, %arg7: memref<8x16x128xf32, #tpu.memory_space<vmem>>) attributes {dimension_semantics = [#tpu.dimension_semantics<parallel>], iteration_bounds = array<i64: 2>, scalar_prefetch = 0 : i64, scratch_operands = 0 : i64, tpu.core_type = #tpu.core_type<tc>, window_params = [{transform_indices = @transform_0, window_bounds = array<i64: 8, 16, 128>}, {pipeline_mode = #tpu.pipeline_mode<synchronous>, transform_indices = @transform_1, window_bounds = array<i64: 128, 384>}, {pipeline_mode = #tpu.pipeline_mode<synchronous>, transform_indices = @transform_2, window_bounds = array<i64: 128, 128>}, {pipeline_mode = #tpu.pipeline_mode<synchronous>, transform_indices = @transform_3, window_bounds = array<i64: 128, 256>}, {pipeline_mode = #tpu.pipeline_mode<synchronous>, transform_indices = @transform_4, window_bounds = array<i64: 256, 128>}, {pipeline_mode = #tpu.pipeline_mode<synchronous>, transform_indices = @transform_5, window_bounds = array<i64: 8, 256>}, {transform_indices = @transform_6, window_bounds = array<i64: 8, 16, 128>}]} {
    %c0 = arith.constant 0 : index
    %c0_0 = arith.constant 0 : index
    %0 = vector.load %arg6[%c0, %c0_0] : memref<8x256xf32, #tpu.memory_space<vmem>>, vector<1x128xf32>
    %c1 = arith.constant 1 : index
    %c0_1 = arith.constant 0 : index
    %1 = vector.load %arg6[%c1, %c0_1] : memref<8x256xf32, #tpu.memory_space<vmem>>, vector<1x128xf32>
    %c2 = arith.constant 2 : index
    %c0_2 = arith.constant 0 : index
    %2 = vector.load %arg6[%c2, %c0_2] : memref<8x256xf32, #tpu.memory_space<vmem>>, vector<1x128xf32>
    %c3 = arith.constant 3 : index
    %c0_3 = arith.constant 0 : index
    %3 = vector.load %arg6[%c3, %c0_3] : memref<8x256xf32, #tpu.memory_space<vmem>>, vector<1x128xf32>
    %c4 = arith.constant 4 : index
    %c0_4 = arith.constant 0 : index
    %4 = vector.load %arg6[%c4, %c0_4] : memref<8x256xf32, #tpu.memory_space<vmem>>, vector<1x128xf32>
    %c5 = arith.constant 5 : index
    %c0_5 = arith.constant 0 : index
    %5 = vector.load %arg6[%c5, %c0_5] : memref<8x256xf32, #tpu.memory_space<vmem>>, vector<1x128xf32>
    %c6 = arith.constant 6 : index
    %c0_6 = arith.constant 0 : index
    %6 = vector.load %arg6[%c6, %c0_6] : memref<8x256xf32, #tpu.memory_space<vmem>>, vector<1x256xf32>
    %c0_7 = arith.constant 0 : index
    %c0_8 = arith.constant 0 : index
    %c0_9 = arith.constant 0 : index
    %7 = vector.load %arg1[%c0_7, %c0_8, %c0_9] : memref<8x16x128xf32, #tpu.memory_space<vmem>>, vector<8x16x128xf32>
    %8 = vector.shape_cast %7 : vector<8x16x128xf32> to vector<128x128xf32>
    %cst = arith.constant dense<0.000000e+00> : vector<128xf32>
    %9 = vector.multi_reduction <add>, %8, %cst [1] : vector<128x128xf32> to vector<128xf32>
    %10 = vector.shape_cast %9 : vector<128xf32> to vector<128x1xf32>
    %cst_10 = arith.constant 1.280000e+02 : f32
    %11 = vector.broadcast %cst_10 : f32 to vector<128x1xf32>
    %12 = arith.divf %10, %11 : vector<128x1xf32>
    %13 = vector.broadcast %12 : vector<128x1xf32> to vector<128x128xf32>
    %14 = arith.subf %8, %13 : vector<128x128xf32>
    %15 = arith.mulf %14, %14 : vector<128x128xf32>
    %cst_11 = arith.constant dense<0.000000e+00> : vector<128xf32>
    %16 = vector.multi_reduction <add>, %15, %cst_11 [1] : vector<128x128xf32> to vector<128xf32>
    %17 = vector.shape_cast %16 : vector<128xf32> to vector<128x1xf32>
    %cst_12 = arith.constant 1.280000e+02 : f32
    %18 = vector.broadcast %cst_12 : f32 to vector<128x1xf32>
    %19 = arith.divf %17, %18 : vector<128x1xf32>
    %cst_13 = arith.constant 9.99999974E-6 : f32
    %20 = vector.broadcast %cst_13 : f32 to vector<128x1xf32>
    %21 = arith.addf %19, %20 : vector<128x1xf32>
    %22 = math.rsqrt %21 : vector<128x1xf32>
    %23 = vector.broadcast %22 : vector<128x1xf32> to vector<128x128xf32>
    %24 = arith.mulf %14, %23 : vector<128x128xf32>
    %25 = vector.broadcast %0 : vector<1x128xf32> to vector<128x128xf32>
    %26 = arith.mulf %24, %25 : vector<128x128xf32>
    %27 = vector.broadcast %1 : vector<1x128xf32> to vector<128x128xf32>
    %28 = arith.addf %26, %27 : vector<128x128xf32>
    %29 = arith.truncf %28 : vector<128x128xf32> to vector<128x128xbf16>
    %c0_14 = arith.constant 0 : index
    %c0_15 = arith.constant 0 : index
    %30 = vector.load %arg2[%c0_14, %c0_15] : memref<128x384xbf16, #tpu.memory_space<vmem>>, vector<128x384xbf16>
    %cst_16 = arith.constant dense<0.000000e+00> : vector<128x384xf32>
    %31 = tpu.matmul %29, %30, %cst_16 {dimension_numbers = #tpu.dot_dimension_numbers<[1], [0], [0], [1], [0, 0, 1, 1], [], []>} : vector<128x128xbf16>, vector<128x384xbf16>, vector<128x384xf32> -> vector<128x384xf32>
    %32 = vector.extract_strided_slice %31 {offsets = [0, 0], sizes = [128, 128], strides = [1, 1]} : vector<128x384xf32> to vector<128x128xf32>
    %cst_17 = arith.constant 0.176776692 : f32
    %33 = vector.broadcast %cst_17 : f32 to vector<128x128xf32>
    %34 = arith.mulf %32, %33 : vector<128x128xf32>
    %35 = vector.extract_strided_slice %31 {offsets = [0, 128], sizes = [128, 128], strides = [1, 1]} : vector<128x384xf32> to vector<128x128xf32>
    %36 = vector.extract_strided_slice %31 {offsets = [0, 256], sizes = [128, 128], strides = [1, 1]} : vector<128x384xf32> to vector<128x128xf32>
    %37 = vector.shape_cast %34 : vector<128x128xf32> to vector<8x16x128xf32>
    %38 = vector.extract_strided_slice %37 {offsets = [0, 0, 0], sizes = [8, 16, 32], strides = [1, 1, 1]} : vector<8x16x128xf32> to vector<8x16x32xf32>
    %39 = vector.extract_strided_slice %37 {offsets = [0, 0, 32], sizes = [8, 16, 32], strides = [1, 1, 1]} : vector<8x16x128xf32> to vector<8x16x32xf32>
    %40 = vector.extract_strided_slice %37 {offsets = [0, 0, 64], sizes = [8, 16, 32], strides = [1, 1, 1]} : vector<8x16x128xf32> to vector<8x16x32xf32>
    %41 = vector.extract_strided_slice %37 {offsets = [0, 0, 96], sizes = [8, 16, 32], strides = [1, 1, 1]} : vector<8x16x128xf32> to vector<8x16x32xf32>
    %42 = tpu.concatenate %38, %39, %40, %41 in 0 : vector<8x16x32xf32>, vector<8x16x32xf32>, vector<8x16x32xf32>, vector<8x16x32xf32> -> vector<32x16x32xf32>
    %43 = arith.truncf %42 : vector<32x16x32xf32> to vector<32x16x32xbf16>
    %44 = vector.shape_cast %35 : vector<128x128xf32> to vector<8x16x128xf32>
    %45 = vector.extract_strided_slice %44 {offsets = [0, 0, 0], sizes = [8, 16, 32], strides = [1, 1, 1]} : vector<8x16x128xf32> to vector<8x16x32xf32>
    %46 = vector.extract_strided_slice %44 {offsets = [0, 0, 32], sizes = [8, 16, 32], strides = [1, 1, 1]} : vector<8x16x128xf32> to vector<8x16x32xf32>
    %47 = vector.extract_strided_slice %44 {offsets = [0, 0, 64], sizes = [8, 16, 32], strides = [1, 1, 1]} : vector<8x16x128xf32> to vector<8x16x32xf32>
    %48 = vector.extract_strided_slice %44 {offsets = [0, 0, 96], sizes = [8, 16, 32], strides = [1, 1, 1]} : vector<8x16x128xf32> to vector<8x16x32xf32>
    %49 = tpu.concatenate %45, %46, %47, %48 in 0 : vector<8x16x32xf32>, vector<8x16x32xf32>, vector<8x16x32xf32>, vector<8x16x32xf32> -> vector<32x16x32xf32>
    %50 = arith.truncf %49 : vector<32x16x32xf32> to vector<32x16x32xbf16>
    %51 = vector.shape_cast %36 : vector<128x128xf32> to vector<8x16x128xf32>
    %52 = vector.extract_strided_slice %51 {offsets = [0, 0, 0], sizes = [8, 16, 32], strides = [1, 1, 1]} : vector<8x16x128xf32> to vector<8x16x32xf32>
    %53 = vector.extract_strided_slice %51 {offsets = [0, 0, 32], sizes = [8, 16, 32], strides = [1, 1, 1]} : vector<8x16x128xf32> to vector<8x16x32xf32>
    %54 = vector.extract_strided_slice %51 {offsets = [0, 0, 64], sizes = [8, 16, 32], strides = [1, 1, 1]} : vector<8x16x128xf32> to vector<8x16x32xf32>
    %55 = vector.extract_strided_slice %51 {offsets = [0, 0, 96], sizes = [8, 16, 32], strides = [1, 1, 1]} : vector<8x16x128xf32> to vector<8x16x32xf32>
    %56 = tpu.concatenate %52, %53, %54, %55 in 0 : vector<8x16x32xf32>, vector<8x16x32xf32>, vector<8x16x32xf32>, vector<8x16x32xf32> -> vector<32x16x32xf32>
    %57 = arith.truncf %56 : vector<32x16x32xf32> to vector<32x16x32xbf16>
    "tpu.trace_start"() <{level = 10 : i32, message = "bqd,bkd->bqk"}> : () -> ()
    %cst_18 = arith.constant dense<0.000000e+00> : vector<32x16x16xf32>
    %58 = tpu.matmul %43, %50, %cst_18 {dimension_numbers = #tpu.dot_dimension_numbers<[2], [2], [1], [1], [0, 0, 0, 1, 1, 1], [0], [0]>} : vector<32x16x32xbf16>, vector<32x16x32xbf16>, vector<32x16x16xf32> -> vector<32x16x16xf32>
    "tpu.trace_stop"() : () -> ()
    %cst_19 = arith.constant dense<0xFF800000> : vector<32x16xf32>
    %59 = vector.multi_reduction <maximumf>, %58, %cst_19 [2] : vector<32x16x16xf32> to vector<32x16xf32>
    %60 = vector.shape_cast %59 : vector<32x16xf32> to vector<32x16x1xf32>
    %61 = vector.broadcast %60 : vector<32x16x1xf32> to vector<32x16x16xf32>
    %62 = arith.subf %58, %61 : vector<32x16x16xf32>
    %63 = math.exp %62 : vector<32x16x16xf32>
    %cst_20 = arith.constant dense<0.000000e+00> : vector<32x16xf32>
    %64 = vector.multi_reduction <add>, %63, %cst_20 [2] : vector<32x16x16xf32> to vector<32x16xf32>
    %65 = vector.shape_cast %64 : vector<32x16xf32> to vector<32x16x1xf32>
    %66 = tpu.reciprocal %65 {approx = true} : vector<32x16x1xf32> -> vector<32x16x1xf32>
    %67 = vector.broadcast %66 : vector<32x16x1xf32> to vector<32x16x16xf32>
    %68 = arith.mulf %63, %67 : vector<32x16x16xf32>
    %69 = arith.truncf %68 : vector<32x16x16xf32> to vector<32x16x16xbf16>
    "tpu.trace_start"() <{level = 10 : i32, message = "bqk,bkd->bqd"}> : () -> ()
    %cst_21 = arith.constant dense<0.000000e+00> : vector<32x16x32xf32>
    %70 = tpu.matmul %69, %57, %cst_21 {dimension_numbers = #tpu.dot_dimension_numbers<[2], [1], [1], [2], [0, 0, 0, 1, 1, 2], [0], [0]>} : vector<32x16x16xbf16>, vector<32x16x32xbf16>, vector<32x16x32xf32> -> vector<32x16x32xf32>
    "tpu.trace_stop"() : () -> ()
    %71 = vector.extract_strided_slice %70 {offsets = [0, 0, 0], sizes = [8, 16, 32], strides = [1, 1, 1]} : vector<32x16x32xf32> to vector<8x16x32xf32>
    %72 = vector.shape_cast %71 : vector<8x16x32xf32> to vector<128x32xf32>
    %73 = vector.extract_strided_slice %70 {offsets = [8, 0, 0], sizes = [8, 16, 32], strides = [1, 1, 1]} : vector<32x16x32xf32> to vector<8x16x32xf32>
    %74 = vector.shape_cast %73 : vector<8x16x32xf32> to vector<128x32xf32>
    %75 = vector.extract_strided_slice %70 {offsets = [16, 0, 0], sizes = [8, 16, 32], strides = [1, 1, 1]} : vector<32x16x32xf32> to vector<8x16x32xf32>
    %76 = vector.shape_cast %75 : vector<8x16x32xf32> to vector<128x32xf32>
    %77 = vector.extract_strided_slice %70 {offsets = [24, 0, 0], sizes = [8, 16, 32], strides = [1, 1, 1]} : vector<32x16x32xf32> to vector<8x16x32xf32>
    %78 = vector.shape_cast %77 : vector<8x16x32xf32> to vector<128x32xf32>
    %79 = tpu.concatenate %72, %74, %76, %78 in 1 : vector<128x32xf32>, vector<128x32xf32>, vector<128x32xf32>, vector<128x32xf32> -> vector<128x128xf32>
    %80 = arith.truncf %79 : vector<128x128xf32> to vector<128x128xbf16>
    %c0_22 = arith.constant 0 : index
    %c0_23 = arith.constant 0 : index
    %81 = vector.load %arg3[%c0_22, %c0_23] : memref<128x128xbf16, #tpu.memory_space<vmem>>, vector<128x128xbf16>
    %cst_24 = arith.constant dense<0.000000e+00> : vector<128x128xf32>
    %82 = tpu.matmul %80, %81, %cst_24 {dimension_numbers = #tpu.dot_dimension_numbers<[1], [0], [0], [1], [0, 0, 1, 1], [], []>} : vector<128x128xbf16>, vector<128x128xbf16>, vector<128x128xf32> -> vector<128x128xf32>
    %83 = arith.addf %8, %82 : vector<128x128xf32>
    %84 = vector.broadcast %4 : vector<1x128xf32> to vector<128x128xf32>
    %85 = arith.addf %83, %84 : vector<128x128xf32>
    %cst_25 = arith.constant dense<0.000000e+00> : vector<128xf32>
    %86 = vector.multi_reduction <add>, %85, %cst_25 [1] : vector<128x128xf32> to vector<128xf32>
    %87 = vector.shape_cast %86 : vector<128xf32> to vector<128x1xf32>
    %cst_26 = arith.constant 1.280000e+02 : f32
    %88 = vector.broadcast %cst_26 : f32 to vector<128x1xf32>
    %89 = arith.divf %87, %88 : vector<128x1xf32>
    %90 = vector.broadcast %89 : vector<128x1xf32> to vector<128x128xf32>
    %91 = arith.subf %85, %90 : vector<128x128xf32>
    %92 = arith.mulf %91, %91 : vector<128x128xf32>
    %cst_27 = arith.constant dense<0.000000e+00> : vector<128xf32>
    %93 = vector.multi_reduction <add>, %92, %cst_27 [1] : vector<128x128xf32> to vector<128xf32>
    %94 = vector.shape_cast %93 : vector<128xf32> to vector<128x1xf32>
    %cst_28 = arith.constant 1.280000e+02 : f32
    %95 = vector.broadcast %cst_28 : f32 to vector<128x1xf32>
    %96 = arith.divf %94, %95 : vector<128x1xf32>
    %cst_29 = arith.constant 9.99999974E-6 : f32
    %97 = vector.broadcast %cst_29 : f32 to vector<128x1xf32>
    %98 = arith.addf %96, %97 : vector<128x1xf32>
    %99 = math.rsqrt %98 : vector<128x1xf32>
    %100 = vector.broadcast %99 : vector<128x1xf32> to vector<128x128xf32>
    %101 = arith.mulf %91, %100 : vector<128x128xf32>
    %102 = vector.broadcast %2 : vector<1x128xf32> to vector<128x128xf32>
    %103 = arith.mulf %101, %102 : vector<128x128xf32>
    %104 = vector.broadcast %3 : vector<1x128xf32> to vector<128x128xf32>
    %105 = arith.addf %103, %104 : vector<128x128xf32>
    %106 = arith.truncf %105 : vector<128x128xf32> to vector<128x128xbf16>
    %c0_30 = arith.constant 0 : index
    %c0_31 = arith.constant 0 : index
    %107 = vector.load %arg4[%c0_30, %c0_31] : memref<128x256xbf16, #tpu.memory_space<vmem>>, vector<128x256xbf16>
    %cst_32 = arith.constant dense<0.000000e+00> : vector<128x256xf32>
    %108 = tpu.matmul %106, %107, %cst_32 {dimension_numbers = #tpu.dot_dimension_numbers<[1], [0], [0], [1], [0, 0, 1, 1], [], []>} : vector<128x128xbf16>, vector<128x256xbf16>, vector<128x256xf32> -> vector<128x256xf32>
    %109 = vector.broadcast %6 : vector<1x256xf32> to vector<128x256xf32>
    %110 = arith.addf %108, %109 : vector<128x256xf32>
    %cst_33 = arith.constant 0.000000e+00 : f32
    %111 = vector.broadcast %cst_33 : f32 to vector<128x256xf32>
    %112 = arith.maximumf %110, %111 : vector<128x256xf32>
    %113 = arith.truncf %112 : vector<128x256xf32> to vector<128x256xbf16>
    %c0_34 = arith.constant 0 : index
    %c0_35 = arith.constant 0 : index
    %114 = vector.load %arg5[%c0_34, %c0_35] : memref<256x128xbf16, #tpu.memory_space<vmem>>, vector<256x128xbf16>
    %cst_36 = arith.constant dense<0.000000e+00> : vector<128x128xf32>
    %115 = tpu.matmul %113, %114, %cst_36 {dimension_numbers = #tpu.dot_dimension_numbers<[1], [0], [0], [1], [0, 0, 1, 1], [], []>} : vector<128x256xbf16>, vector<256x128xbf16>, vector<128x128xf32> -> vector<128x128xf32>
    %116 = arith.addf %85, %115 : vector<128x128xf32>
    %117 = vector.broadcast %5 : vector<1x128xf32> to vector<128x128xf32>
    %118 = arith.addf %116, %117 : vector<128x128xf32>
    %119 = vector.shape_cast %118 : vector<128x128xf32> to vector<8x16x128xf32>
    %c0_37 = arith.constant 0 : index
    %c0_38 = arith.constant 0 : index
    %c0_39 = arith.constant 0 : index
    %120 = vector.load %arg7[%c0_37, %c0_38, %c0_39] : memref<8x16x128xf32, #tpu.memory_space<vmem>>, vector<8x16x128xf32>
    tpu.vector_store %arg7[%c0_37, %c0_38, %c0_39], %119 {strides = array<i32>} : memref<8x16x128xf32, #tpu.memory_space<vmem>>, vector<8x16x128xf32>,
    return
  }
  func.func @transform_0(%arg0: i32) -> (i32, i32, i32) {
    %c0_i32 = arith.constant 0 : i32
    %c0_i32_0 = arith.constant 0 : i32
    %c0_i32_1 = arith.constant 0 : i32
    return %arg0, %c0_i32, %c0_i32_0 : i32, i32, i32
  }
  func.func @transform_1(%arg0: i32) -> (i32, i32) {
    %c0_i32 = arith.constant 0 : i32
    %c0_i32_0 = arith.constant 0 : i32
    %c0_i32_1 = arith.constant 0 : i32
    return %c0_i32, %c0_i32_0 : i32, i32
  }
  func.func @transform_2(%arg0: i32) -> (i32, i32) {
    %c0_i32 = arith.constant 0 : i32
    %c0_i32_0 = arith.constant 0 : i32
    %c0_i32_1 = arith.constant 0 : i32
    return %c0_i32, %c0_i32_0 : i32, i32
  }
  func.func @transform_3(%arg0: i32) -> (i32, i32) {
    %c0_i32 = arith.constant 0 : i32
    %c0_i32_0 = arith.constant 0 : i32
    %c0_i32_1 = arith.constant 0 : i32
    return %c0_i32, %c0_i32_0 : i32, i32
  }
  func.func @transform_4(%arg0: i32) -> (i32, i32) {
    %c0_i32 = arith.constant 0 : i32
    %c0_i32_0 = arith.constant 0 : i32
    %c0_i32_1 = arith.constant 0 : i32
    return %c0_i32, %c0_i32_0 : i32, i32
  }
  func.func @transform_5(%arg0: i32) -> (i32, i32) {
    %c0_i32 = arith.constant 0 : i32
    %c0_i32_0 = arith.constant 0 : i32
    %c0_i32_1 = arith.constant 0 : i32
    return %c0_i32, %c0_i32_0 : i32, i32
  }
  func.func @transform_6(%arg0: i32) -> (i32, i32, i32) {
    %c0_i32 = arith.constant 0 : i32
    %c0_i32_0 = arith.constant 0 : i32
    %c0_i32_1 = arith.constant 0 : i32
    return %arg0, %c0_i32, %c0_i32_0 : i32, i32, i32
  }
}

</mosaic_0001>

<llo_original>
// kernel: tpu_custom_call.1
$region0: #{tpu_custom_call.1}
  #allocation0 [shape = 'u32[]', space=smem, size = 0x4, offset = 0x4, fixed_abs, tag = 'smem constant byte address 0x4 - core index']
  #allocation1 [shape = 'u32[144,128]{1,0:T(1,128)}', space=vmem, size = 0x12000, scoped, tag = 'internal scratch']
  %s0 = inlined_call_operand.hbm [shape: f32[16,16,128], index: 0, kind: input, shape index: {}]
  %s1 = inlined_call_operand.hbm [shape: bf16[128,384], index: 1, kind: input, shape index: {}]
  %s2 = inlined_call_operand.hbm [shape: bf16[128,128], index: 2, kind: input, shape index: {}]
  %s3 = inlined_call_operand.hbm [shape: bf16[128,256], index: 3, kind: input, shape index: {}]
  %s4 = inlined_call_operand.hbm [shape: bf16[256,128], index: 4, kind: input, shape index: {}]
  %s5 = inlined_call_operand.vmem [shape: f32[8,256], index: 5, kind: input, shape index: {}]
  %s6 = inlined_call_operand.hbm [shape: f32[16,16,128], index: 6, kind: output, shape index: {}]
  %s7 = sld [smem:[#allocation0]]
  $region77: #{tpu_custom_call.1} parent=0
    _
  %s9 = ssub.s32 1, %s7
  %s10 = scalar_select 0, %s9, %s7
  $region1: #{tpu_custom_call.1} parent=0
    #allocation2 [shape = 'u8[131072]{0}', space=vmem, size = 0x20000, scoped, tag = 'input window, operand 0']
    #allocation3 [shape = 's32[2]{0}', space=sflag, size = 0x8, scoped, tag = 'scoped memory for tpu_custom_call.1']
    #allocation4 [shape = 's32[2]{0}', space=sflag, size = 0x8, scoped, tag = 'scoped memory for tpu_custom_call.1']
    #allocation5 [shape = 'u8[98304]{0}', space=vmem, size = 0x18000, scoped, tag = 'input window, operand 1, single buffered']
    #allocation6 [shape = 's32[1]{0}', space=sflag, size = 0x4, scoped, tag = 'scoped memory for tpu_custom_call.1']
    #allocation7 [shape = 'u8[32768]{0}', space=vmem, size = 0x8000, scoped, tag = 'input window, operand 2, single buffered']
    #allocation8 [shape = 'u8[65536]{0}', space=vmem, size = 0x10000, scoped, tag = 'input window, operand 3, single buffered']
    #allocation9 [shape = 's32[1]{0}', space=sflag, size = 0x4, scoped, tag = 'scoped memory for tpu_custom_call.1']
    #allocation10 [shape = 'u8[65536]{0}', space=vmem, size = 0x10000, scoped, tag = 'input window, operand 4, single buffered']
    #allocation11 [shape = 'u8[131072]{0}', space=vmem, size = 0x20000, scoped, tag = 'output window, operand 0']
    %11 = vsyncpa [#allocation3], 0
    %s12 = scalar_lea.sflag [#allocation3], 1
    %13 = vsyncpa %s12, 0
    %14 = vsyncpa [#allocation6], 0
    %15 = vsyncpa [#allocation9], 0
    %16 = vsyncpa [#allocation4], 0
    %s17 = scalar_lea.sflag [#allocation4], 1
    %18 = vsyncpa %s17, 0
    loop: start=0, step=1, limit=4
    $region2: #{tpu_custom_call.1} parent=1 // loop_pre_header
      _
    $region3: #{tpu_custom_call.1} parent=1 // loop_header
      %s20 = sphi 0, %s24
      %p21 = scmp.ge.s32.totalorder %s20, 4
      %s30 = sphi 0, %s32
      %s33 = sphi 0, %s30
      %s34 = sphi 0, %s33
      %s50 = sphi 0, %s34
      %s54 = sphi 0, %s54
      %s56 = sphi 0, %s54
      %s57 = sphi 0, %s56
      %s71 = sphi 0, %s57
      %s75 = sphi 0, %s75
      %s77 = sphi 0, %s75
      %s78 = sphi 0, %s77
      %s92 = sphi 0, %s78
      %s96 = sphi 0, %s96
      %s98 = sphi 0, %s96
      %s99 = sphi 0, %s98
      %s113 = sphi 0, %s99
      %s117 = sphi 0, %s117
      %s119 = sphi 0, %s117
      %s120 = sphi 0, %s119
      %s134 = sphi 0, %s120
      %s138 = sphi 0, %s138
      %s140 = sphi 0, %s138
      %s141 = sphi 0, %s140
      %s155 = sphi 0, %s141
      %s161 = sphi 0, %s163
      %s164 = sphi 0, %s161
      %s165 = sphi 0, %s164
      %s181 = sphi 0, %s165
    $region4: #{tpu_custom_call.1} parent=1 // loop_header_branch
      %23 = sbr.rel (%p21) target = $region8
    $region5: #{tpu_custom_call.1} parent=1 // loop_body
      %s25 = ssub.s32 %s20, 1
      %s26 = ssub.s32 %s20, 2
      %s27 = sadd.s32 %s20, 1
      %s28 = ssub.s32 %s20, %s27
      %p29 = scmp.eq.s32.totalorder %s28, 0
      %s31 = sadd.s32 %s30, 1
      %s32 = scalar_select %p29, %s30, %s31
      %p35 = pneg %p29
      %p36 = scmp.eq.s32.totalorder %s20, 1
      %p37 = por %p35, %p36
      %p38 = scmp.ne.s32.totalorder %s30, %s33
      %p39 = scmp.eq.s32.totalorder %s20, 0
      %p40 = por %p38, %p39
      %p41 = scmp.ne.s32.totalorder %s30, %s33
      %p42 = scmp.eq.s32.totalorder %s25, 1
      %p43 = por %p41, %p42
      %p44 = scmp.ne.s32.totalorder %s33, %s34
      %p45 = scmp.eq.s32.totalorder %s25, 0
      %p46 = por %p44, %p45
      %p47 = scmp.ne.s32.totalorder %s33, %s34
      %p48 = scmp.eq.s32.totalorder %s26, 1
      %p49 = por %p47, %p48
      %p51 = scmp.ne.s32.totalorder %s34, %s50
      %p52 = scmp.eq.s32.totalorder %s26, 0
      %p53 = por %p51, %p52
      %s55 = sadd.s32 %s54, 1
      %p58 = scmp.eq.s32.totalorder %s20, 1
      %p59 = scmp.ne.s32.totalorder %s54, %s56
      %p60 = scmp.eq.s32.totalorder %s20, 0
      %p61 = por %p59, %p60
      %p62 = scmp.ne.s32.totalorder %s54, %s56
      %p63 = scmp.eq.s32.totalorder %s25, 1
      %p64 = por %p62, %p63
      %p65 = scmp.ne.s32.totalorder %s56, %s57
      %p66 = scmp.eq.s32.totalorder %s25, 0
      %p67 = por %p65, %p66
      %p68 = scmp.ne.s32.totalorder %s56, %s57
      %p69 = scmp.eq.s32.totalorder %s26, 1
      %p70 = por %p68, %p69
      %p72 = scmp.ne.s32.totalorder %s57, %s71
      %p73 = scmp.eq.s32.totalorder %s26, 0
      %p74 = por %p72, %p73
      %s76 = sadd.s32 %s75, 1
      %p79 = scmp.eq.s32.totalorder %s20, 1
      %p80 = scmp.ne.s32.totalorder %s75, %s77
      %p81 = scmp.eq.s32.totalorder %s20, 0
      %p82 = por %p80, %p81
      %p83 = scmp.ne.s32.totalorder %s75, %s77
      %p84 = scmp.eq.s32.totalorder %s25, 1
      %p85 = por %p83, %p84
      %p86 = scmp.ne.s32.totalorder %s77, %s78
      %p87 = scmp.eq.s32.totalorder %s25, 0
      %p88 = por %p86, %p87
      %p89 = scmp.ne.s32.totalorder %s77, %s78
      %p90 = scmp.eq.s32.totalorder %s26, 1
      %p91 = por %p89, %p90
      %p93 = scmp.ne.s32.totalorder %s78, %s92
      %p94 = scmp.eq.s32.totalorder %s26, 0
      %p95 = por %p93, %p94
      %s97 = sadd.s32 %s96, 1
      %p100 = scmp.eq.s32.totalorder %s20, 1
      %p101 = scmp.ne.s32.totalorder %s96, %s98
      %p102 = scmp.eq.s32.totalorder %s20, 0
      %p103 = por %p101, %p102
      %p104 = scmp.ne.s32.totalorder %s96, %s98
      %p105 = scmp.eq.s32.totalorder %s25, 1
      %p106 = por %p104, %p105
      %p107 = scmp.ne.s32.totalorder %s98, %s99
      %p108 = scmp.eq.s32.totalorder %s25, 0
      %p109 = por %p107, %p108
      %p110 = scmp.ne.s32.totalorder %s98, %s99
      %p111 = scmp.eq.s32.totalorder %s26, 1
      %p112 = por %p110, %p111
      %p114 = scmp.ne.s32.totalorder %s99, %s113
      %p115 = scmp.eq.s32.totalorder %s26, 0
      %p116 = por %p114, %p115
      %s118 = sadd.s32 %s117, 1
      %p121 = scmp.eq.s32.totalorder %s20, 1
      %p122 = scmp.ne.s32.totalorder %s117, %s119
      %p123 = scmp.eq.s32.totalorder %s20, 0
      %p124 = por %p122, %p123
      %p125 = scmp.ne.s32.totalorder %s117, %s119
      %p126 = scmp.eq.s32.totalorder %s25, 1
      %p127 = por %p125, %p126
      %p128 = scmp.ne.s32.totalorder %s119, %s120
      %p129 = scmp.eq.s32.totalorder %s25, 0
      %p130 = por %p128, %p129
      %p131 = scmp.ne.s32.totalorder %s119, %s120
      %p132 = scmp.eq.s32.totalorder %s26, 1
      %p133 = por %p131, %p132
      %p135 = scmp.ne.s32.totalorder %s120, %s134
      %p136 = scmp.eq.s32.totalorder %s26, 0
      %p137 = por %p135, %p136
      %s139 = sadd.s32 %s138, 1
      %p142 = scmp.eq.s32.totalorder %s20, 1
      %p143 = scmp.ne.s32.totalorder %s138, %s140
      %p144 = scmp.eq.s32.totalorder %s20, 0
      %p145 = por %p143, %p144
      %p146 = scmp.ne.s32.totalorder %s138, %s140
      %p147 = scmp.eq.s32.totalorder %s25, 1
      %p148 = por %p146, %p147
      %p149 = scmp.ne.s32.totalorder %s140, %s141
      %p150 = scmp.eq.s32.totalorder %s25, 0
      %p151 = por %p149, %p150
      %p152 = scmp.ne.s32.totalorder %s140, %s141
      %p153 = scmp.eq.s32.totalorder %s26, 1
      %p154 = por %p152, %p153
      %p156 = scmp.ne.s32.totalorder %s141, %s155
      %p157 = scmp.eq.s32.totalorder %s26, 0
      %p158 = por %p156, %p157
      %s159 = ssub.s32 %s20, %s27
      %p160 = scmp.eq.s32.totalorder %s159, 0
      %s162 = sadd.s32 %s161, 1
      %s163 = scalar_select %p160, %s161, %s162
      %p166 = pneg %p160
      %p167 = scmp.eq.s32.totalorder %s20, 1
      %p168 = por %p166, %p167
      %p169 = scmp.ne.s32.totalorder %s161, %s164
      %p170 = scmp.eq.s32.totalorder %s20, 0
      %p171 = por %p169, %p170
      %p172 = scmp.ne.s32.totalorder %s161, %s164
      %p173 = scmp.eq.s32.totalorder %s25, 1
      %p174 = por %p172, %p173
      %p175 = scmp.ne.s32.totalorder %s164, %s165
      %p176 = scmp.eq.s32.totalorder %s25, 0
      %p177 = por %p175, %p176
      %p178 = scmp.ne.s32.totalorder %s164, %s165
      %p179 = scmp.eq.s32.totalorder %s26, 1
      %p180 = por %p178, %p179
      %p182 = scmp.ne.s32.totalorder %s165, %s181
      %p183 = scmp.eq.s32.totalorder %s26, 0
      %p184 = por %p182, %p183
      %p185 = scmp.le.s32.totalorder 1, %s20
      %p186 = scmp.lt.s32.totalorder %s20, 3
      %p187 = pnand %p185, %p186
      %p188 = pneg %p187
      // Predicated region
      $region9: #{tpu_custom_call.1} parent=5 // pred_check
        _
      $region10: #{tpu_custom_call.1} parent=5 // pred_check_branch
        %190 = sbr.rel (%p187) target = $region12
      $region11: #{tpu_custom_call.1} parent=5 // pred_region
        %s191 = ssub.s32 %s20, 1
        // Predicated region
        $region13: #{tpu_custom_call.1} parent=11 // pred_check
          %p192 = pneg %p67
        $region14: #{tpu_custom_call.1} parent=11 // pred_check_branch
          %194 = sbr.rel (%p192) target = $region16
        $region15: #{tpu_custom_call.1} parent=11 // pred_region
          %s196 = ssub.s32 3072, 3072
          %197 = vsyncadd [#allocation6], %s196
          %s198 = sshll.u32 [#allocation5], 4
          %s199 = int_to_ptr.vmem [resolvable:$true] %s198
          %204 = dma.hbm_to_vmem [thread:$0]  %s1, 3072, %s199, [#allocation6], 192, 192, 12
        $region16: #{tpu_custom_call.1} parent=11 // pred_fallthru
          _
        // Predicated region
        $region17: #{tpu_custom_call.1} parent=11 // pred_check
          %p205 = pneg %p88
        $region18: #{tpu_custom_call.1} parent=11 // pred_check_branch
          %207 = sbr.rel (%p205) target = $region20
        $region19: #{tpu_custom_call.1} parent=11 // pred_region
          %s209 = ssub.s32 1024, 1024
          %210 = vsyncadd [#allocation6], %s209
          %s211 = sshll.u32 [#allocation7], 4
          %s212 = int_to_ptr.vmem [resolvable:$true] %s211
          %217 = dma.hbm_to_vmem [thread:$0]  %s2, 1024, %s212, [#allocation6], 64, 64, 4
        $region20: #{tpu_custom_call.1} parent=11 // pred_fallthru
          _
        // Predicated region
        $region21: #{tpu_custom_call.1} parent=11 // pred_check
          %p218 = pneg %p109
        $region22: #{tpu_custom_call.1} parent=11 // pred_check_branch
          %220 = sbr.rel (%p218) target = $region24
        $region23: #{tpu_custom_call.1} parent=11 // pred_region
          %s222 = ssub.s32 2048, 2048
          %223 = vsyncadd [#allocation9], %s222
          %s224 = sshll.u32 [#allocation8], 4
          %s225 = int_to_ptr.vmem [resolvable:$true] %s224
          %230 = dma.hbm_to_vmem [thread:$0]  %s3, 2048, %s225, [#allocation9], 128, 128, 8
        $region24: #{tpu_custom_call.1} parent=11 // pred_fallthru
          _
        // Predicated region
        $region25: #{tpu_custom_call.1} parent=11 // pred_check
          %p231 = pneg %p130
        $region26: #{tpu_custom_call.1} parent=11 // pred_check_branch
          %233 = sbr.rel (%p231) target = $region28
        $region27: #{tpu_custom_call.1} parent=11 // pred_region
          %s235 = ssub.s32 2048, 2048
          %236 = vsyncadd [#allocation9], %s235
          %s237 = sshll.u32 [#allocation10], 4
          %s238 = int_to_ptr.vmem [resolvable:$true] %s237
          %243 = dma.hbm_to_vmem [thread:$0]  %s4, 2048, %s238, [#allocation9], 64, 64, 4
        $region28: #{tpu_custom_call.1} parent=11 // pred_fallthru
          _
        // Predicated region
        $region29: #{tpu_custom_call.1} parent=11 // pred_check
          %p244 = pneg %p151
        $region30: #{tpu_custom_call.1} parent=11 // pred_check_branch
          %246 = sbr.rel (%p244) target = $region32
        $region31: #{tpu_custom_call.1} parent=11 // pred_region
          _
        $region32: #{tpu_custom_call.1} parent=11 // pred_fallthru
          _
      $region12: #{tpu_custom_call.1} parent=5 // pred_fallthru
        _
      %p247 = scmp.lt.s32.totalorder %s20, 2
      // Predicated region
      $region33: #{tpu_custom_call.1} parent=5 // pred_check
        %p248 = pneg %p247
      $region34: #{tpu_custom_call.1} parent=5 // pred_check_branch
        %250 = sbr.rel (%p248) target = $region36
      $region35: #{tpu_custom_call.1} parent=5 // pred_region
        // Predicated region
        $region37: #{tpu_custom_call.1} parent=35 // pred_check
          %p251 = pneg %p40
        $region38: #{tpu_custom_call.1} parent=35 // pred_check_branch
          %253 = sbr.rel (%p251) target = $region40
        $region39: #{tpu_custom_call.1} parent=35 // pred_region
          %s254 = sand.u32 %s30, 1
          %s255 = scalar_lea.sflag [#allocation3], %s254
          %s256 = sand.u32 %s30, 1
          %s257 = smul.addr %s256, 128
          %s258 = scalar_lea.vmem [#allocation2], %s257
          %s259 = smul.u32 8, %s20
          %s261 = ssub.s32 2048, 2048
          %262 = vsyncadd %s255, %s261
          %s263 = smul.addr %s259, 2
          %s264 = smul.addr %s263, 128
          %s265 = scalar_lea.hbm %s0, %s264
          %s266 = sshll.u32 %s258, 4
          %s267 = int_to_ptr.vmem [resolvable:$true] %s266
          %272 = dma.hbm_to_vmem [thread:$0]  %s265, 2048, %s267, %s255, 128, 128, 8
        $region40: #{tpu_custom_call.1} parent=35 // pred_fallthru
          _
      $region36: #{tpu_custom_call.1} parent=5 // pred_fallthru
        _
      %p273 = scmp.le.s32.totalorder 1, %s20
      %p274 = scmp.lt.s32.totalorder %s20, 3
      %p275 = pnand %p273, %p274
      %p276 = pneg %p275
      // Predicated region
      $region41: #{tpu_custom_call.1} parent=5 // pred_check
        _
      $region42: #{tpu_custom_call.1} parent=5 // pred_check_branch
        %278 = sbr.rel (%p275) target = $region44
      $region43: #{tpu_custom_call.1} parent=5 // pred_region
        %s279 = ssub.s32 %s20, 1
        %s280 = sand.u32 %s33, 1
        %s281 = scalar_lea.sflag [#allocation3], %s280
        %s282 = sand.u32 %s33, 1
        %s283 = smul.addr %s282, 128
        %s284 = scalar_lea.vmem [#allocation2], %s283
        // Predicated region
        $region45: #{tpu_custom_call.1} parent=43 // pred_check
          %p285 = pneg %p46
        $region46: #{tpu_custom_call.1} parent=43 // pred_check_branch
          %287 = sbr.rel (%p285) target = $region48
        $region47: #{tpu_custom_call.1} parent=43 // pred_region
          %288 = dma.done %s281, 2048
        $region48: #{tpu_custom_call.1} parent=43 // pred_fallthru
          _
        // Predicated region
        $region49: #{tpu_custom_call.1} parent=43 // pred_check
          %p289 = pneg %p67
        $region50: #{tpu_custom_call.1} parent=43 // pred_check_branch
          %291 = sbr.rel (%p289) target = $region52
        $region51: #{tpu_custom_call.1} parent=43 // pred_region
          %292 = dma.done [#allocation6], 3072
        $region52: #{tpu_custom_call.1} parent=43 // pred_fallthru
          _
        // Predicated region
        $region53: #{tpu_custom_call.1} parent=43 // pred_check
          %p293 = pneg %p88
        $region54: #{tpu_custom_call.1} parent=43 // pred_check_branch
          %295 = sbr.rel (%p293) target = $region56
        $region55: #{tpu_custom_call.1} parent=43 // pred_region
          %296 = dma.done [#allocation6], 1024
        $region56: #{tpu_custom_call.1} parent=43 // pred_fallthru
          _
        // Predicated region
        $region57: #{tpu_custom_call.1} parent=43 // pred_check
          %p297 = pneg %p109
        $region58: #{tpu_custom_call.1} parent=43 // pred_check_branch
          %299 = sbr.rel (%p297) target = $region60
        $region59: #{tpu_custom_call.1} parent=43 // pred_region
          %300 = dma.done [#allocation9], 2048
        $region60: #{tpu_custom_call.1} parent=43 // pred_fallthru
          _
        // Predicated region
        $region61: #{tpu_custom_call.1} parent=43 // pred_check
          %p301 = pneg %p130
        $region62: #{tpu_custom_call.1} parent=43 // pred_check_branch
          %303 = sbr.rel (%p301) target = $region64
        $region63: #{tpu_custom_call.1} parent=43 // pred_region
          %304 = dma.done [#allocation9], 2048
        $region64: #{tpu_custom_call.1} parent=43 // pred_fallthru
          _
        %s305 = sand.u32 %s33, 1
        %s306 = scalar_lea.sflag [#allocation3], %s305
        %s307 = sand.u32 %s33, 1
        %s308 = smul.addr %s307, 128
        %s309 = scalar_lea.vmem [#allocation2], %s308
        %p310 = pneg %p46
        %p311 = pneg %p43
        %p312 = pneg %p67
        %p313 = pneg %p64
        %p314 = pneg %p88
        %p315 = pneg %p85
        %p316 = pneg %p109
        %p317 = pneg %p106
        %p318 = pneg %p130
        %p319 = pneg %p127
        %p320 = pneg %p151
        %p321 = pneg %p148
        %p322 = pneg %p177
        %p323 = pneg %p174
        %s324 = sand.u32 %s164, 1
        %s325 = scalar_lea.sflag [#allocation4], %s324
        %s326 = sand.u32 %s164, 1
        %s327 = smul.addr %s326, 128
        %s328 = scalar_lea.vmem [#allocation11], %s327
        %s329 = smul.u32 8, %s25
        %s330 = smul.u32 8, %s25
        %v332 = vld [vmem:[%s5] ss:$0 sm:$0xff]
        %v333 = vld [vmem:[%s5 + $0x1] ss:$0 sm:$0xff]
        %v334 = vld [vmem:[%s5 + $0x2] ss:$0 sm:$0xff]
        %v335 = vld [vmem:[%s5 + $0x3] ss:$0 sm:$0xff]
        %v336 = vld [vmem:[%s5 + $0x4] ss:$0 sm:$0xff]
        %v337 = vld [vmem:[%s5 + $0x5] ss:$0 sm:$0xff]
        %s338 = scalar_lea.vmem %s5, 6
        %v339 = vld [vmem:[%s338] ss:$8 sm:$0x3]
        %v340 = vld [vmem:[%s284] sm:$0xff]
        %v341 = vld [vmem:[%s284 + $0x8] sm:$0xff]
        %v342 = vld [vmem:[%s284 + $0x10] sm:$0xff]
        %v343 = vld [vmem:[%s284 + $0x18] sm:$0xff]
        %v344 = vld [vmem:[%s284 + $0x20] sm:$0xff]
        %v345 = vld [vmem:[%s284 + $0x28] sm:$0xff]
        %v346 = vld [vmem:[%s284 + $0x30] sm:$0xff]
        %v347 = vld [vmem:[%s284 + $0x38] sm:$0xff]
        %v348 = vld [vmem:[%s284 + $0x40] sm:$0xff]
        %v349 = vld [vmem:[%s284 + $0x48] sm:$0xff]
        %v350 = vld [vmem:[%s284 + $0x50] sm:$0xff]
        %v351 = vld [vmem:[%s284 + $0x58] sm:$0xff]
        %v352 = vld [vmem:[%s284 + $0x60] sm:$0xff]
        %v353 = vld [vmem:[%s284 + $0x68] sm:$0xff]
        %v354 = vld [vmem:[%s284 + $0x70] sm:$0xff]
        %v355 = vld [vmem:[%s284 + $0x78] sm:$0xff]
        %356 = vadd.xlane.f32.xlu0 %v340
        %v357 = vpop.xlane.xlu0 %356
        %358 = vadd.xlane.f32.xlu0 %v341
        %v359 = vpop.xlane.xlu0 %358
        %360 = vadd.xlane.f32.xlu0 %v342
        %v361 = vpop.xlane.xlu0 %360
        %362 = vadd.xlane.f32.xlu0 %v343
        %v363 = vpop.xlane.xlu0 %362
        %364 = vadd.xlane.f32.xlu0 %v344
        %v365 = vpop.xlane.xlu0 %364
        %366 = vadd.xlane.f32.xlu0 %v345
        %v367 = vpop.xlane.xlu0 %366
        %368 = vadd.xlane.f32.xlu0 %v346
        %v369 = vpop.xlane.xlu0 %368
        %370 = vadd.xlane.f32.xlu0 %v347
        %v371 = vpop.xlane.xlu0 %370
        %372 = vadd.xlane.f32.xlu0 %v348
        %v373 = vpop.xlane.xlu0 %372
        %374 = vadd.xlane.f32.xlu0 %v349
        %v375 = vpop.xlane.xlu0 %374
        %376 = vadd.xlane.f32.xlu0 %v350
        %v377 = vpop.xlane.xlu0 %376
        %378 = vadd.xlane.f32.xlu0 %v351
        %v379 = vpop.xlane.xlu0 %378
        %380 = vadd.xlane.f32.xlu0 %v352
        %v381 = vpop.xlane.xlu0 %380
        %382 = vadd.xlane.f32.xlu0 %v353
        %v383 = vpop.xlane.xlu0 %382
        %384 = vadd.xlane.f32.xlu0 %v354
        %v385 = vpop.xlane.xlu0 %384
        %386 = vadd.xlane.f32.xlu0 %v355
        %v387 = vpop.xlane.xlu0 %386
        %v388 = vrcp.pop 128.0
        %v389 = vmul.f32 %v357, %v388
        %v390 = vmul.f32 %v359, %v388
        %v391 = vmul.f32 %v361, %v388
        %v392 = vmul.f32 %v363, %v388
        %v393 = vmul.f32 %v365, %v388
        %v394 = vmul.f32 %v367, %v388
        %v395 = vmul.f32 %v369, %v388
        %v396 = vmul.f32 %v371, %v388
        %v397 = vmul.f32 %v373, %v388
        %v398 = vmul.f32 %v375, %v388
        %v399 = vmul.f32 %v377, %v388
        %v400 = vmul.f32 %v379, %v388
        %v401 = vmul.f32 %v381, %v388
        %v402 = vmul.f32 %v383, %v388
        %v403 = vmul.f32 %v385, %v388
        %v404 = vmul.f32 %v387, %v388
        %v405 = vsub.f32 %v340, %v389
        %v406 = vsub.f32 %v341, %v390
        %v407 = vsub.f32 %v342, %v391
        %v408 = vsub.f32 %v343, %v392
        %v409 = vsub.f32 %v344, %v393
        %v410 = vsub.f32 %v345, %v394
        %v411 = vsub.f32 %v346, %v395
        %v412 = vsub.f32 %v347, %v396
        %v413 = vsub.f32 %v348, %v397
        %v414 = vsub.f32 %v349, %v398
        %v415 = vsub.f32 %v350, %v399
        %v416 = vsub.f32 %v351, %v400
        %v417 = vsub.f32 %v352, %v401
        %v418 = vsub.f32 %v353, %v402
        %v419 = vsub.f32 %v354, %v403
        %v420 = vsub.f32 %v355, %v404
        %v421 = vmul.f32 %v405, %v405
        %v422 = vmul.f32 %v406, %v406
        %v423 = vmul.f32 %v407, %v407
        %v424 = vmul.f32 %v408, %v408
        %v425 = vmul.f32 %v409, %v409
        %v426 = vmul.f32 %v410, %v410
        %v427 = vmul.f32 %v411, %v411
        %v428 = vmul.f32 %v412, %v412
        %v429 = vmul.f32 %v413, %v413
        %v430 = vmul.f32 %v414, %v414
        %v431 = vmul.f32 %v415, %v415
        %v432 = vmul.f32 %v416, %v416
        %v433 = vmul.f32 %v417, %v417
        %v434 = vmul.f32 %v418, %v418
        %v435 = vmul.f32 %v419, %v419
        %v436 = vmul.f32 %v420, %v420
        %437 = vadd.xlane.f32.xlu0 %v421
        %v438 = vpop.xlane.xlu0 %437
        %439 = vadd.xlane.f32.xlu0 %v422
        %v440 = vpop.xlane.xlu0 %439
        %441 = vadd.xlane.f32.xlu0 %v423
        %v442 = vpop.xlane.xlu0 %441
        %443 = vadd.xlane.f32.xlu0 %v424
        %v444 = vpop.xlane.xlu0 %443
        %445 = vadd.xlane.f32.xlu0 %v425
        %v446 = vpop.xlane.xlu0 %445
        %447 = vadd.xlane.f32.xlu0 %v426
        %v448 = vpop.xlane.xlu0 %447
        %449 = vadd.xlane.f32.xlu0 %v427
        %v450 = vpop.xlane.xlu0 %449
        %451 = vadd.xlane.f32.xlu0 %v428
        %v452 = vpop.xlane.xlu0 %451
        %453 = vadd.xlane.f32.xlu0 %v429
        %v454 = vpop.xlane.xlu0 %453
        %455 = vadd.xlane.f32.xlu0 %v430
        %v456 = vpop.xlane.xlu0 %455
        %457 = vadd.xlane.f32.xlu0 %v431
        %v458 = vpop.xlane.xlu0 %457
        %459 = vadd.xlane.f32.xlu0 %v432
        %v460 = vpop.xlane.xlu0 %459
        %461 = vadd.xlane.f32.xlu0 %v433
        %v462 = vpop.xlane.xlu0 %461
        %463 = vadd.xlane.f32.xlu0 %v434
        %v464 = vpop.xlane.xlu0 %463
        %465 = vadd.xlane.f32.xlu0 %v435
        %v466 = vpop.xlane.xlu0 %465
        %467 = vadd.xlane.f32.xlu0 %v436
        %v468 = vpop.xlane.xlu0 %467
        %v469 = vmul.f32 %v438, %v388
        %v470 = vmul.f32 %v440, %v388
        %v471 = vmul.f32 %v442, %v388
        %v472 = vmul.f32 %v444, %v388
        %v473 = vmul.f32 %v446, %v388
        %v474 = vmul.f32 %v448, %v388
        %v475 = vmul.f32 %v450, %v388
        %v476 = vmul.f32 %v452, %v388
        %v477 = vmul.f32 %v454, %v388
        %v478 = vmul.f32 %v456, %v388
        %v479 = vmul.f32 %v458, %v388
        %v480 = vmul.f32 %v460, %v388
        %v481 = vmul.f32 %v462, %v388
        %v482 = vmul.f32 %v464, %v388
        %v483 = vmul.f32 %v466, %v388
        %v484 = vmul.f32 %v468, %v388
        %v485 = vadd.f32 %v469, 1e-05
        %v486 = vadd.f32 %v470, 1e-05
        %v487 = vadd.f32 %v471, 1e-05
        %v488 = vadd.f32 %v472, 1e-05
        %v489 = vadd.f32 %v473, 1e-05
        %v490 = vadd.f32 %v474, 1e-05
        %v491 = vadd.f32 %v475, 1e-05
        %v492 = vadd.f32 %v476, 1e-05
        %v493 = vadd.f32 %v477, 1e-05
        %v494 = vadd.f32 %v478, 1e-05
        %v495 = vadd.f32 %v479, 1e-05
        %v496 = vadd.f32 %v480, 1e-05
        %v497 = vadd.f32 %v481, 1e-05
        %v498 = vadd.f32 %v482, 1e-05
        %v499 = vadd.f32 %v483, 1e-05
        %v500 = vadd.f32 %v484, 1e-05
        %v501 = vrsqrt.pop %v485
        %v502 = vrsqrt.pop %v486
        %v503 = vrsqrt.pop %v487
        %v504 = vrsqrt.pop %v488
        %v505 = vrsqrt.pop %v489
        %v506 = vrsqrt.pop %v490
        %v507 = vrsqrt.pop %v491
        %v508 = vrsqrt.pop %v492
        %v509 = vrsqrt.pop %v493
        %v510 = vrsqrt.pop %v494
        %v511 = vrsqrt.pop %v495
        %v512 = vrsqrt.pop %v496
        %v513 = vrsqrt.pop %v497
        %v514 = vrsqrt.pop %v498
        %v515 = vrsqrt.pop %v499
        %v516 = vrsqrt.pop %v500
        %v517 = vmul.f32 %v405, %v501
        %v518 = vmul.f32 %v406, %v502
        %v519 = vmul.f32 %v407, %v503
        %v520 = vmul.f32 %v408, %v504
        %v521 = vmul.f32 %v409, %v505
        %v522 = vmul.f32 %v410, %v506
        %v523 = vmul.f32 %v411, %v507
        %v524 = vmul.f32 %v412, %v508
        %v525 = vmul.f32 %v413, %v509
        %v526 = vmul.f32 %v414, %v510
        %v527 = vmul.f32 %v415, %v511
        %v528 = vmul.f32 %v416, %v512
        %v529 = vmul.f32 %v417, %v513
        %v530 = vmul.f32 %v418, %v514
        %v531 = vmul.f32 %v419, %v515
        %v532 = vmul.f32 %v420, %v516
        %v533 = vmul.f32 %v517, %v332
        %v534 = vmul.f32 %v518, %v332
        %v535 = vmul.f32 %v519, %v332
        %v536 = vmul.f32 %v520, %v332
        %v537 = vmul.f32 %v521, %v332
        %v538 = vmul.f32 %v522, %v332
        %v539 = vmul.f32 %v523, %v332
        %v540 = vmul.f32 %v524, %v332
        %v541 = vmul.f32 %v525, %v332
        %v542 = vmul.f32 %v526, %v332
        %v543 = vmul.f32 %v527, %v332
        %v544 = vmul.f32 %v528, %v332
        %v545 = vmul.f32 %v529, %v332
        %v546 = vmul.f32 %v530, %v332
        %v547 = vmul.f32 %v531, %v332
        %v548 = vmul.f32 %v532, %v332
        %v549 = vadd.f32 %v533, %v333
        %v550 = vadd.f32 %v534, %v333
        %v551 = vadd.f32 %v535, %v333
        %v552 = vadd.f32 %v536, %v333
        %v553 = vadd.f32 %v537, %v333
        %v554 = vadd.f32 %v538, %v333
        %v555 = vadd.f32 %v539, %v333
        %v556 = vadd.f32 %v540, %v333
        %v557 = vadd.f32 %v541, %v333
        %v558 = vadd.f32 %v542, %v333
        %v559 = vadd.f32 %v543, %v333
        %v560 = vadd.f32 %v544, %v333
        %v561 = vadd.f32 %v545, %v333
        %v562 = vadd.f32 %v546, %v333
        %v563 = vadd.f32 %v547, %v333
        %v564 = vadd.f32 %v548, %v333
        %v565 = vpack.c.bf16 %v550, %v549
        %v566 = vpack.c.bf16 %v552, %v551
        %v567 = vpack.c.bf16 %v554, %v553
        %v568 = vpack.c.bf16 %v556, %v555
        %v569 = vpack.c.bf16 %v558, %v557
        %v570 = vpack.c.bf16 %v560, %v559
        %v571 = vpack.c.bf16 %v562, %v561
        %v572 = vpack.c.bf16 %v564, %v563
        %v573 = vld [vmem:[#allocation5] sm:$0xff]
        %v574 = vld [vmem:[#allocation5 + $0x8] sm:$0xf]
        %v575 = vld [vmem:[#allocation5 + $0xc] sm:$0xff]
        %v576 = vld [vmem:[#allocation5 + $0x14] sm:$0xf]
        %v577 = vld [vmem:[#allocation5 + $0x18] sm:$0xff]
        %v578 = vld [vmem:[#allocation5 + $0x20] sm:$0xf]
        %v579 = vld [vmem:[#allocation5 + $0x24] sm:$0xff]
        %v580 = vld [vmem:[#allocation5 + $0x2c] sm:$0xf]
        %v581 = vld [vmem:[#allocation5 + $0x30] sm:$0xff]
        %v582 = vld [vmem:[#allocation5 + $0x38] sm:$0xf]
        %v583 = vld [vmem:[#allocation5 + $0x3c] sm:$0xff]
        %v584 = vld [vmem:[#allocation5 + $0x44] sm:$0xf]
        %v585 = vld [vmem:[#allocation5 + $0x48] sm:$0xff]
        %v586 = vld [vmem:[#allocation5 + $0x50] sm:$0xf]
        %v587 = vld [vmem:[#allocation5 + $0x54] sm:$0xff]
        %v588 = vld [vmem:[#allocation5 + $0x5c] sm:$0xf]
        %v589 = vld [vmem:[#allocation5 + $0x60] sm:$0xff]
        %v590 = vld [vmem:[#allocation5 + $0x68] sm:$0xf]
        %v591 = vld [vmem:[#allocation5 + $0x6c] sm:$0xff]
        %v592 = vld [vmem:[#allocation5 + $0x74] sm:$0xf]
        %v593 = vld [vmem:[#allocation5 + $0x78] sm:$0xff]
        %v594 = vld [vmem:[#allocation5 + $0x80] sm:$0xf]
        %v595 = vld [vmem:[#allocation5 + $0x84] sm:$0xff]
        %v596 = vld [vmem:[#allocation5 + $0x8c] sm:$0xf]
        %v597 = vld [vmem:[#allocation5 + $0x90] sm:$0xff]
        %v598 = vld [vmem:[#allocation5 + $0x98] sm:$0xf]
        %v599 = vld [vmem:[#allocation5 + $0x9c] sm:$0xff]
        %v600 = vld [vmem:[#allocation5 + $0xa4] sm:$0xf]
        %v601 = vld [vmem:[#allocation5 + $0xa8] sm:$0xff]
        %v602 = vld [vmem:[#allocation5 + $0xb0] sm:$0xf]
        %v603 = vld [vmem:[#allocation5 + $0xb4] sm:$0xff]
        %v604 = vld [vmem:[#allocation5 + $0xbc] sm:$0xf]
        %v637 = vunpack.c.l.b16 %v573
        %v638 = vunpack.c.h.b16 %v573
        %v639 = vunpack.c.l.b16 %v574
        %v640 = vunpack.c.l.b16 %v575
        %v641 = vunpack.c.h.b16 %v575
        %v642 = vunpack.c.l.b16 %v576
        %v643 = vunpack.c.l.b16 %v577
        %v644 = vunpack.c.h.b16 %v577
        %v645 = vunpack.c.l.b16 %v578
        %v646 = vunpack.c.l.b16 %v579
        %v647 = vunpack.c.h.b16 %v579
        %v648 = vunpack.c.l.b16 %v580
        %v649 = vunpack.c.l.b16 %v581
        %v650 = vunpack.c.h.b16 %v581
        %v651 = vunpack.c.l.b16 %v582
        %v652 = vunpack.c.l.b16 %v583
        %v653 = vunpack.c.h.b16 %v583
        %v654 = vunpack.c.l.b16 %v584
        %v655 = vunpack.c.l.b16 %v585
        %v656 = vunpack.c.h.b16 %v585
        %v657 = vunpack.c.l.b16 %v586
        %v658 = vunpack.c.l.b16 %v587
        %v659 = vunpack.c.h.b16 %v587
        %v660 = vunpack.c.l.b16 %v588
        %v661 = vunpack.c.l.b16 %v589
        %v662 = vunpack.c.h.b16 %v589
        %v663 = vunpack.c.l.b16 %v590
        %v664 = vunpack.c.l.b16 %v591
        %v665 = vunpack.c.h.b16 %v591
        %v666 = vunpack.c.l.b16 %v592
        %v667 = vunpack.c.l.b16 %v593
        %v668 = vunpack.c.h.b16 %v593
        %v669 = vunpack.c.l.b16 %v594
        %v670 = vunpack.c.l.b16 %v595
        %v671 = vunpack.c.h.b16 %v595
        %v672 = vunpack.c.l.b16 %v596
        %v673 = vunpack.c.l.b16 %v597
        %v674 = vunpack.c.h.b16 %v597
        %v675 = vunpack.c.l.b16 %v598
        %v676 = vunpack.c.l.b16 %v599
        %v677 = vunpack.c.h.b16 %v599
        %v678 = vunpack.c.l.b16 %v600
        %v679 = vunpack.c.l.b16 %v601
        %v680 = vunpack.c.h.b16 %v601
        %v681 = vunpack.c.l.b16 %v602
        %v682 = vunpack.c.l.b16 %v603
        %v683 = vunpack.c.h.b16 %v603
        %v684 = vunpack.c.l.b16 %v604
        %v685 = vpack.c.b16 %v640, %v637
        %v686 = vpack.c.b16 %v641, %v638
        %v687 = vpack.c.b16 %v642, %v639
        %v688 = vpack.c.b16 %v646, %v643
        %v689 = vpack.c.b16 %v647, %v644
        %v690 = vpack.c.b16 %v648, %v645
        %v691 = vpack.c.b16 %v652, %v649
        %v692 = vpack.c.b16 %v653, %v650
        %v693 = vpack.c.b16 %v654, %v651
        %v694 = vpack.c.b16 %v658, %v655
        %v695 = vpack.c.b16 %v659, %v656
        %v696 = vpack.c.b16 %v660, %v657
        %v697 = vpack.c.b16 %v664, %v661
        %v698 = vpack.c.b16 %v665, %v662
        %v699 = vpack.c.b16 %v666, %v663
        %v700 = vpack.c.b16 %v670, %v667
        %v701 = vpack.c.b16 %v671, %v668
        %v702 = vpack.c.b16 %v672, %v669
        %v703 = vpack.c.b16 %v676, %v673
        %v704 = vpack.c.b16 %v677, %v674
        %v705 = vpack.c.b16 %v678, %v675
        %v706 = vpack.c.b16 %v682, %v679
        %v707 = vpack.c.b16 %v683, %v680
        %v708 = vpack.c.b16 %v684, %v681
        %733 = vmatprep.subr.bf16.mxu0 %v686
        %734 = vmatpush1.bf16.msra.mxu0 %v685
        %735 = vmatprep.subr.bf16.mxu0 %v689
        %736 = vmatpush1.bf16.msra.mxu0 %v688
        %737 = vmatprep.subr.bf16.mxu0 %v692
        %738 = vmatpush1.bf16.msra.mxu0 %v691
        %739 = vmatprep.subr.bf16.mxu0 %v695
        %740 = vmatpush1.bf16.msra.mxu0 %v694
        %741 = vmatprep.subr.bf16.mxu0 %v698
        %742 = vmatpush1.bf16.msra.mxu0 %v697
        %743 = vmatprep.subr.bf16.mxu0 %v701
        %744 = vmatpush1.bf16.msra.mxu0 %v700
        %745 = vmatprep.subr.bf16.mxu0 %v704
        %746 = vmatpush1.bf16.msra.mxu0 %v703
        %747 = vmatprep.subr.bf16.mxu0 %v707
        %748 = vmatpush1.bf16.msra.mxu0 %v706
        %749 = vmatprep.subr.bf16.mxu0 0
        %750 = vmatpush1.bf16.msra.mxu0 0
        %751 = vmatprep.subr.bf16.mxu0 0
        %752 = vmatpush1.bf16.msra.mxu0 0
        %753 = vmatprep.subr.bf16.mxu0 0
        %754 = vmatpush1.bf16.msra.mxu0 0
        %755 = vmatprep.subr.bf16.mxu0 0
        %756 = vmatpush1.bf16.msra.mxu0 0
        %757 = vmatprep.subr.bf16.mxu0 0
        %758 = vmatpush1.bf16.msra.mxu0 0
        %759 = vmatprep.subr.bf16.mxu0 0
        %760 = vmatpush1.bf16.msra.mxu0 0
        %761 = vmatprep.subr.bf16.mxu0 0
        %762 = vmatpush1.bf16.msra.mxu0 0
        %763 = vmatprep.subr.bf16.mxu0 0
        %764 = vmatpush1.bf16.msra.mxu0 0
        %765 = vmatprep.mubr.bf16.mxu0 0
        %766 = vmatmul.mubr.bf16.gmra.mrb[0].mxu0 %v565
        %v767 = vpop.f32.mrb[0].mxu0
        %v768 = vadd.f32 0.0, %v767
        %v769 = vpop.f32.mrb[0].mxu0
        %v770 = vadd.f32 0.0, %v769
        %v771 = vpop.f32.mrb[0].mxu0
        %v772 = vadd.f32 0.0, %v771
        %v773 = vpop.f32.mrb[0].mxu0
        %v774 = vadd.f32 0.0, %v773
        %775 = vmatprep.mubr.bf16.mxu0 0
        %776 = vmatmul.mubr.bf16.gmra.mrb[0].mxu0 %v566
        %v777 = vpop.f32.mrb[0].mxu0
        %v778 = vadd.f32 0.0, %v777
        %v779 = vpop.f32.mrb[0].mxu0
        %v780 = vadd.f32 0.0, %v779
        %v781 = vpop.f32.mrb[0].mxu0
        %v782 = vadd.f32 0.0, %v781
        %v783 = vpop.f32.mrb[0].mxu0
        %v784 = vadd.f32 0.0, %v783
        %785 = vmatprep.mubr.bf16.mxu0 0
        %786 = vmatmul.mubr.bf16.gmra.mrb[0].mxu0 %v567
        %v787 = vpop.f32.mrb[0].mxu0
        %v788 = vadd.f32 0.0, %v787
        %v789 = vpop.f32.mrb[0].mxu0
        %v790 = vadd.f32 0.0, %v789
        %v791 = vpop.f32.mrb[0].mxu0
        %v792 = vadd.f32 0.0, %v791
        %v793 = vpop.f32.mrb[0].mxu0
        %v794 = vadd.f32 0.0, %v793
        %795 = vmatprep.mubr.bf16.mxu0 0
        %796 = vmatmul.mubr.bf16.gmra.mrb[0].mxu0 %v568
        %v797 = vpop.f32.mrb[0].mxu0
        %v798 = vadd.f32 0.0, %v797
        %v799 = vpop.f32.mrb[0].mxu0
        %v800 = vadd.f32 0.0, %v799
        %v801 = vpop.f32.mrb[0].mxu0
        %v802 = vadd.f32 0.0, %v801
        %v803 = vpop.f32.mrb[0].mxu0
        %v804 = vadd.f32 0.0, %v803
        %805 = vmatprep.mubr.bf16.mxu0 0
        %806 = vmatmul.mubr.bf16.gmra.mrb[0].mxu0 %v569
        %v807 = vpop.f32.mrb[0].mxu0
        %v808 = vadd.f32 0.0, %v807
        %v809 = vpop.f32.mrb[0].mxu0
        %v810 = vadd.f32 0.0, %v809
        %v811 = vpop.f32.mrb[0].mxu0
        %v812 = vadd.f32 0.0, %v811
        %v813 = vpop.f32.mrb[0].mxu0
        %v814 = vadd.f32 0.0, %v813
        %815 = vmatprep.mubr.bf16.mxu0 0
        %816 = vmatmul.mubr.bf16.gmra.mrb[0].mxu0 %v570
        %v817 = vpop.f32.mrb[0].mxu0
        %v818 = vadd.f32 0.0, %v817
        %v819 = vpop.f32.mrb[0].mxu0
        %v820 = vadd.f32 0.0, %v819
        %v821 = vpop.f32.mrb[0].mxu0
        %v822 = vadd.f32 0.0, %v821
        %v823 = vpop.f32.mrb[0].mxu0
        %v824 = vadd.f32 0.0, %v823
        %825 = vmatprep.mubr.bf16.mxu0 0
        %826 = vmatmul.mubr.bf16.gmra.mrb[0].mxu0 %v571
        %v827 = vpop.f32.mrb[0].mxu0
        %v828 = vadd.f32 0.0, %v827
        %v829 = vpop.f32.mrb[0].mxu0
        %v830 = vadd.f32 0.0, %v829
        %v831 = vpop.f32.mrb[0].mxu0
        %v832 = vadd.f32 0.0, %v831
        %v833 = vpop.f32.mrb[0].mxu0
        %v834 = vadd.f32 0.0, %v833
        %835 = vmatprep.mubr.bf16.mxu0 0
        %836 = vmatmul.mubr.bf16.gmra.mrb[0].mxu0 %v572
        %v837 = vpop.f32.mrb[0].mxu0
        %v838 = vadd.f32 0.0, %v837
        %v839 = vpop.f32.mrb[0].mxu0
        %v840 = vadd.f32 0.0, %v839
        %v841 = vpop.f32.mrb[0].mxu0
        %v842 = vadd.f32 0.0, %v841
        %v843 = vpop.f32.mrb[0].mxu0
        %v844 = vadd.f32 0.0, %v843
        %845 = vdwg.mxu0
        %846 = vmatprep.subr.bf16.mxu0 0
        %847 = vmatpush1.bf16.msra.mxu0 %v687
        %848 = vmatprep.subr.bf16.mxu0 0
        %849 = vmatpush1.bf16.msra.mxu0 %v690
        %850 = vmatprep.subr.bf16.mxu0 0
        %851 = vmatpush1.bf16.msra.mxu0 %v693
        %852 = vmatprep.subr.bf16.mxu0 0
        %853 = vmatpush1.bf16.msra.mxu0 %v696
        %854 = vmatprep.subr.bf16.mxu0 0
        %855 = vmatpush1.bf16.msra.mxu0 %v699
        %856 = vmatprep.subr.bf16.mxu0 0
        %857 = vmatpush1.bf16.msra.mxu0 %v702
        %858 = vmatprep.subr.bf16.mxu0 0
        %859 = vmatpush1.bf16.msra.mxu0 %v705
        %860 = vmatprep.subr.bf16.mxu0 0
        %861 = vmatpush1.bf16.msra.mxu0 %v708
        %862 = vmatprep.subr.bf16.mxu0 0
        %863 = vmatpush1.bf16.msra.mxu0 0
        %864 = vmatprep.subr.bf16.mxu0 0
        %865 = vmatpush1.bf16.msra.mxu0 0
        %866 = vmatprep.subr.bf16.mxu0 0
        %867 = vmatpush1.bf16.msra.mxu0 0
        %868 = vmatprep.subr.bf16.mxu0 0
        %869 = vmatpush1.bf16.msra.mxu0 0
        %870 = vmatprep.subr.bf16.mxu0 0
        %871 = vmatpush1.bf16.msra.mxu0 0
        %872 = vmatprep.subr.bf16.mxu0 0
        %873 = vmatpush1.bf16.msra.mxu0 0
        %874 = vmatprep.subr.bf16.mxu0 0
        %875 = vmatpush1.bf16.msra.mxu0 0
        %876 = vmatprep.subr.bf16.mxu0 0
        %877 = vmatpush1.bf16.msra.mxu0 0
        %878 = vmatprep.mubr.bf16.mxu0 0
        %879 = vmatmul.mubr.bf16.gmra.mrb[0].mxu0 %v565
        %v880 = vpop.f32.mrb[0].mxu0
        %v881 = vadd.f32 0.0, %v880
        %v882 = vpop.f32.mrb[0].mxu0
        %v883 = vpop.f32.mrb[0].mxu0
        %v884 = vadd.f32 0.0, %v883
        %v885 = vpop.f32.mrb[0].mxu0
        %886 = vmatprep.mubr.bf16.mxu0 0
        %887 = vmatmul.mubr.bf16.gmra.mrb[0].mxu0 %v566
        %v888 = vpop.f32.mrb[0].mxu0
        %v889 = vadd.f32 0.0, %v888
        %v890 = vpop.f32.mrb[0].mxu0
        %v891 = vpop.f32.mrb[0].mxu0
        %v892 = vadd.f32 0.0, %v891
        %v893 = vpop.f32.mrb[0].mxu0
        %894 = vmatprep.mubr.bf16.mxu0 0
        %895 = vmatmul.mubr.bf16.gmra.mrb[0].mxu0 %v567
        %v896 = vpop.f32.mrb[0].mxu0
        %v897 = vadd.f32 0.0, %v896
        %v898 = vpop.f32.mrb[0].mxu0
        %v899 = vpop.f32.mrb[0].mxu0
        %v900 = vadd.f32 0.0, %v899
        %v901 = vpop.f32.mrb[0].mxu0
        %902 = vmatprep.mubr.bf16.mxu0 0
        %903 = vmatmul.mubr.bf16.gmra.mrb[0].mxu0 %v568
        %v904 = vpop.f32.mrb[0].mxu0
        %v905 = vadd.f32 0.0, %v904
        %v906 = vpop.f32.mrb[0].mxu0
        %v907 = vpop.f32.mrb[0].mxu0
        %v908 = vadd.f32 0.0, %v907
        %v909 = vpop.f32.mrb[0].mxu0
        %910 = vmatprep.mubr.bf16.mxu0 0
        %911 = vmatmul.mubr.bf16.gmra.mrb[0].mxu0 %v569
        %v912 = vpop.f32.mrb[0].mxu0
        %v913 = vadd.f32 0.0, %v912
        %v914 = vpop.f32.mrb[0].mxu0
        %v915 = vpop.f32.mrb[0].mxu0
        %v916 = vadd.f32 0.0, %v915
        %v917 = vpop.f32.mrb[0].mxu0
        %918 = vmatprep.mubr.bf16.mxu0 0
        %919 = vmatmul.mubr.bf16.gmra.mrb[0].mxu0 %v570
        %v920 = vpop.f32.mrb[0].mxu0
        %v921 = vadd.f32 0.0, %v920
        %v922 = vpop.f32.mrb[0].mxu0
        %v923 = vpop.f32.mrb[0].mxu0
        %v924 = vadd.f32 0.0, %v923
        %v925 = vpop.f32.mrb[0].mxu0
        %926 = vmatprep.mubr.bf16.mxu0 0
        %927 = vmatmul.mubr.bf16.gmra.mrb[0].mxu0 %v571
        %v928 = vpop.f32.mrb[0].mxu0
        %v929 = vadd.f32 0.0, %v928
        %v930 = vpop.f32.mrb[0].mxu0
        %v931 = vpop.f32.mrb[0].mxu0
        %v932 = vadd.f32 0.0, %v931
        %v933 = vpop.f32.mrb[0].mxu0
        %934 = vmatprep.mubr.bf16.mxu0 0
        %935 = vmatmul.mubr.bf16.gmra.mrb[0].mxu0 %v572
        %v936 = vpop.f32.mrb[0].mxu0
        %v937 = vadd.f32 0.0, %v936
        %v938 = vpop.f32.mrb[0].mxu0
        %v939 = vpop.f32.mrb[0].mxu0
        %v940 = vadd.f32 0.0, %v939
        %v941 = vpop.f32.mrb[0].mxu0
        %942 = vdwg.mxu0
        %v943 = vmul.f32 %v768, 0.17677669
        %v944 = vmul.f32 %v772, 0.17677669
        %v945 = vmul.f32 %v778, 0.17677669
        %v946 = vmul.f32 %v782, 0.17677669
        %v947 = vmul.f32 %v788, 0.17677669
        %v948 = vmul.f32 %v792, 0.17677669
        %v949 = vmul.f32 %v798, 0.17677669
        %v950 = vmul.f32 %v802, 0.17677669
        %v951 = vmul.f32 %v808, 0.17677669
        %v952 = vmul.f32 %v812, 0.17677669
        %v953 = vmul.f32 %v818, 0.17677669
        %v954 = vmul.f32 %v822, 0.17677669
        %v955 = vmul.f32 %v828, 0.17677669
        %v956 = vmul.f32 %v832, 0.17677669
        %v957 = vmul.f32 %v838, 0.17677669
        %v958 = vmul.f32 %v842, 0.17677669
        %975 = vrot.lane.b32.xlu0 %v943, 96
        %v976 = vpop.permute.xlu0 %975
        %977 = vrot.lane.b32.xlu0 %v944, 96
        %v978 = vpop.permute.xlu0 %977
        %979 = vrot.lane.b32.xlu0 %v945, 96
        %v980 = vpop.permute.xlu0 %979
        %981 = vrot.lane.b32.xlu0 %v946, 96
        %v982 = vpop.permute.xlu0 %981
        %983 = vrot.lane.b32.xlu0 %v947, 96
        %v984 = vpop.permute.xlu0 %983
        %985 = vrot.lane.b32.xlu0 %v948, 96
        %v986 = vpop.permute.xlu0 %985
        %987 = vrot.lane.b32.xlu0 %v949, 96
        %v988 = vpop.permute.xlu0 %987
        %989 = vrot.lane.b32.xlu0 %v950, 96
        %v990 = vpop.permute.xlu0 %989
        %991 = vrot.lane.b32.xlu0 %v951, 96
        %v992 = vpop.permute.xlu0 %991
        %993 = vrot.lane.b32.xlu0 %v952, 96
        %v994 = vpop.permute.xlu0 %993
        %995 = vrot.lane.b32.xlu0 %v953, 96
        %v996 = vpop.permute.xlu0 %995
        %997 = vrot.lane.b32.xlu0 %v954, 96
        %v998 = vpop.permute.xlu0 %997
        %999 = vrot.lane.b32.xlu0 %v955, 96
        %v1000 = vpop.permute.xlu0 %999
        %1001 = vrot.lane.b32.xlu0 %v956, 96
        %v1002 = vpop.permute.xlu0 %1001
        %1003 = vrot.lane.b32.xlu0 %v957, 96
        %v1004 = vpop.permute.xlu0 %1003
        %1005 = vrot.lane.b32.xlu0 %v958, 96
        %v1006 = vpop.permute.xlu0 %1005
        %1023 = vrot.lane.b32.xlu0 %v943, 64
        %v1024 = vpop.permute.xlu0 %1023
        %1025 = vrot.lane.b32.xlu0 %v944, 64
        %v1026 = vpop.permute.xlu0 %1025
        %1027 = vrot.lane.b32.xlu0 %v945, 64
        %v1028 = vpop.permute.xlu0 %1027
        %1029 = vrot.lane.b32.xlu0 %v946, 64
        %v1030 = vpop.permute.xlu0 %1029
        %1031 = vrot.lane.b32.xlu0 %v947, 64
        %v1032 = vpop.permute.xlu0 %1031
        %1033 = vrot.lane.b32.xlu0 %v948, 64
        %v1034 = vpop.permute.xlu0 %1033
        %1035 = vrot.lane.b32.xlu0 %v949, 64
        %v1036 = vpop.permute.xlu0 %1035
        %1037 = vrot.lane.b32.xlu0 %v950, 64
        %v1038 = vpop.permute.xlu0 %1037
        %1039 = vrot.lane.b32.xlu0 %v951, 64
        %v1040 = vpop.permute.xlu0 %1039
        %1041 = vrot.lane.b32.xlu0 %v952, 64
        %v1042 = vpop.permute.xlu0 %1041
        %1043 = vrot.lane.b32.xlu0 %v953, 64
        %v1044 = vpop.permute.xlu0 %1043
        %1045 = vrot.lane.b32.xlu0 %v954, 64
        %v1046 = vpop.permute.xlu0 %1045
        %1047 = vrot.lane.b32.xlu0 %v955, 64
        %v1048 = vpop.permute.xlu0 %1047
        %1049 = vrot.lane.b32.xlu0 %v956, 64
        %v1050 = vpop.permute.xlu0 %1049
        %1051 = vrot.lane.b32.xlu0 %v957, 64
        %v1052 = vpop.permute.xlu0 %1051
        %1053 = vrot.lane.b32.xlu0 %v958, 64
        %v1054 = vpop.permute.xlu0 %1053
        %1071 = vrot.lane.b32.xlu0 %v943, 32
        %v1072 = vpop.permute.xlu0 %1071
        %1073 = vrot.lane.b32.xlu0 %v944, 32
        %v1074 = vpop.permute.xlu0 %1073
        %1075 = vrot.lane.b32.xlu0 %v945, 32
        %v1076 = vpop.permute.xlu0 %1075
        %1077 = vrot.lane.b32.xlu0 %v946, 32
        %v1078 = vpop.permute.xlu0 %1077
        %1079 = vrot.lane.b32.xlu0 %v947, 32
        %v1080 = vpop.permute.xlu0 %1079
        %1081 = vrot.lane.b32.xlu0 %v948, 32
        %v1082 = vpop.permute.xlu0 %1081
        %1083 = vrot.lane.b32.xlu0 %v949, 32
        %v1084 = vpop.permute.xlu0 %1083
        %1085 = vrot.lane.b32.xlu0 %v950, 32
        %v1086 = vpop.permute.xlu0 %1085
        %1087 = vrot.lane.b32.xlu0 %v951, 32
        %v1088 = vpop.permute.xlu0 %1087
        %1089 = vrot.lane.b32.xlu0 %v952, 32
        %v1090 = vpop.permute.xlu0 %1089
        %1091 = vrot.lane.b32.xlu0 %v953, 32
        %v1092 = vpop.permute.xlu0 %1091
        %1093 = vrot.lane.b32.xlu0 %v954, 32
        %v1094 = vpop.permute.xlu0 %1093
        %1095 = vrot.lane.b32.xlu0 %v955, 32
        %v1096 = vpop.permute.xlu0 %1095
        %1097 = vrot.lane.b32.xlu0 %v956, 32
        %v1098 = vpop.permute.xlu0 %1097
        %1099 = vrot.lane.b32.xlu0 %v957, 32
        %v1100 = vpop.permute.xlu0 %1099
        %1101 = vrot.lane.b32.xlu0 %v958, 32
        %v1102 = vpop.permute.xlu0 %1101
        %v1119 = vpack.c.bf16 %v944, %v943
        %v1120 = vpack.c.bf16 %v946, %v945
        %v1121 = vpack.c.bf16 %v948, %v947
        %v1122 = vpack.c.bf16 %v950, %v949
        %v1123 = vpack.c.bf16 %v952, %v951
        %v1124 = vpack.c.bf16 %v954, %v953
        %v1125 = vpack.c.bf16 %v956, %v955
        %v1126 = vpack.c.bf16 %v958, %v957
        %v1127 = vpack.c.bf16 %v978, %v976
        %v1128 = vpack.c.bf16 %v982, %v980
        %v1129 = vpack.c.bf16 %v986, %v984
        %v1130 = vpack.c.bf16 %v990, %v988
        %v1131 = vpack.c.bf16 %v994, %v992
        %v1132 = vpack.c.bf16 %v998, %v996
        %v1133 = vpack.c.bf16 %v1002, %v1000
        %v1134 = vpack.c.bf16 %v1006, %v1004
        %v1135 = vpack.c.bf16 %v1026, %v1024
        %v1136 = vpack.c.bf16 %v1030, %v1028
        %v1137 = vpack.c.bf16 %v1034, %v1032
        %v1138 = vpack.c.bf16 %v1038, %v1036
        %v1139 = vpack.c.bf16 %v1042, %v1040
        %v1140 = vpack.c.bf16 %v1046, %v1044
        %v1141 = vpack.c.bf16 %v1050, %v1048
        %v1142 = vpack.c.bf16 %v1054, %v1052
        %v1143 = vpack.c.bf16 %v1074, %v1072
        %v1144 = vpack.c.bf16 %v1078, %v1076
        %v1145 = vpack.c.bf16 %v1082, %v1080
        %v1146 = vpack.c.bf16 %v1086, %v1084
        %v1147 = vpack.c.bf16 %v1090, %v1088
        %v1148 = vpack.c.bf16 %v1094, %v1092
        %v1149 = vpack.c.bf16 %v1098, %v1096
        %v1150 = vpack.c.bf16 %v1102, %v1100
        %1167 = vrot.lane.b32.xlu0 %v770, 96
        %v1168 = vpop.permute.xlu0 %1167
        %1169 = vrot.lane.b32.xlu0 %v774, 96
        %v1170 = vpop.permute.xlu0 %1169
        %1171 = vrot.lane.b32.xlu0 %v780, 96
        %v1172 = vpop.permute.xlu0 %1171
        %1173 = vrot.lane.b32.xlu0 %v784, 96
        %v1174 = vpop.permute.xlu0 %1173
        %1175 = vrot.lane.b32.xlu0 %v790, 96
        %v1176 = vpop.permute.xlu0 %1175
        %1177 = vrot.lane.b32.xlu0 %v794, 96
        %v1178 = vpop.permute.xlu0 %1177
        %1179 = vrot.lane.b32.xlu0 %v800, 96
        %v1180 = vpop.permute.xlu0 %1179
        %1181 = vrot.lane.b32.xlu0 %v804, 96
        %v1182 = vpop.permute.xlu0 %1181
        %1183 = vrot.lane.b32.xlu0 %v810, 96
        %v1184 = vpop.permute.xlu0 %1183
        %1185 = vrot.lane.b32.xlu0 %v814, 96
        %v1186 = vpop.permute.xlu0 %1185
        %1187 = vrot.lane.b32.xlu0 %v820, 96
        %v1188 = vpop.permute.xlu0 %1187
        %1189 = vrot.lane.b32.xlu0 %v824, 96
        %v1190 = vpop.permute.xlu0 %1189
        %1191 = vrot.lane.b32.xlu0 %v830, 96
        %v1192 = vpop.permute.xlu0 %1191
        %1193 = vrot.lane.b32.xlu0 %v834, 96
        %v1194 = vpop.permute.xlu0 %1193
        %1195 = vrot.lane.b32.xlu0 %v840, 96
        %v1196 = vpop.permute.xlu0 %1195
        %1197 = vrot.lane.b32.xlu0 %v844, 96
        %v1198 = vpop.permute.xlu0 %1197
        %1215 = vrot.lane.b32.xlu0 %v770, 64
        %v1216 = vpop.permute.xlu0 %1215
        %1217 = vrot.lane.b32.xlu0 %v774, 64
        %v1218 = vpop.permute.xlu0 %1217
        %1219 = vrot.lane.b32.xlu0 %v780, 64
        %v1220 = vpop.permute.xlu0 %1219
        %1221 = vrot.lane.b32.xlu0 %v784, 64
        %v1222 = vpop.permute.xlu0 %1221
        %1223 = vrot.lane.b32.xlu0 %v790, 64
        %v1224 = vpop.permute.xlu0 %1223
        %1225 = vrot.lane.b32.xlu0 %v794, 64
        %v1226 = vpop.permute.xlu0 %1225
        %1227 = vrot.lane.b32.xlu0 %v800, 64
        %v1228 = vpop.permute.xlu0 %1227
        %1229 = vrot.lane.b32.xlu0 %v804, 64
        %v1230 = vpop.permute.xlu0 %1229
        %1231 = vrot.lane.b32.xlu0 %v810, 64
        %v1232 = vpop.permute.xlu0 %1231
        %1233 = vrot.lane.b32.xlu0 %v814, 64
        %v1234 = vpop.permute.xlu0 %1233
        %1235 = vrot.lane.b32.xlu0 %v820, 64
        %v1236 = vpop.permute.xlu0 %1235
        %1237 = vrot.lane.b32.xlu0 %v824, 64
        %v1238 = vpop.permute.xlu0 %1237
        %1239 = vrot.lane.b32.xlu0 %v830, 64
        %v1240 = vpop.permute.xlu0 %1239
        %1241 = vrot.lane.b32.xlu0 %v834, 64
        %v1242 = vpop.permute.xlu0 %1241
        %1243 = vrot.lane.b32.xlu0 %v840, 64
        %v1244 = vpop.permute.xlu0 %1243
        %1245 = vrot.lane.b32.xlu0 %v844, 64
        %v1246 = vpop.permute.xlu0 %1245
        %1263 = vrot.lane.b32.xlu0 %v770, 32
        %v1264 = vpop.permute.xlu0 %1263
        %1265 = vrot.lane.b32.xlu0 %v774, 32
        %v1266 = vpop.permute.xlu0 %1265
        %1267 = vrot.lane.b32.xlu0 %v780, 32
        %v1268 = vpop.permute.xlu0 %1267
        %1269 = vrot.lane.b32.xlu0 %v784, 32
        %v1270 = vpop.permute.xlu0 %1269
        %1271 = vrot.lane.b32.xlu0 %v790, 32
        %v1272 = vpop.permute.xlu0 %1271
        %1273 = vrot.lane.b32.xlu0 %v794, 32
        %v1274 = vpop.permute.xlu0 %1273
        %1275 = vrot.lane.b32.xlu0 %v800, 32
        %v1276 = vpop.permute.xlu0 %1275
        %1277 = vrot.lane.b32.xlu0 %v804, 32
        %v1278 = vpop.permute.xlu0 %1277
        %1279 = vrot.lane.b32.xlu0 %v810, 32
        %v1280 = vpop.permute.xlu0 %1279
        %1281 = vrot.lane.b32.xlu0 %v814, 32
        %v1282 = vpop.permute.xlu0 %1281
        %1283 = vrot.lane.b32.xlu0 %v820, 32
        %v1284 = vpop.permute.xlu0 %1283
        %1285 = vrot.lane.b32.xlu0 %v824, 32
        %v1286 = vpop.permute.xlu0 %1285
        %1287 = vrot.lane.b32.xlu0 %v830, 32
        %v1288 = vpop.permute.xlu0 %1287
        %1289 = vrot.lane.b32.xlu0 %v834, 32
        %v1290 = vpop.permute.xlu0 %1289
        %1291 = vrot.lane.b32.xlu0 %v840, 32
        %v1292 = vpop.permute.xlu0 %1291
        %1293 = vrot.lane.b32.xlu0 %v844, 32
        %v1294 = vpop.permute.xlu0 %1293
        %v1311 = vpack.c.bf16 %v774, %v770
        %v1312 = vpack.c.bf16 %v784, %v780
        %v1313 = vpack.c.bf16 %v794, %v790
        %v1314 = vpack.c.bf16 %v804, %v800
        %v1315 = vpack.c.bf16 %v814, %v810
        %v1316 = vpack.c.bf16 %v824, %v820
        %v1317 = vpack.c.bf16 %v834, %v830
        %v1318 = vpack.c.bf16 %v844, %v840
        %v1319 = vpack.c.bf16 %v1170, %v1168
        %v1320 = vpack.c.bf16 %v1174, %v1172
        %v1321 = vpack.c.bf16 %v1178, %v1176
        %v1322 = vpack.c.bf16 %v1182, %v1180
        %v1323 = vpack.c.bf16 %v1186, %v1184
        %v1324 = vpack.c.bf16 %v1190, %v1188
        %v1325 = vpack.c.bf16 %v1194, %v1192
        %v1326 = vpack.c.bf16 %v1198, %v1196
        %v1327 = vpack.c.bf16 %v1218, %v1216
        %v1328 = vpack.c.bf16 %v1222, %v1220
        %v1329 = vpack.c.bf16 %v1226, %v1224
        %v1330 = vpack.c.bf16 %v1230, %v1228
        %v1331 = vpack.c.bf16 %v1234, %v1232
        %v1332 = vpack.c.bf16 %v1238, %v1236
        %v1333 = vpack.c.bf16 %v1242, %v1240
        %v1334 = vpack.c.bf16 %v1246, %v1244
        %v1335 = vpack.c.bf16 %v1266, %v1264
        %v1336 = vpack.c.bf16 %v1270, %v1268
        %v1337 = vpack.c.bf16 %v1274, %v1272
        %v1338 = vpack.c.bf16 %v1278, %v1276
        %v1339 = vpack.c.bf16 %v1282, %v1280
        %v1340 = vpack.c.bf16 %v1286, %v1284
        %v1341 = vpack.c.bf16 %v1290, %v1288
        %v1342 = vpack.c.bf16 %v1294, %v1292
        %1359 = vrot.lane.b32.xlu0 %v881, 96
        %v1360 = vpop.permute.xlu0 %1359
        %1361 = vrot.lane.b32.xlu0 %v884, 96
        %v1362 = vpop.permute.xlu0 %1361
        %1363 = vrot.lane.b32.xlu0 %v889, 96
        %v1364 = vpop.permute.xlu0 %1363
        %1365 = vrot.lane.b32.xlu0 %v892, 96
        %v1366 = vpop.permute.xlu0 %1365
        %1367 = vrot.lane.b32.xlu0 %v897, 96
        %v1368 = vpop.permute.xlu0 %1367
        %1369 = vrot.lane.b32.xlu0 %v900, 96
        %v1370 = vpop.permute.xlu0 %1369
        %1371 = vrot.lane.b32.xlu0 %v905, 96
        %v1372 = vpop.permute.xlu0 %1371
        %1373 = vrot.lane.b32.xlu0 %v908, 96
        %v1374 = vpop.permute.xlu0 %1373
        %1375 = vrot.lane.b32.xlu0 %v913, 96
        %v1376 = vpop.permute.xlu0 %1375
        %1377 = vrot.lane.b32.xlu0 %v916, 96
        %v1378 = vpop.permute.xlu0 %1377
        %1379 = vrot.lane.b32.xlu0 %v921, 96
        %v1380 = vpop.permute.xlu0 %1379
        %1381 = vrot.lane.b32.xlu0 %v924, 96
        %v1382 = vpop.permute.xlu0 %1381
        %1383 = vrot.lane.b32.xlu0 %v929, 96
        %v1384 = vpop.permute.xlu0 %1383
        %1385 = vrot.lane.b32.xlu0 %v932, 96
        %v1386 = vpop.permute.xlu0 %1385
        %1387 = vrot.lane.b32.xlu0 %v937, 96
        %v1388 = vpop.permute.xlu0 %1387
        %1389 = vrot.lane.b32.xlu0 %v940, 96
        %v1390 = vpop.permute.xlu0 %1389
        %1407 = vrot.lane.b32.xlu0 %v881, 64
        %v1408 = vpop.permute.xlu0 %1407
        %1409 = vrot.lane.b32.xlu0 %v884, 64
        %v1410 = vpop.permute.xlu0 %1409
        %1411 = vrot.lane.b32.xlu0 %v889, 64
        %v1412 = vpop.permute.xlu0 %1411
        %1413 = vrot.lane.b32.xlu0 %v892, 64
        %v1414 = vpop.permute.xlu0 %1413
        %1415 = vrot.lane.b32.xlu0 %v897, 64
        %v1416 = vpop.permute.xlu0 %1415
        %1417 = vrot.lane.b32.xlu0 %v900, 64
        %v1418 = vpop.permute.xlu0 %1417
        %1419 = vrot.lane.b32.xlu0 %v905, 64
        %v1420 = vpop.permute.xlu0 %1419
        %1421 = vrot.lane.b32.xlu0 %v908, 64
        %v1422 = vpop.permute.xlu0 %1421
        %1423 = vrot.lane.b32.xlu0 %v913, 64
        %v1424 = vpop.permute.xlu0 %1423
        %1425 = vrot.lane.b32.xlu0 %v916, 64
        %v1426 = vpop.permute.xlu0 %1425
        %1427 = vrot.lane.b32.xlu0 %v921, 64
        %v1428 = vpop.permute.xlu0 %1427
        %1429 = vrot.lane.b32.xlu0 %v924, 64
        %v1430 = vpop.permute.xlu0 %1429
        %1431 = vrot.lane.b32.xlu0 %v929, 64
        %v1432 = vpop.permute.xlu0 %1431
        %1433 = vrot.lane.b32.xlu0 %v932, 64
        %v1434 = vpop.permute.xlu0 %1433
        %1435 = vrot.lane.b32.xlu0 %v937, 64
        %v1436 = vpop.permute.xlu0 %1435
        %1437 = vrot.lane.b32.xlu0 %v940, 64
        %v1438 = vpop.permute.xlu0 %1437
        %1455 = vrot.lane.b32.xlu0 %v881, 32
        %v1456 = vpop.permute.xlu0 %1455
        %1457 = vrot.lane.b32.xlu0 %v884, 32
        %v1458 = vpop.permute.xlu0 %1457
        %1459 = vrot.lane.b32.xlu0 %v889, 32
        %v1460 = vpop.permute.xlu0 %1459
        %1461 = vrot.lane.b32.xlu0 %v892, 32
        %v1462 = vpop.permute.xlu0 %1461
        %1463 = vrot.lane.b32.xlu0 %v897, 32
        %v1464 = vpop.permute.xlu0 %1463
        %1465 = vrot.lane.b32.xlu0 %v900, 32
        %v1466 = vpop.permute.xlu0 %1465
        %1467 = vrot.lane.b32.xlu0 %v905, 32
        %v1468 = vpop.permute.xlu0 %1467
        %1469 = vrot.lane.b32.xlu0 %v908, 32
        %v1470 = vpop.permute.xlu0 %1469
        %1471 = vrot.lane.b32.xlu0 %v913, 32
        %v1472 = vpop.permute.xlu0 %1471
        %1473 = vrot.lane.b32.xlu0 %v916, 32
        %v1474 = vpop.permute.xlu0 %1473
        %1475 = vrot.lane.b32.xlu0 %v921, 32
        %v1476 = vpop.permute.xlu0 %1475
        %1477 = vrot.lane.b32.xlu0 %v924, 32
        %v1478 = vpop.permute.xlu0 %1477
        %1479 = vrot.lane.b32.xlu0 %v929, 32
        %v1480 = vpop.permute.xlu0 %1479
        %1481 = vrot.lane.b32.xlu0 %v932, 32
        %v1482 = vpop.permute.xlu0 %1481
        %1483 = vrot.lane.b32.xlu0 %v937, 32
        %v1484 = vpop.permute.xlu0 %1483
        %1485 = vrot.lane.b32.xlu0 %v940, 32
        %v1486 = vpop.permute.xlu0 %1485
        %v1503 = vpack.c.bf16 %v884, %v881
        %v1504 = vpack.c.bf16 %v892, %v889
        %v1505 = vpack.c.bf16 %v900, %v897
        %v1506 = vpack.c.bf16 %v908, %v905
        %v1507 = vpack.c.bf16 %v916, %v913
        %v1508 = vpack.c.bf16 %v924, %v921
        %v1509 = vpack.c.bf16 %v932, %v929
        %v1510 = vpack.c.bf16 %v940, %v937
        %v1511 = vpack.c.bf16 %v1362, %v1360
        %v1512 = vpack.c.bf16 %v1366, %v1364
        %v1513 = vpack.c.bf16 %v1370, %v1368
        %v1514 = vpack.c.bf16 %v1374, %v1372
        %v1515 = vpack.c.bf16 %v1378, %v1376
        %v1516 = vpack.c.bf16 %v1382, %v1380
        %v1517 = vpack.c.bf16 %v1386, %v1384
        %v1518 = vpack.c.bf16 %v1390, %v1388
        %v1519 = vpack.c.bf16 %v1410, %v1408
        %v1520 = vpack.c.bf16 %v1414, %v1412
        %v1521 = vpack.c.bf16 %v1418, %v1416
        %v1522 = vpack.c.bf16 %v1422, %v1420
        %v1523 = vpack.c.bf16 %v1426, %v1424
        %v1524 = vpack.c.bf16 %v1430, %v1428
        %v1525 = vpack.c.bf16 %v1434, %v1432
        %v1526 = vpack.c.bf16 %v1438, %v1436
        %v1527 = vpack.c.bf16 %v1458, %v1456
        %v1528 = vpack.c.bf16 %v1462, %v1460
        %v1529 = vpack.c.bf16 %v1466, %v1464
        %v1530 = vpack.c.bf16 %v1470, %v1468
        %v1531 = vpack.c.bf16 %v1474, %v1472
        %v1532 = vpack.c.bf16 %v1478, %v1476
        %v1533 = vpack.c.bf16 %v1482, %v1480
        %v1534 = vpack.c.bf16 %v1486, %v1484
        %vm1535 = vcmask 261120
        %v1537 = vsel %vm1535, %v1119, 0
        %v1540 = vsel %vm1535, %v1311, 0
        %1542 = vmatprep.subr.bf16.mxu0 0
        %1543 = vmatpush1.bf16.xpose.msra.mxu0 %v1540
        %1544 = vmatprep.subr.bf16.mxu0 0
        %1545 = vmatpush1.bf16.xpose.msra.mxu0 0
        %1546 = vmatprep.subr.bf16.mxu0 0
        %1547 = vmatpush1.bf16.xpose.msra.mxu0 0
        %1548 = vmatprep.subr.bf16.mxu0 0
        %1549 = vmatpush1.bf16.xpose.msra.mxu0 0
        %1550 = vmatprep.subr.bf16.mxu0 0
        %1551 = vmatpush1.bf16.xpose.msra.mxu0 0
        %1552 = vmatprep.subr.bf16.mxu0 0
        %1553 = vmatpush1.bf16.xpose.msra.mxu0 0
        %1554 = vmatprep.subr.bf16.mxu0 0
        %1555 = vmatpush1.bf16.xpose.msra.mxu0 0
        %1556 = vmatprep.subr.bf16.mxu0 0
        %1557 = vmatpush1.bf16.xpose.msra.mxu0 0
        %1558 = vmatprep.subr.bf16.mxu0 0
        %1559 = vmatpush1.bf16.xpose.msra.mxu0 0
        %1560 = vmatprep.subr.bf16.mxu0 0
        %1561 = vmatpush1.bf16.xpose.msra.mxu0 0
        %1562 = vmatprep.subr.bf16.mxu0 0
        %1563 = vmatpush1.bf16.xpose.msra.mxu0 0
        %1564 = vmatprep.subr.bf16.mxu0 0
        %1565 = vmatpush1.bf16.xpose.msra.mxu0 0
        %1566 = vmatprep.subr.bf16.mxu0 0
        %1567 = vmatpush1.bf16.xpose.msra.mxu0 0
        %1568 = vmatprep.subr.bf16.mxu0 0
        %1569 = vmatpush1.bf16.xpose.msra.mxu0 0
        %1570 = vmatprep.subr.bf16.mxu0 0
        %1571 = vmatpush1.bf16.xpose.msra.mxu0 0
        %1572 = vmatprep.subr.bf16.mxu0 0
        %1573 = vmatpush1.bf16.xpose.msra.mxu0 0
        %1574 = vmatprep.mubr.bf16.mxu0 0
        %1575 = vmatmul.mubr.bf16.gmra.mrb[0].mxu0 %v1537
        %v1576 = vpop.f32.mrb[0].mxu0
        %v1577 = vadd.f32 0.0, %v1576
        %v1578 = vpop.f32.mrb[0].mxu0
        %v1579 = vpop.f32.mrb[0].mxu0
        %v1580 = vadd.f32 0.0, %v1579
        %v1581 = vpop.f32.mrb[0].mxu0
        %1582 = vdwg.mxu0
        %v1584 = vsel %vm1535, %v1120, 0
        %v1587 = vsel %vm1535, %v1312, 0
        %1589 = vmatprep.subr.bf16.mxu0 0
        %1590 = vmatpush1.bf16.xpose.msra.mxu0 %v1587
        %1591 = vmatprep.subr.bf16.mxu0 0
        %1592 = vmatpush1.bf16.xpose.msra.mxu0 0
        %1593 = vmatprep.subr.bf16.mxu0 0
        %1594 = vmatpush1.bf16.xpose.msra.mxu0 0
        %1595 = vmatprep.subr.bf16.mxu0 0
        %1596 = vmatpush1.bf16.xpose.msra.mxu0 0
        %1597 = vmatprep.subr.bf16.mxu0 0
        %1598 = vmatpush1.bf16.xpose.msra.mxu0 0
        %1599 = vmatprep.subr.bf16.mxu0 0
        %1600 = vmatpush1.bf16.xpose.msra.mxu0 0
        %1601 = vmatprep.subr.bf16.mxu0 0
        %1602 = vmatpush1.bf16.xpose.msra.mxu0 0
        %1603 = vmatprep.subr.bf16.mxu0 0
        %1604 = vmatpush1.bf16.xpose.msra.mxu0 0
        %1605 = vmatprep.subr.bf16.mxu0 0
        %1606 = vmatpush1.bf16.xpose.msra.mxu0 0
        %1607 = vmatprep.subr.bf16.mxu0 0
        %1608 = vmatpush1.bf16.xpose.msra.mxu0 0
        %1609 = vmatprep.subr.bf16.mxu0 0
        %1610 = vmatpush1.bf16.xpose.msra.mxu0 0
        %1611 = vmatprep.subr.bf16.mxu0 0
        %1612 = vmatpush1.bf16.xpose.msra.mxu0 0
        %1613 = vmatprep.subr.bf16.mxu0 0
        %1614 = vmatpush1.bf16.xpose.msra.mxu0 0
        %1615 = vmatprep.subr.bf16.mxu0 0
        %1616 = vmatpush1.bf16.xpose.msra.mxu0 0
        %1617 = vmatprep.subr.bf16.mxu0 0
        %1618 = vmatpush1.bf16.xpose.msra.mxu0 0
        %1619 = vmatprep.subr.bf16.mxu0 0
        %1620 = vmatpush1.bf16.xpose.msra.mxu0 0
        %1621 = vmatprep.mubr.bf16.mxu0 0
        %1622 = vmatmul.mubr.bf16.gmra.mrb[0].mxu0 %v1584
        %v1623 = vpop.f32.mrb[0].mxu0
        %v1624 = vadd.f32 0.0, %v1623
        %v1625 = vpop.f32.mrb[0].mxu0
        %v1626 = vpop.f32.mrb[0].mxu0
        %v1627 = vadd.f32 0.0, %v1626
        %v1628 = vpop.f32.mrb[0].mxu0
        %1629 = vdwg.mxu0
        %v1631 = vsel %vm1535, %v1121, 0
        %v1634 = vsel %vm1535, %v1313, 0
        %1636 = vmatprep.subr.bf16.mxu0 0
        %1637 = vmatpush1.bf16.xpose.msra.mxu0 %v1634
        %1638 = vmatprep.subr.bf16.mxu0 0
        %1639 = vmatpush1.bf16.xpose.msra.mxu0 0
        %1640 = vmatprep.subr.bf16.mxu0 0
        %1641 = vmatpush1.bf16.xpose.msra.mxu0 0
        %1642 = vmatprep.subr.bf16.mxu0 0
        %1643 = vmatpush1.bf16.xpose.msra.mxu0 0
        %1644 = vmatprep.subr.bf16.mxu0 0
        %1645 = vmatpush1.bf16.xpose.msra.mxu0 0
        %1646 = vmatprep.subr.bf16.mxu0 0
        %1647 = vmatpush1.bf16.xpose.msra.mxu0 0
        %1648 = vmatprep.subr.bf16.mxu0 0
        %1649 = vmatpush1.bf16.xpose.msra.mxu0 0
        %1650 = vmatprep.subr.bf16.mxu0 0
        %1651 = vmatpush1.bf16.xpose.msra.mxu0 0
        %1652 = vmatprep.subr.bf16.mxu0 0
        %1653 = vmatpush1.bf16.xpose.msra.mxu0 0
        %1654 = vmatprep.subr.bf16.mxu0 0
        %1655 = vmatpush1.bf16.xpose.msra.mxu0 0
        %1656 = vmatprep.subr.bf16.mxu0 0
        %1657 = vmatpush1.bf16.xpose.msra.mxu0 0
        %1658 = vmatprep.subr.bf16.mxu0 0
        %1659 = vmatpush1.bf16.xpose.msra.mxu0 0
        %1660 = vmatprep.subr.bf16.mxu0 0
        %1661 = vmatpush1.bf16.xpose.msra.mxu0 0
        %1662 = vmatprep.subr.bf16.mxu0 0
        %1663 = vmatpush1.bf16.xpose.msra.mxu0 0
        %1664 = vmatprep.subr.bf16.mxu0 0
        %1665 = vmatpush1.bf16.xpose.msra.mxu0 0
        %1666 = vmatprep.subr.bf16.mxu0 0
        %1667 = vmatpush1.bf16.xpose.msra.mxu0 0
        %1668 = vmatprep.mubr.bf16.mxu0 0
        %1669 = vmatmul.mubr.bf16.gmra.mrb[0].mxu0 %v1631
        %v1670 = vpop.f32.mrb[0].mxu0
        %v1671 = vadd.f32 0.0, %v1670
        %v1672 = vpop.f32.mrb[0].mxu0
        %v1673 = vpop.f32.mrb[0].mxu0
        %v1674 = vadd.f32 0.0, %v1673
        %v1675 = vpop.f32.mrb[0].mxu0
        %1676 = vdwg.mxu0
        %v1678 = vsel %vm1535, %v1122, 0
        %v1681 = vsel %vm1535, %v1314, 0
        %1683 = vmatprep.subr.bf16.mxu0 0
        %1684 = vmatpush1.bf16.xpose.msra.mxu0 %v1681
        %1685 = vmatprep.subr.bf16.mxu0 0
        %1686 = vmatpush1.bf16.xpose.msra.mxu0 0
        %1687 = vmatprep.subr.bf16.mxu0 0
        %1688 = vmatpush1.bf16.xpose.msra.mxu0 0
        %1689 = vmatprep.subr.bf16.mxu0 0
        %1690 = vmatpush1.bf16.xpose.msra.mxu0 0
        %1691 = vmatprep.subr.bf16.mxu0 0
        %1692 = vmatpush1.bf16.xpose.msra.mxu0 0
        %1693 = vmatprep.subr.bf16.mxu0 0
        %1694 = vmatpush1.bf16.xpose.msra.mxu0 0
        %1695 = vmatprep.subr.bf16.mxu0 0
        %1696 = vmatpush1.bf16.xpose.msra.mxu0 0
        %1697 = vmatprep.subr.bf16.mxu0 0
        %1698 = vmatpush1.bf16.xpose.msra.mxu0 0
        %1699 = vmatprep.subr.bf16.mxu0 0
        %1700 = vmatpush1.bf16.xpose.msra.mxu0 0
        %1701 = vmatprep.subr.bf16.mxu0 0
        %1702 = vmatpush1.bf16.xpose.msra.mxu0 0
        %1703 = vmatprep.subr.bf16.mxu0 0
        %1704 = vmatpush1.bf16.xpose.msra.mxu0 0
        %1705 = vmatprep.subr.bf16.mxu0 0
        %1706 = vmatpush1.bf16.xpose.msra.mxu0 0
        %1707 = vmatprep.subr.bf16.mxu0 0
        %1708 = vmatpush1.bf16.xpose.msra.mxu0 0
        %1709 = vmatprep.subr.bf16.mxu0 0
        %1710 = vmatpush1.bf16.xpose.msra.mxu0 0
        %1711 = vmatprep.subr.bf16.mxu0 0
        %1712 = vmatpush1.bf16.xpose.msra.mxu0 0
        %1713 = vmatprep.subr.bf16.mxu0 0
        %1714 = vmatpush1.bf16.xpose.msra.mxu0 0
        %1715 = vmatprep.mubr.bf16.mxu0 0
        %1716 = vmatmul.mubr.bf16.gmra.mrb[0].mxu0 %v1678
        %v1717 = vpop.f32.mrb[0].mxu0
        %v1718 = vadd.f32 0.0, %v1717
        %v1719 = vpop.f32.mrb[0].mxu0
        %v1720 = vpop.f32.mrb[0].mxu0
        %v1721 = vadd.f32 0.0, %v1720
        %v1722 = vpop.f32.mrb[0].mxu0
        %1723 = vdwg.mxu0
        %v1725 = vsel %vm1535, %v1123, 0
        %v1728 = vsel %vm1535, %v1315, 0
        %1730 = vmatprep.subr.bf16.mxu0 0
        %1731 = vmatpush1.bf16.xpose.msra.mxu0 %v1728
        %1732 = vmatprep.subr.bf16.mxu0 0
        %1733 = vmatpush1.bf16.xpose.msra.mxu0 0
        %1734 = vmatprep.subr.bf16.mxu0 0
        %1735 = vmatpush1.bf16.xpose.msra.mxu0 0
        %1736 = vmatprep.subr.bf16.mxu0 0
        %1737 = vmatpush1.bf16.xpose.msra.mxu0 0
        %1738 = vmatprep.subr.bf16.mxu0 0
        %1739 = vmatpush1.bf16.xpose.msra.mxu0 0
        %1740 = vmatprep.subr.bf16.mxu0 0
        %1741 = vmatpush1.bf16.xpose.msra.mxu0 0
        %1742 = vmatprep.subr.bf16.mxu0 0
        %1743 = vmatpush1.bf16.xpose.msra.mxu0 0
        %1744 = vmatprep.subr.bf16.mxu0 0
        %1745 = vmatpush1.bf16.xpose.msra.mxu0 0
        %1746 = vmatprep.subr.bf16.mxu0 0
        %1747 = vmatpush1.bf16.xpose.msra.mxu0 0
        %1748 = vmatprep.subr.bf16.mxu0 0
        %1749 = vmatpush1.bf16.xpose.msra.mxu0 0
        %1750 = vmatprep.subr.bf16.mxu0 0
        %1751 = vmatpush1.bf16.xpose.msra.mxu0 0
        %1752 = vmatprep.subr.bf16.mxu0 0
        %1753 = vmatpush1.bf16.xpose.msra.mxu0 0
        %1754 = vmatprep.subr.bf16.mxu0 0
        %1755 = vmatpush1.bf16.xpose.msra.mxu0 0
        %1756 = vmatprep.subr.bf16.mxu0 0
        %1757 = vmatpush1.bf16.xpose.msra.mxu0 0
        %1758 = vmatprep.subr.bf16.mxu0 0
        %1759 = vmatpush1.bf16.xpose.msra.mxu0 0
        %1760 = vmatprep.subr.bf16.mxu0 0
        %1761 = vmatpush1.bf16.xpose.msra.mxu0 0
        %1762 = vmatprep.mubr.bf16.mxu0 0
        %1763 = vmatmul.mubr.bf16.gmra.mrb[0].mxu0 %v1725
        %v1764 = vpop.f32.mrb[0].mxu0
        %v1765 = vadd.f32 0.0, %v1764
        %v1766 = vpop.f32.mrb[0].mxu0
        %v1767 = vpop.f32.mrb[0].mxu0
        %v1768 = vadd.f32 0.0, %v1767
        %v1769 = vpop.f32.mrb[0].mxu0
        %1770 = vdwg.mxu0
        %v1772 = vsel %vm1535, %v1124, 0
        %v1775 = vsel %vm1535, %v1316, 0
        %1777 = vmatprep.subr.bf16.mxu0 0
        %1778 = vmatpush1.bf16.xpose.msra.mxu0 %v1775
        %1779 = vmatprep.subr.bf16.mxu0 0
        %1780 = vmatpush1.bf16.xpose.msra.mxu0 0
        %1781 = vmatprep.subr.bf16.mxu0 0
        %1782 = vmatpush1.bf16.xpose.msra.mxu0 0
        %1783 = vmatprep.subr.bf16.mxu0 0
        %1784 = vmatpush1.bf16.xpose.msra.mxu0 0
        %1785 = vmatprep.subr.bf16.mxu0 0
        %1786 = vmatpush1.bf16.xpose.msra.mxu0 0
        %1787 = vmatprep.subr.bf16.mxu0 0
        %1788 = vmatpush1.bf16.xpose.msra.mxu0 0
        %1789 = vmatprep.subr.bf16.mxu0 0
        %1790 = vmatpush1.bf16.xpose.msra.mxu0 0
        %1791 = vmatprep.subr.bf16.mxu0 0
        %1792 = vmatpush1.bf16.xpose.msra.mxu0 0
        %1793 = vmatprep.subr.bf16.mxu0 0
        %1794 = vmatpush1.bf16.xpose.msra.mxu0 0
        %1795 = vmatprep.subr.bf16.mxu0 0
        %1796 = vmatpush1.bf16.xpose.msra.mxu0 0
        %1797 = vmatprep.subr.bf16.mxu0 0
        %1798 = vmatpush1.bf16.xpose.msra.mxu0 0
        %1799 = vmatprep.subr.bf16.mxu0 0
        %1800 = vmatpush1.bf16.xpose.msra.mxu0 0
        %1801 = vmatprep.subr.bf16.mxu0 0
        %1802 = vmatpush1.bf16.xpose.msra.mxu0 0
        %1803 = vmatprep.subr.bf16.mxu0 0
        %1804 = vmatpush1.bf16.xpose.msra.mxu0 0
        %1805 = vmatprep.subr.bf16.mxu0 0
        %1806 = vmatpush1.bf16.xpose.msra.mxu0 0
        %1807 = vmatprep.subr.bf16.mxu0 0
        %1808 = vmatpush1.bf16.xpose.msra.mxu0 0
        %1809 = vmatprep.mubr.bf16.mxu0 0
        %1810 = vmatmul.mubr.bf16.gmra.mrb[0].mxu0 %v1772
        %v1811 = vpop.f32.mrb[0].mxu0
        %v1812 = vadd.f32 0.0, %v1811
        %v1813 = vpop.f32.mrb[0].mxu0
        %v1814 = vpop.f32.mrb[0].mxu0
        %v1815 = vadd.f32 0.0, %v1814
        %v1816 = vpop.f32.mrb[0].mxu0
        %1817 = vdwg.mxu0
        %v1819 = vsel %vm1535, %v1125, 0
        %v1822 = vsel %vm1535, %v1317, 0
        %1824 = vmatprep.subr.bf16.mxu0 0
        %1825 = vmatpush1.bf16.xpose.msra.mxu0 %v1822
        %1826 = vmatprep.subr.bf16.mxu0 0
        %1827 = vmatpush1.bf16.xpose.msra.mxu0 0
        %1828 = vmatprep.subr.bf16.mxu0 0
        %1829 = vmatpush1.bf16.xpose.msra.mxu0 0
        %1830 = vmatprep.subr.bf16.mxu0 0
        %1831 = vmatpush1.bf16.xpose.msra.mxu0 0
        %1832 = vmatprep.subr.bf16.mxu0 0
        %1833 = vmatpush1.bf16.xpose.msra.mxu0 0
        %1834 = vmatprep.subr.bf16.mxu0 0
        %1835 = vmatpush1.bf16.xpose.msra.mxu0 0
        %1836 = vmatprep.subr.bf16.mxu0 0
        %1837 = vmatpush1.bf16.xpose.msra.mxu0 0
        %1838 = vmatprep.subr.bf16.mxu0 0
        %1839 = vmatpush1.bf16.xpose.msra.mxu0 0
        %1840 = vmatprep.subr.bf16.mxu0 0
        %1841 = vmatpush1.bf16.xpose.msra.mxu0 0
        %1842 = vmatprep.subr.bf16.mxu0 0
        %1843 = vmatpush1.bf16.xpose.msra.mxu0 0
        %1844 = vmatprep.subr.bf16.mxu0 0
        %1845 = vmatpush1.bf16.xpose.msra.mxu0 0
        %1846 = vmatprep.subr.bf16.mxu0 0
        %1847 = vmatpush1.bf16.xpose.msra.mxu0 0
        %1848 = vmatprep.subr.bf16.mxu0 0
        %1849 = vmatpush1.bf16.xpose.msra.mxu0 0
        %1850 = vmatprep.subr.bf16.mxu0 0
        %1851 = vmatpush1.bf16.xpose.msra.mxu0 0
        %1852 = vmatprep.subr.bf16.mxu0 0
        %1853 = vmatpush1.bf16.xpose.msra.mxu0 0
        %1854 = vmatprep.subr.bf16.mxu0 0
        %1855 = vmatpush1.bf16.xpose.msra.mxu0 0
        %1856 = vmatprep.mubr.bf16.mxu0 0
        %1857 = vmatmul.mubr.bf16.gmra.mrb[0].mxu0 %v1819
        %v1858 = vpop.f32.mrb[0].mxu0
        %v1859 = vadd.f32 0.0, %v1858
        %v1860 = vpop.f32.mrb[0].mxu0
        %v1861 = vpop.f32.mrb[0].mxu0
        %v1862 = vadd.f32 0.0, %v1861
        %v1863 = vpop.f32.mrb[0].mxu0
        %1864 = vdwg.mxu0
        %v1866 = vsel %vm1535, %v1126, 0
        %v1869 = vsel %vm1535, %v1318, 0
        %1871 = vmatprep.subr.bf16.mxu0 0
        %1872 = vmatpush1.bf16.xpose.msra.mxu0 %v1869
        %1873 = vmatprep.subr.bf16.mxu0 0
        %1874 = vmatpush1.bf16.xpose.msra.mxu0 0
        %1875 = vmatprep.subr.bf16.mxu0 0
        %1876 = vmatpush1.bf16.xpose.msra.mxu0 0
        %1877 = vmatprep.subr.bf16.mxu0 0
        %1878 = vmatpush1.bf16.xpose.msra.mxu0 0
        %1879 = vmatprep.subr.bf16.mxu0 0
        %1880 = vmatpush1.bf16.xpose.msra.mxu0 0
        %1881 = vmatprep.subr.bf16.mxu0 0
        %1882 = vmatpush1.bf16.xpose.msra.mxu0 0
        %1883 = vmatprep.subr.bf16.mxu0 0
        %1884 = vmatpush1.bf16.xpose.msra.mxu0 0
        %1885 = vmatprep.subr.bf16.mxu0 0
        %1886 = vmatpush1.bf16.xpose.msra.mxu0 0
        %1887 = vmatprep.subr.bf16.mxu0 0
        %1888 = vmatpush1.bf16.xpose.msra.mxu0 0
        %1889 = vmatprep.subr.bf16.mxu0 0
        %1890 = vmatpush1.bf16.xpose.msra.mxu0 0
        %1891 = vmatprep.subr.bf16.mxu0 0
        %1892 = vmatpush1.bf16.xpose.msra.mxu0 0
        %1893 = vmatprep.subr.bf16.mxu0 0
        %1894 = vmatpush1.bf16.xpose.msra.mxu0 0
        %1895 = vmatprep.subr.bf16.mxu0 0
        %1896 = vmatpush1.bf16.xpose.msra.mxu0 0
        %1897 = vmatprep.subr.bf16.mxu0 0
        %1898 = vmatpush1.bf16.xpose.msra.mxu0 0
        %1899 = vmatprep.subr.bf16.mxu0 0
        %1900 = vmatpush1.bf16.xpose.msra.mxu0 0
        %1901 = vmatprep.subr.bf16.mxu0 0
        %1902 = vmatpush1.bf16.xpose.msra.mxu0 0
        %1903 = vmatprep.mubr.bf16.mxu0 0
        %1904 = vmatmul.mubr.bf16.gmra.mrb[0].mxu0 %v1866
        %v1905 = vpop.f32.mrb[0].mxu0
        %v1906 = vadd.f32 0.0, %v1905
        %v1907 = vpop.f32.mrb[0].mxu0
        %v1908 = vpop.f32.mrb[0].mxu0
        %v1909 = vadd.f32 0.0, %v1908
        %v1910 = vpop.f32.mrb[0].mxu0
        %1911 = vdwg.mxu0
        %v1913 = vsel %vm1535, %v1127, 0
        %v1916 = vsel %vm1535, %v1319, 0
        %1918 = vmatprep.subr.bf16.mxu0 0
        %1919 = vmatpush1.bf16.xpose.msra.mxu0 %v1916
        %1920 = vmatprep.subr.bf16.mxu0 0
        %1921 = vmatpush1.bf16.xpose.msra.mxu0 0
        %1922 = vmatprep.subr.bf16.mxu0 0
        %1923 = vmatpush1.bf16.xpose.msra.mxu0 0
        %1924 = vmatprep.subr.bf16.mxu0 0
        %1925 = vmatpush1.bf16.xpose.msra.mxu0 0
        %1926 = vmatprep.subr.bf16.mxu0 0
        %1927 = vmatpush1.bf16.xpose.msra.mxu0 0
        %1928 = vmatprep.subr.bf16.mxu0 0
        %1929 = vmatpush1.bf16.xpose.msra.mxu0 0
        %1930 = vmatprep.subr.bf16.mxu0 0
        %1931 = vmatpush1.bf16.xpose.msra.mxu0 0
        %1932 = vmatprep.subr.bf16.mxu0 0
        %1933 = vmatpush1.bf16.xpose.msra.mxu0 0
        %1934 = vmatprep.subr.bf16.mxu0 0
        %1935 = vmatpush1.bf16.xpose.msra.mxu0 0
        %1936 = vmatprep.subr.bf16.mxu0 0
        %1937 = vmatpush1.bf16.xpose.msra.mxu0 0
        %1938 = vmatprep.subr.bf16.mxu0 0
        %1939 = vmatpush1.bf16.xpose.msra.mxu0 0
        %1940 = vmatprep.subr.bf16.mxu0 0
        %1941 = vmatpush1.bf16.xpose.msra.mxu0 0
        %1942 = vmatprep.subr.bf16.mxu0 0
        %1943 = vmatpush1.bf16.xpose.msra.mxu0 0
        %1944 = vmatprep.subr.bf16.mxu0 0
        %1945 = vmatpush1.bf16.xpose.msra.mxu0 0
        %1946 = vmatprep.subr.bf16.mxu0 0
        %1947 = vmatpush1.bf16.xpose.msra.mxu0 0
        %1948 = vmatprep.subr.bf16.mxu0 0
        %1949 = vmatpush1.bf16.xpose.msra.mxu0 0
        %1950 = vmatprep.mubr.bf16.mxu0 0
        %1951 = vmatmul.mubr.bf16.gmra.mrb[0].mxu0 %v1913
        %v1952 = vpop.f32.mrb[0].mxu0
        %v1953 = vadd.f32 0.0, %v1952
        %v1954 = vpop.f32.mrb[0].mxu0
        %v1955 = vpop.f32.mrb[0].mxu0
        %v1956 = vadd.f32 0.0, %v1955
        %v1957 = vpop.f32.mrb[0].mxu0
        %1958 = vdwg.mxu0
        %v1960 = vsel %vm1535, %v1128, 0
        %v1963 = vsel %vm1535, %v1320, 0
        %1965 = vmatprep.subr.bf16.mxu0 0
        %1966 = vmatpush1.bf16.xpose.msra.mxu0 %v1963
        %1967 = vmatprep.subr.bf16.mxu0 0
        %1968 = vmatpush1.bf16.xpose.msra.mxu0 0
        %1969 = vmatprep.subr.bf16.mxu0 0
        %1970 = vmatpush1.bf16.xpose.msra.mxu0 0
        %1971 = vmatprep.subr.bf16.mxu0 0
        %1972 = vmatpush1.bf16.xpose.msra.mxu0 0
        %1973 = vmatprep.subr.bf16.mxu0 0
        %1974 = vmatpush1.bf16.xpose.msra.mxu0 0
        %1975 = vmatprep.subr.bf16.mxu0 0
        %1976 = vmatpush1.bf16.xpose.msra.mxu0 0
        %1977 = vmatprep.subr.bf16.mxu0 0
        %1978 = vmatpush1.bf16.xpose.msra.mxu0 0
        %1979 = vmatprep.subr.bf16.mxu0 0
        %1980 = vmatpush1.bf16.xpose.msra.mxu0 0
        %1981 = vmatprep.subr.bf16.mxu0 0
        %1982 = vmatpush1.bf16.xpose.msra.mxu0 0
        %1983 = vmatprep.subr.bf16.mxu0 0
        %1984 = vmatpush1.bf16.xpose.msra.mxu0 0
        %1985 = vmatprep.subr.bf16.mxu0 0
        %1986 = vmatpush1.bf16.xpose.msra.mxu0 0
        %1987 = vmatprep.subr.bf16.mxu0 0
        %1988 = vmatpush1.bf16.xpose.msra.mxu0 0
        %1989 = vmatprep.subr.bf16.mxu0 0
        %1990 = vmatpush1.bf16.xpose.msra.mxu0 0
        %1991 = vmatprep.subr.bf16.mxu0 0
        %1992 = vmatpush1.bf16.xpose.msra.mxu0 0
        %1993 = vmatprep.subr.bf16.mxu0 0
        %1994 = vmatpush1.bf16.xpose.msra.mxu0 0
        %1995 = vmatprep.subr.bf16.mxu0 0
        %1996 = vmatpush1.bf16.xpose.msra.mxu0 0
        %1997 = vmatprep.mubr.bf16.mxu0 0
        %1998 = vmatmul.mubr.bf16.gmra.mrb[0].mxu0 %v1960
        %v1999 = vpop.f32.mrb[0].mxu0
        %v2000 = vadd.f32 0.0, %v1999
        %v2001 = vpop.f32.mrb[0].mxu0
        %v2002 = vpop.f32.mrb[0].mxu0
        %v2003 = vadd.f32 0.0, %v2002
        %v2004 = vpop.f32.mrb[0].mxu0
        %2005 = vdwg.mxu0
        %v2007 = vsel %vm1535, %v1129, 0
        %v2010 = vsel %vm1535, %v1321, 0
        %2012 = vmatprep.subr.bf16.mxu0 0
        %2013 = vmatpush1.bf16.xpose.msra.mxu0 %v2010
        %2014 = vmatprep.subr.bf16.mxu0 0
        %2015 = vmatpush1.bf16.xpose.msra.mxu0 0
        %2016 = vmatprep.subr.bf16.mxu0 0
        %2017 = vmatpush1.bf16.xpose.msra.mxu0 0
        %2018 = vmatprep.subr.bf16.mxu0 0
        %2019 = vmatpush1.bf16.xpose.msra.mxu0 0
        %2020 = vmatprep.subr.bf16.mxu0 0
        %2021 = vmatpush1.bf16.xpose.msra.mxu0 0
        %2022 = vmatprep.subr.bf16.mxu0 0
        %2023 = vmatpush1.bf16.xpose.msra.mxu0 0
        %2024 = vmatprep.subr.bf16.mxu0 0
        %2025 = vmatpush1.bf16.xpose.msra.mxu0 0
        %2026 = vmatprep.subr.bf16.mxu0 0
        %2027 = vmatpush1.bf16.xpose.msra.mxu0 0
        %2028 = vmatprep.subr.bf16.mxu0 0
        %2029 = vmatpush1.bf16.xpose.msra.mxu0 0
        %2030 = vmatprep.subr.bf16.mxu0 0
        %2031 = vmatpush1.bf16.xpose.msra.mxu0 0
        %2032 = vmatprep.subr.bf16.mxu0 0
        %2033 = vmatpush1.bf16.xpose.msra.mxu0 0
        %2034 = vmatprep.subr.bf16.mxu0 0
        %2035 = vmatpush1.bf16.xpose.msra.mxu0 0
        %2036 = vmatprep.subr.bf16.mxu0 0
        %2037 = vmatpush1.bf16.xpose.msra.mxu0 0
        %2038 = vmatprep.subr.bf16.mxu0 0
        %2039 = vmatpush1.bf16.xpose.msra.mxu0 0
        %2040 = vmatprep.subr.bf16.mxu0 0
        %2041 = vmatpush1.bf16.xpose.msra.mxu0 0
        %2042 = vmatprep.subr.bf16.mxu0 0
        %2043 = vmatpush1.bf16.xpose.msra.mxu0 0
        %2044 = vmatprep.mubr.bf16.mxu0 0
        %2045 = vmatmul.mubr.bf16.gmra.mrb[0].mxu0 %v2007
        %v2046 = vpop.f32.mrb[0].mxu0
        %v2047 = vadd.f32 0.0, %v2046
        %v2048 = vpop.f32.mrb[0].mxu0
        %v2049 = vpop.f32.mrb[0].mxu0
        %v2050 = vadd.f32 0.0, %v2049
        %v2051 = vpop.f32.mrb[0].mxu0
        %2052 = vdwg.mxu0
        %v2054 = vsel %vm1535, %v1130, 0
        %v2057 = vsel %vm1535, %v1322, 0
        %2059 = vmatprep.subr.bf16.mxu0 0
        %2060 = vmatpush1.bf16.xpose.msra.mxu0 %v2057
        %2061 = vmatprep.subr.bf16.mxu0 0
        %2062 = vmatpush1.bf16.xpose.msra.mxu0 0
        %2063 = vmatprep.subr.bf16.mxu0 0
        %2064 = vmatpush1.bf16.xpose.msra.mxu0 0
        %2065 = vmatprep.subr.bf16.mxu0 0
        %2066 = vmatpush1.bf16.xpose.msra.mxu0 0
        %2067 = vmatprep.subr.bf16.mxu0 0
        %2068 = vmatpush1.bf16.xpose.msra.mxu0 0
        %2069 = vmatprep.subr.bf16.mxu0 0
        %2070 = vmatpush1.bf16.xpose.msra.mxu0 0
        %2071 = vmatprep.subr.bf16.mxu0 0
        %2072 = vmatpush1.bf16.xpose.msra.mxu0 0
        %2073 = vmatprep.subr.bf16.mxu0 0
        %2074 = vmatpush1.bf16.xpose.msra.mxu0 0
        %2075 = vmatprep.subr.bf16.mxu0 0
        %2076 = vmatpush1.bf16.xpose.msra.mxu0 0
        %2077 = vmatprep.subr.bf16.mxu0 0
        %2078 = vmatpush1.bf16.xpose.msra.mxu0 0
        %2079 = vmatprep.subr.bf16.mxu0 0
        %2080 = vmatpush1.bf16.xpose.msra.mxu0 0
        %2081 = vmatprep.subr.bf16.mxu0 0
        %2082 = vmatpush1.bf16.xpose.msra.mxu0 0
        %2083 = vmatprep.subr.bf16.mxu0 0
        %2084 = vmatpush1.bf16.xpose.msra.mxu0 0
        %2085 = vmatprep.subr.bf16.mxu0 0
        %2086 = vmatpush1.bf16.xpose.msra.mxu0 0
        %2087 = vmatprep.subr.bf16.mxu0 0
        %2088 = vmatpush1.bf16.xpose.msra.mxu0 0
        %2089 = vmatprep.subr.bf16.mxu0 0
        %2090 = vmatpush1.bf16.xpose.msra.mxu0 0
        %2091 = vmatprep.mubr.bf16.mxu0 0
        %2092 = vmatmul.mubr.bf16.gmra.mrb[0].mxu0 %v2054
        %v2093 = vpop.f32.mrb[0].mxu0
        %v2094 = vadd.f32 0.0, %v2093
        %v2095 = vpop.f32.mrb[0].mxu0
        %v2096 = vpop.f32.mrb[0].mxu0
        %v2097 = vadd.f32 0.0, %v2096
        %v2098 = vpop.f32.mrb[0].mxu0
        %2099 = vdwg.mxu0
        %v2101 = vsel %vm1535, %v1131, 0
        %v2104 = vsel %vm1535, %v1323, 0
        %2106 = vmatprep.subr.bf16.mxu0 0
        %2107 = vmatpush1.bf16.xpose.msra.mxu0 %v2104
        %2108 = vmatprep.subr.bf16.mxu0 0
        %2109 = vmatpush1.bf16.xpose.msra.mxu0 0
        %2110 = vmatprep.subr.bf16.mxu0 0
        %2111 = vmatpush1.bf16.xpose.msra.mxu0 0
        %2112 = vmatprep.subr.bf16.mxu0 0
        %2113 = vmatpush1.bf16.xpose.msra.mxu0 0
        %2114 = vmatprep.subr.bf16.mxu0 0
        %2115 = vmatpush1.bf16.xpose.msra.mxu0 0
        %2116 = vmatprep.subr.bf16.mxu0 0
        %2117 = vmatpush1.bf16.xpose.msra.mxu0 0
        %2118 = vmatprep.subr.bf16.mxu0 0
        %2119 = vmatpush1.bf16.xpose.msra.mxu0 0
        %2120 = vmatprep.subr.bf16.mxu0 0
        %2121 = vmatpush1.bf16.xpose.msra.mxu0 0
        %2122 = vmatprep.subr.bf16.mxu0 0
        %2123 = vmatpush1.bf16.xpose.msra.mxu0 0
        %2124 = vmatprep.subr.bf16.mxu0 0
        %2125 = vmatpush1.bf16.xpose.msra.mxu0 0
        %2126 = vmatprep.subr.bf16.mxu0 0
        %2127 = vmatpush1.bf16.xpose.msra.mxu0 0
        %2128 = vmatprep.subr.bf16.mxu0 0
        %2129 = vmatpush1.bf16.xpose.msra.mxu0 0
        %2130 = vmatprep.subr.bf16.mxu0 0
        %2131 = vmatpush1.bf16.xpose.msra.mxu0 0
        %2132 = vmatprep.subr.bf16.mxu0 0
        %2133 = vmatpush1.bf16.xpose.msra.mxu0 0
        %2134 = vmatprep.subr.bf16.mxu0 0
        %2135 = vmatpush1.bf16.xpose.msra.mxu0 0
        %2136 = vmatprep.subr.bf16.mxu0 0
        %2137 = vmatpush1.bf16.xpose.msra.mxu0 0
        %2138 = vmatprep.mubr.bf16.mxu0 0
        %2139 = vmatmul.mubr.bf16.gmra.mrb[0].mxu0 %v2101
        %v2140 = vpop.f32.mrb[0].mxu0
        %v2141 = vadd.f32 0.0, %v2140
        %v2142 = vpop.f32.mrb[0].mxu0
        %v2143 = vpop.f32.mrb[0].mxu0
        %v2144 = vadd.f32 0.0, %v2143
        %v2145 = vpop.f32.mrb[0].mxu0
        %2146 = vdwg.mxu0
        %v2148 = vsel %vm1535, %v1132, 0
        %v2151 = vsel %vm1535, %v1324, 0
        %2153 = vmatprep.subr.bf16.mxu0 0
        %2154 = vmatpush1.bf16.xpose.msra.mxu0 %v2151
        %2155 = vmatprep.subr.bf16.mxu0 0
        %2156 = vmatpush1.bf16.xpose.msra.mxu0 0
        %2157 = vmatprep.subr.bf16.mxu0 0
        %2158 = vmatpush1.bf16.xpose.msra.mxu0 0
        %2159 = vmatprep.subr.bf16.mxu0 0
        %2160 = vmatpush1.bf16.xpose.msra.mxu0 0
        %2161 = vmatprep.subr.bf16.mxu0 0
        %2162 = vmatpush1.bf16.xpose.msra.mxu0 0
        %2163 = vmatprep.subr.bf16.mxu0 0
        %2164 = vmatpush1.bf16.xpose.msra.mxu0 0
        %2165 = vmatprep.subr.bf16.mxu0 0
        %2166 = vmatpush1.bf16.xpose.msra.mxu0 0
        %2167 = vmatprep.subr.bf16.mxu0 0
        %2168 = vmatpush1.bf16.xpose.msra.mxu0 0
        %2169 = vmatprep.subr.bf16.mxu0 0
        %2170 = vmatpush1.bf16.xpose.msra.mxu0 0
        %2171 = vmatprep.subr.bf16.mxu0 0
        %2172 = vmatpush1.bf16.xpose.msra.mxu0 0
        %2173 = vmatprep.subr.bf16.mxu0 0
        %2174 = vmatpush1.bf16.xpose.msra.mxu0 0
        %2175 = vmatprep.subr.bf16.mxu0 0
        %2176 = vmatpush1.bf16.xpose.msra.mxu0 0
        %2177 = vmatprep.subr.bf16.mxu0 0
        %2178 = vmatpush1.bf16.xpose.msra.mxu0 0
        %2179 = vmatprep.subr.bf16.mxu0 0
        %2180 = vmatpush1.bf16.xpose.msra.mxu0 0
        %2181 = vmatprep.subr.bf16.mxu0 0
        %2182 = vmatpush1.bf16.xpose.msra.mxu0 0
        %2183 = vmatprep.subr.bf16.mxu0 0
        %2184 = vmatpush1.bf16.xpose.msra.mxu0 0
        %2185 = vmatprep.mubr.bf16.mxu0 0
        %2186 = vmatmul.mubr.bf16.gmra.mrb[0].mxu0 %v2148
        %v2187 = vpop.f32.mrb[0].mxu0
        %v2188 = vadd.f32 0.0, %v2187
        %v2189 = vpop.f32.mrb[0].mxu0
        %v2190 = vpop.f32.mrb[0].mxu0
        %v2191 = vadd.f32 0.0, %v2190
        %v2192 = vpop.f32.mrb[0].mxu0
        %2193 = vdwg.mxu0
        %v2195 = vsel %vm1535, %v1133, 0
        %v2198 = vsel %vm1535, %v1325, 0
        %2200 = vmatprep.subr.bf16.mxu0 0
        %2201 = vmatpush1.bf16.xpose.msra.mxu0 %v2198
        %2202 = vmatprep.subr.bf16.mxu0 0
        %2203 = vmatpush1.bf16.xpose.msra.mxu0 0
        %2204 = vmatprep.subr.bf16.mxu0 0
        %2205 = vmatpush1.bf16.xpose.msra.mxu0 0
        %2206 = vmatprep.subr.bf16.mxu0 0
        %2207 = vmatpush1.bf16.xpose.msra.mxu0 0
        %2208 = vmatprep.subr.bf16.mxu0 0
        %2209 = vmatpush1.bf16.xpose.msra.mxu0 0
        %2210 = vmatprep.subr.bf16.mxu0 0
        %2211 = vmatpush1.bf16.xpose.msra.mxu0 0
        %2212 = vmatprep.subr.bf16.mxu0 0
        %2213 = vmatpush1.bf16.xpose.msra.mxu0 0
        %2214 = vmatprep.subr.bf16.mxu0 0
        %2215 = vmatpush1.bf16.xpose.msra.mxu0 0
        %2216 = vmatprep.subr.bf16.mxu0 0
        %2217 = vmatpush1.bf16.xpose.msra.mxu0 0
        %2218 = vmatprep.subr.bf16.mxu0 0
        %2219 = vmatpush1.bf16.xpose.msra.mxu0 0
        %2220 = vmatprep.subr.bf16.mxu0 0
        %2221 = vmatpush1.bf16.xpose.msra.mxu0 0
        %2222 = vmatprep.subr.bf16.mxu0 0
        %2223 = vmatpush1.bf16.xpose.msra.mxu0 0
        %2224 = vmatprep.subr.bf16.mxu0 0
        %2225 = vmatpush1.bf16.xpose.msra.mxu0 0
        %2226 = vmatprep.subr.bf16.mxu0 0
        %2227 = vmatpush1.bf16.xpose.msra.mxu0 0
        %2228 = vmatprep.subr.bf16.mxu0 0
        %2229 = vmatpush1.bf16.xpose.msra.mxu0 0
        %2230 = vmatprep.subr.bf16.mxu0 0
        %2231 = vmatpush1.bf16.xpose.msra.mxu0 0
        %2232 = vmatprep.mubr.bf16.mxu0 0
        %2233 = vmatmul.mubr.bf16.gmra.mrb[0].mxu0 %v2195
        %v2234 = vpop.f32.mrb[0].mxu0
        %v2235 = vadd.f32 0.0, %v2234
        %v2236 = vpop.f32.mrb[0].mxu0
        %v2237 = vpop.f32.mrb[0].mxu0
        %v2238 = vadd.f32 0.0, %v2237
        %v2239 = vpop.f32.mrb[0].mxu0
        %2240 = vdwg.mxu0
        %v2242 = vsel %vm1535, %v1134, 0
        %v2245 = vsel %vm1535, %v1326, 0
        %2247 = vmatprep.subr.bf16.mxu0 0
        %2248 = vmatpush1.bf16.xpose.msra.mxu0 %v2245
        %2249 = vmatprep.subr.bf16.mxu0 0
        %2250 = vmatpush1.bf16.xpose.msra.mxu0 0
        %2251 = vmatprep.subr.bf16.mxu0 0
        %2252 = vmatpush1.bf16.xpose.msra.mxu0 0
        %2253 = vmatprep.subr.bf16.mxu0 0
        %2254 = vmatpush1.bf16.xpose.msra.mxu0 0
        %2255 = vmatprep.subr.bf16.mxu0 0
        %2256 = vmatpush1.bf16.xpose.msra.mxu0 0
        %2257 = vmatprep.subr.bf16.mxu0 0
        %2258 = vmatpush1.bf16.xpose.msra.mxu0 0
        %2259 = vmatprep.subr.bf16.mxu0 0
        %2260 = vmatpush1.bf16.xpose.msra.mxu0 0
        %2261 = vmatprep.subr.bf16.mxu0 0
        %2262 = vmatpush1.bf16.xpose.msra.mxu0 0
        %2263 = vmatprep.subr.bf16.mxu0 0
        %2264 = vmatpush1.bf16.xpose.msra.mxu0 0
        %2265 = vmatprep.subr.bf16.mxu0 0
        %2266 = vmatpush1.bf16.xpose.msra.mxu0 0
        %2267 = vmatprep.subr.bf16.mxu0 0
        %2268 = vmatpush1.bf16.xpose.msra.mxu0 0
        %2269 = vmatprep.subr.bf16.mxu0 0
        %2270 = vmatpush1.bf16.xpose.msra.mxu0 0
        %2271 = vmatprep.subr.bf16.mxu0 0
        %2272 = vmatpush1.bf16.xpose.msra.mxu0 0
        %2273 = vmatprep.subr.bf16.mxu0 0
        %2274 = vmatpush1.bf16.xpose.msra.mxu0 0
        %2275 = vmatprep.subr.bf16.mxu0 0
        %2276 = vmatpush1.bf16.xpose.msra.mxu0 0
        %2277 = vmatprep.subr.bf16.mxu0 0
        %2278 = vmatpush1.bf16.xpose.msra.mxu0 0
        %2279 = vmatprep.mubr.bf16.mxu0 0
        %2280 = vmatmul.mubr.bf16.gmra.mrb[0].mxu0 %v2242
        %v2281 = vpop.f32.mrb[0].mxu0
        %v2282 = vadd.f32 0.0, %v2281
        %v2283 = vpop.f32.mrb[0].mxu0
        %v2284 = vpop.f32.mrb[0].mxu0
        %v2285 = vadd.f32 0.0, %v2284
        %v2286 = vpop.f32.mrb[0].mxu0
        %2287 = vdwg.mxu0
        %v2289 = vsel %vm1535, %v1135, 0
        %v2292 = vsel %vm1535, %v1327, 0
        %2294 = vmatprep.subr.bf16.mxu0 0
        %2295 = vmatpush1.bf16.xpose.msra.mxu0 %v2292
        %2296 = vmatprep.subr.bf16.mxu0 0
        %2297 = vmatpush1.bf16.xpose.msra.mxu0 0
        %2298 = vmatprep.subr.bf16.mxu0 0
        %2299 = vmatpush1.bf16.xpose.msra.mxu0 0
        %2300 = vmatprep.subr.bf16.mxu0 0
        %2301 = vmatpush1.bf16.xpose.msra.mxu0 0
        %2302 = vmatprep.subr.bf16.mxu0 0
        %2303 = vmatpush1.bf16.xpose.msra.mxu0 0
        %2304 = vmatprep.subr.bf16.mxu0 0
        %2305 = vmatpush1.bf16.xpose.msra.mxu0 0
        %2306 = vmatprep.subr.bf16.mxu0 0
        %2307 = vmatpush1.bf16.xpose.msra.mxu0 0
        %2308 = vmatprep.subr.bf16.mxu0 0
        %2309 = vmatpush1.bf16.xpose.msra.mxu0 0
        %2310 = vmatprep.subr.bf16.mxu0 0
        %2311 = vmatpush1.bf16.xpose.msra.mxu0 0
        %2312 = vmatprep.subr.bf16.mxu0 0
        %2313 = vmatpush1.bf16.xpose.msra.mxu0 0
        %2314 = vmatprep.subr.bf16.mxu0 0
        %2315 = vmatpush1.bf16.xpose.msra.mxu0 0
        %2316 = vmatprep.subr.bf16.mxu0 0
        %2317 = vmatpush1.bf16.xpose.msra.mxu0 0
        %2318 = vmatprep.subr.bf16.mxu0 0
        %2319 = vmatpush1.bf16.xpose.msra.mxu0 0
        %2320 = vmatprep.subr.bf16.mxu0 0
        %2321 = vmatpush1.bf16.xpose.msra.mxu0 0
        %2322 = vmatprep.subr.bf16.mxu0 0
        %2323 = vmatpush1.bf16.xpose.msra.mxu0 0
        %2324 = vmatprep.subr.bf16.mxu0 0
        %2325 = vmatpush1.bf16.xpose.msra.mxu0 0
        %2326 = vmatprep.mubr.bf16.mxu0 0
        %2327 = vmatmul.mubr.bf16.gmra.mrb[0].mxu0 %v2289
        %v2328 = vpop.f32.mrb[0].mxu0
        %v2329 = vadd.f32 0.0, %v2328
        %v2330 = vpop.f32.mrb[0].mxu0
        %v2331 = vpop.f32.mrb[0].mxu0
        %v2332 = vadd.f32 0.0, %v2331
        %v2333 = vpop.f32.mrb[0].mxu0
        %2334 = vdwg.mxu0
        %v2336 = vsel %vm1535, %v1136, 0
        %v2339 = vsel %vm1535, %v1328, 0
        %2341 = vmatprep.subr.bf16.mxu0 0
        %2342 = vmatpush1.bf16.xpose.msra.mxu0 %v2339
        %2343 = vmatprep.subr.bf16.mxu0 0
        %2344 = vmatpush1.bf16.xpose.msra.mxu0 0
        %2345 = vmatprep.subr.bf16.mxu0 0
        %2346 = vmatpush1.bf16.xpose.msra.mxu0 0
        %2347 = vmatprep.subr.bf16.mxu0 0
        %2348 = vmatpush1.bf16.xpose.msra.mxu0 0
        %2349 = vmatprep.subr.bf16.mxu0 0
        %2350 = vmatpush1.bf16.xpose.msra.mxu0 0
        %2351 = vmatprep.subr.bf16.mxu0 0
        %2352 = vmatpush1.bf16.xpose.msra.mxu0 0
        %2353 = vmatprep.subr.bf16.mxu0 0
        %2354 = vmatpush1.bf16.xpose.msra.mxu0 0
        %2355 = vmatprep.subr.bf16.mxu0 0
        %2356 = vmatpush1.bf16.xpose.msra.mxu0 0
        %2357 = vmatprep.subr.bf16.mxu0 0
        %2358 = vmatpush1.bf16.xpose.msra.mxu0 0
        %2359 = vmatprep.subr.bf16.mxu0 0
        %2360 = vmatpush1.bf16.xpose.msra.mxu0 0
        %2361 = vmatprep.subr.bf16.mxu0 0
        %2362 = vmatpush1.bf16.xpose.msra.mxu0 0
        %2363 = vmatprep.subr.bf16.mxu0 0
        %2364 = vmatpush1.bf16.xpose.msra.mxu0 0
        %2365 = vmatprep.subr.bf16.mxu0 0
        %2366 = vmatpush1.bf16.xpose.msra.mxu0 0
        %2367 = vmatprep.subr.bf16.mxu0 0
        %2368 = vmatpush1.bf16.xpose.msra.mxu0 0
        %2369 = vmatprep.subr.bf16.mxu0 0
        %2370 = vmatpush1.bf16.xpose.msra.mxu0 0
        %2371 = vmatprep.subr.bf16.mxu0 0
        %2372 = vmatpush1.bf16.xpose.msra.mxu0 0
        %2373 = vmatprep.mubr.bf16.mxu0 0
        %2374 = vmatmul.mubr.bf16.gmra.mrb[0].mxu0 %v2336
        %v2375 = vpop.f32.mrb[0].mxu0
        %v2376 = vadd.f32 0.0, %v2375
        %v2377 = vpop.f32.mrb[0].mxu0
        %v2378 = vpop.f32.mrb[0].mxu0
        %v2379 = vadd.f32 0.0, %v2378
        %v2380 = vpop.f32.mrb[0].mxu0
        %2381 = vdwg.mxu0
        %v2383 = vsel %vm1535, %v1137, 0
        %v2386 = vsel %vm1535, %v1329, 0
        %2388 = vmatprep.subr.bf16.mxu0 0
        %2389 = vmatpush1.bf16.xpose.msra.mxu0 %v2386
        %2390 = vmatprep.subr.bf16.mxu0 0
        %2391 = vmatpush1.bf16.xpose.msra.mxu0 0
        %2392 = vmatprep.subr.bf16.mxu0 0
        %2393 = vmatpush1.bf16.xpose.msra.mxu0 0
        %2394 = vmatprep.subr.bf16.mxu0 0
        %2395 = vmatpush1.bf16.xpose.msra.mxu0 0
        %2396 = vmatprep.subr.bf16.mxu0 0
        %2397 = vmatpush1.bf16.xpose.msra.mxu0 0
        %2398 = vmatprep.subr.bf16.mxu0 0
        %2399 = vmatpush1.bf16.xpose.msra.mxu0 0
        %2400 = vmatprep.subr.bf16.mxu0 0
        %2401 = vmatpush1.bf16.xpose.msra.mxu0 0
        %2402 = vmatprep.subr.bf16.mxu0 0
        %2403 = vmatpush1.bf16.xpose.msra.mxu0 0
        %2404 = vmatprep.subr.bf16.mxu0 0
        %2405 = vmatpush1.bf16.xpose.msra.mxu0 0
        %2406 = vmatprep.subr.bf16.mxu0 0
        %2407 = vmatpush1.bf16.xpose.msra.mxu0 0
        %2408 = vmatprep.subr.bf16.mxu0 0
        %2409 = vmatpush1.bf16.xpose.msra.mxu0 0
        %2410 = vmatprep.subr.bf16.mxu0 0
        %2411 = vmatpush1.bf16.xpose.msra.mxu0 0
        %2412 = vmatprep.subr.bf16.mxu0 0
        %2413 = vmatpush1.bf16.xpose.msra.mxu0 0
        %2414 = vmatprep.subr.bf16.mxu0 0
        %2415 = vmatpush1.bf16.xpose.msra.mxu0 0
        %2416 = vmatprep.subr.bf16.mxu0 0
        %2417 = vmatpush1.bf16.xpose.msra.mxu0 0
        %2418 = vmatprep.subr.bf16.mxu0 0
        %2419 = vmatpush1.bf16.xpose.msra.mxu0 0
        %2420 = vmatprep.mubr.bf16.mxu0 0
        %2421 = vmatmul.mubr.bf16.gmra.mrb[0].mxu0 %v2383
        %v2422 = vpop.f32.mrb[0].mxu0
        %v2423 = vadd.f32 0.0, %v2422
        %v2424 = vpop.f32.mrb[0].mxu0
        %v2425 = vpop.f32.mrb[0].mxu0
        %v2426 = vadd.f32 0.0, %v2425
        %v2427 = vpop.f32.mrb[0].mxu0
        %2428 = vdwg.mxu0
        %v2430 = vsel %vm1535, %v1138, 0
        %v2433 = vsel %vm1535, %v1330, 0
        %2435 = vmatprep.subr.bf16.mxu0 0
        %2436 = vmatpush1.bf16.xpose.msra.mxu0 %v2433
        %2437 = vmatprep.subr.bf16.mxu0 0
        %2438 = vmatpush1.bf16.xpose.msra.mxu0 0
        %2439 = vmatprep.subr.bf16.mxu0 0
        %2440 = vmatpush1.bf16.xpose.msra.mxu0 0
        %2441 = vmatprep.subr.bf16.mxu0 0
        %2442 = vmatpush1.bf16.xpose.msra.mxu0 0
        %2443 = vmatprep.subr.bf16.mxu0 0
        %2444 = vmatpush1.bf16.xpose.msra.mxu0 0
        %2445 = vmatprep.subr.bf16.mxu0 0
        %2446 = vmatpush1.bf16.xpose.msra.mxu0 0
        %2447 = vmatprep.subr.bf16.mxu0 0
        %2448 = vmatpush1.bf16.xpose.msra.mxu0 0
        %2449 = vmatprep.subr.bf16.mxu0 0
        %2450 = vmatpush1.bf16.xpose.msra.mxu0 0
        %2451 = vmatprep.subr.bf16.mxu0 0
        %2452 = vmatpush1.bf16.xpose.msra.mxu0 0
        %2453 = vmatprep.subr.bf16.mxu0 0
        %2454 = vmatpush1.bf16.xpose.msra.mxu0 0
        %2455 = vmatprep.subr.bf16.mxu0 0
        %2456 = vmatpush1.bf16.xpose.msra.mxu0 0
        %2457 = vmatprep.subr.bf16.mxu0 0
        %2458 = vmatpush1.bf16.xpose.msra.mxu0 0
        %2459 = vmatprep.subr.bf16.mxu0 0
        %2460 = vmatpush1.bf16.xpose.msra.mxu0 0
        %2461 = vmatprep.subr.bf16.mxu0 0
        %2462 = vmatpush1.bf16.xpose.msra.mxu0 0
        %2463 = vmatprep.subr.bf16.mxu0 0
        %2464 = vmatpush1.bf16.xpose.msra.mxu0 0
        %2465 = vmatprep.subr.bf16.mxu0 0
        %2466 = vmatpush1.bf16.xpose.msra.mxu0 0
        %2467 = vmatprep.mubr.bf16.mxu0 0
        %2468 = vmatmul.mubr.bf16.gmra.mrb[0].mxu0 %v2430
        %v2469 = vpop.f32.mrb[0].mxu0
        %v2470 = vadd.f32 0.0, %v2469
        %v2471 = vpop.f32.mrb[0].mxu0
        %v2472 = vpop.f32.mrb[0].mxu0
        %v2473 = vadd.f32 0.0, %v2472
        %v2474 = vpop.f32.mrb[0].mxu0
        %2475 = vdwg.mxu0
        %v2477 = vsel %vm1535, %v1139, 0
        %v2480 = vsel %vm1535, %v1331, 0
        %2482 = vmatprep.subr.bf16.mxu0 0
        %2483 = vmatpush1.bf16.xpose.msra.mxu0 %v2480
        %2484 = vmatprep.subr.bf16.mxu0 0
        %2485 = vmatpush1.bf16.xpose.msra.mxu0 0
        %2486 = vmatprep.subr.bf16.mxu0 0
        %2487 = vmatpush1.bf16.xpose.msra.mxu0 0
        %2488 = vmatprep.subr.bf16.mxu0 0
        %2489 = vmatpush1.bf16.xpose.msra.mxu0 0
        %2490 = vmatprep.subr.bf16.mxu0 0
        %2491 = vmatpush1.bf16.xpose.msra.mxu0 0
        %2492 = vmatprep.subr.bf16.mxu0 0
        %2493 = vmatpush1.bf16.xpose.msra.mxu0 0
        %2494 = vmatprep.subr.bf16.mxu0 0
        %2495 = vmatpush1.bf16.xpose.msra.mxu0 0
        %2496 = vmatprep.subr.bf16.mxu0 0
        %2497 = vmatpush1.bf16.xpose.msra.mxu0 0
        %2498 = vmatprep.subr.bf16.mxu0 0
        %2499 = vmatpush1.bf16.xpose.msra.mxu0 0
        %2500 = vmatprep.subr.bf16.mxu0 0
        %2501 = vmatpush1.bf16.xpose.msra.mxu0 0
        %2502 = vmatprep.subr.bf16.mxu0 0
        %2503 = vmatpush1.bf16.xpose.msra.mxu0 0
        %2504 = vmatprep.subr.bf16.mxu0 0
        %2505 = vmatpush1.bf16.xpose.msra.mxu0 0
        %2506 = vmatprep.subr.bf16.mxu0 0
        %2507 = vmatpush1.bf16.xpose.msra.mxu0 0
        %2508 = vmatprep.subr.bf16.mxu0 0
        %2509 = vmatpush1.bf16.xpose.msra.mxu0 0
        %2510 = vmatprep.subr.bf16.mxu0 0
        %2511 = vmatpush1.bf16.xpose.msra.mxu0 0
        %2512 = vmatprep.subr.bf16.mxu0 0
        %2513 = vmatpush1.bf16.xpose.msra.mxu0 0
        %2514 = vmatprep.mubr.bf16.mxu0 0
        %2515 = vmatmul.mubr.bf16.gmra.mrb[0].mxu0 %v2477
        %v2516 = vpop.f32.mrb[0].mxu0
        %v2517 = vadd.f32 0.0, %v2516
        %v2518 = vpop.f32.mrb[0].mxu0
        %v2519 = vpop.f32.mrb[0].mxu0
        %v2520 = vadd.f32 0.0, %v2519
        %v2521 = vpop.f32.mrb[0].mxu0
        %2522 = vdwg.mxu0
        %v2524 = vsel %vm1535, %v1140, 0
        %v2527 = vsel %vm1535, %v1332, 0
        %2529 = vmatprep.subr.bf16.mxu0 0
        %2530 = vmatpush1.bf16.xpose.msra.mxu0 %v2527
        %2531 = vmatprep.subr.bf16.mxu0 0
        %2532 = vmatpush1.bf16.xpose.msra.mxu0 0
        %2533 = vmatprep.subr.bf16.mxu0 0
        %2534 = vmatpush1.bf16.xpose.msra.mxu0 0
        %2535 = vmatprep.subr.bf16.mxu0 0
        %2536 = vmatpush1.bf16.xpose.msra.mxu0 0
        %2537 = vmatprep.subr.bf16.mxu0 0
        %2538 = vmatpush1.bf16.xpose.msra.mxu0 0
        %2539 = vmatprep.subr.bf16.mxu0 0
        %2540 = vmatpush1.bf16.xpose.msra.mxu0 0
        %2541 = vmatprep.subr.bf16.mxu0 0
        %2542 = vmatpush1.bf16.xpose.msra.mxu0 0
        %2543 = vmatprep.subr.bf16.mxu0 0
        %2544 = vmatpush1.bf16.xpose.msra.mxu0 0
        %2545 = vmatprep.subr.bf16.mxu0 0
        %2546 = vmatpush1.bf16.xpose.msra.mxu0 0
        %2547 = vmatprep.subr.bf16.mxu0 0
        %2548 = vmatpush1.bf16.xpose.msra.mxu0 0
        %2549 = vmatprep.subr.bf16.mxu0 0
        %2550 = vmatpush1.bf16.xpose.msra.mxu0 0
        %2551 = vmatprep.subr.bf16.mxu0 0
        %2552 = vmatpush1.bf16.xpose.msra.mxu0 0
        %2553 = vmatprep.subr.bf16.mxu0 0
        %2554 = vmatpush1.bf16.xpose.msra.mxu0 0
        %2555 = vmatprep.subr.bf16.mxu0 0
        %2556 = vmatpush1.bf16.xpose.msra.mxu0 0
        %2557 = vmatprep.subr.bf16.mxu0 0
        %2558 = vmatpush1.bf16.xpose.msra.mxu0 0
        %2559 = vmatprep.subr.bf16.mxu0 0
        %2560 = vmatpush1.bf16.xpose.msra.mxu0 0
        %2561 = vmatprep.mubr.bf16.mxu0 0
        %2562 = vmatmul.mubr.bf16.gmra.mrb[0].mxu0 %v2524
        %v2563 = vpop.f32.mrb[0].mxu0
        %v2564 = vadd.f32 0.0, %v2563
        %v2565 = vpop.f32.mrb[0].mxu0
        %v2566 = vpop.f32.mrb[0].mxu0
        %v2567 = vadd.f32 0.0, %v2566
        %v2568 = vpop.f32.mrb[0].mxu0
        %2569 = vdwg.mxu0
        %v2571 = vsel %vm1535, %v1141, 0
        %v2574 = vsel %vm1535, %v1333, 0
        %2576 = vmatprep.subr.bf16.mxu0 0
        %2577 = vmatpush1.bf16.xpose.msra.mxu0 %v2574
        %2578 = vmatprep.subr.bf16.mxu0 0
        %2579 = vmatpush1.bf16.xpose.msra.mxu0 0
        %2580 = vmatprep.subr.bf16.mxu0 0
        %2581 = vmatpush1.bf16.xpose.msra.mxu0 0
        %2582 = vmatprep.subr.bf16.mxu0 0
        %2583 = vmatpush1.bf16.xpose.msra.mxu0 0
        %2584 = vmatprep.subr.bf16.mxu0 0
        %2585 = vmatpush1.bf16.xpose.msra.mxu0 0
        %2586 = vmatprep.subr.bf16.mxu0 0
        %2587 = vmatpush1.bf16.xpose.msra.mxu0 0
        %2588 = vmatprep.subr.bf16.mxu0 0
        %2589 = vmatpush1.bf16.xpose.msra.mxu0 0
        %2590 = vmatprep.subr.bf16.mxu0 0
        %2591 = vmatpush1.bf16.xpose.msra.mxu0 0
        %2592 = vmatprep.subr.bf16.mxu0 0
        %2593 = vmatpush1.bf16.xpose.msra.mxu0 0
        %2594 = vmatprep.subr.bf16.mxu0 0
        %2595 = vmatpush1.bf16.xpose.msra.mxu0 0
        %2596 = vmatprep.subr.bf16.mxu0 0
        %2597 = vmatpush1.bf16.xpose.msra.mxu0 0
        %2598 = vmatprep.subr.bf16.mxu0 0
        %2599 = vmatpush1.bf16.xpose.msra.mxu0 0
        %2600 = vmatprep.subr.bf16.mxu0 0
        %2601 = vmatpush1.bf16.xpose.msra.mxu0 0
        %2602 = vmatprep.subr.bf16.mxu0 0
        %2603 = vmatpush1.bf16.xpose.msra.mxu0 0
        %2604 = vmatprep.subr.bf16.mxu0 0
        %2605 = vmatpush1.bf16.xpose.msra.mxu0 0
        %2606 = vmatprep.subr.bf16.mxu0 0
        %2607 = vmatpush1.bf16.xpose.msra.mxu0 0
        %2608 = vmatprep.mubr.bf16.mxu0 0
        %2609 = vmatmul.mubr.bf16.gmra.mrb[0].mxu0 %v2571
        %v2610 = vpop.f32.mrb[0].mxu0
        %v2611 = vadd.f32 0.0, %v2610
        %v2612 = vpop.f32.mrb[0].mxu0
        %v2613 = vpop.f32.mrb[0].mxu0
        %v2614 = vadd.f32 0.0, %v2613
        %v2615 = vpop.f32.mrb[0].mxu0
        %2616 = vdwg.mxu0
        %v2618 = vsel %vm1535, %v1142, 0
        %v2621 = vsel %vm1535, %v1334, 0
        %2623 = vmatprep.subr.bf16.mxu0 0
        %2624 = vmatpush1.bf16.xpose.msra.mxu0 %v2621
        %2625 = vmatprep.subr.bf16.mxu0 0
        %2626 = vmatpush1.bf16.xpose.msra.mxu0 0
        %2627 = vmatprep.subr.bf16.mxu0 0
        %2628 = vmatpush1.bf16.xpose.msra.mxu0 0
        %2629 = vmatprep.subr.bf16.mxu0 0
        %2630 = vmatpush1.bf16.xpose.msra.mxu0 0
        %2631 = vmatprep.subr.bf16.mxu0 0
        %2632 = vmatpush1.bf16.xpose.msra.mxu0 0
        %2633 = vmatprep.subr.bf16.mxu0 0
        %2634 = vmatpush1.bf16.xpose.msra.mxu0 0
        %2635 = vmatprep.subr.bf16.mxu0 0
        %2636 = vmatpush1.bf16.xpose.msra.mxu0 0
        %2637 = vmatprep.subr.bf16.mxu0 0
        %2638 = vmatpush1.bf16.xpose.msra.mxu0 0
        %2639 = vmatprep.subr.bf16.mxu0 0
        %2640 = vmatpush1.bf16.xpose.msra.mxu0 0
        %2641 = vmatprep.subr.bf16.mxu0 0
        %2642 = vmatpush1.bf16.xpose.msra.mxu0 0
        %2643 = vmatprep.subr.bf16.mxu0 0
        %2644 = vmatpush1.bf16.xpose.msra.mxu0 0
        %2645 = vmatprep.subr.bf16.mxu0 0
        %2646 = vmatpush1.bf16.xpose.msra.mxu0 0
        %2647 = vmatprep.subr.bf16.mxu0 0
        %2648 = vmatpush1.bf16.xpose.msra.mxu0 0
        %2649 = vmatprep.subr.bf16.mxu0 0
        %2650 = vmatpush1.bf16.xpose.msra.mxu0 0
        %2651 = vmatprep.subr.bf16.mxu0 0
        %2652 = vmatpush1.bf16.xpose.msra.mxu0 0
        %2653 = vmatprep.subr.bf16.mxu0 0
        %2654 = vmatpush1.bf16.xpose.msra.mxu0 0
        %2655 = vmatprep.mubr.bf16.mxu0 0
        %2656 = vmatmul.mubr.bf16.gmra.mrb[0].mxu0 %v2618
        %v2657 = vpop.f32.mrb[0].mxu0
        %v2658 = vadd.f32 0.0, %v2657
        %v2659 = vpop.f32.mrb[0].mxu0
        %v2660 = vpop.f32.mrb[0].mxu0
        %v2661 = vadd.f32 0.0, %v2660
        %v2662 = vpop.f32.mrb[0].mxu0
        %2663 = vdwg.mxu0
        %v2665 = vsel %vm1535, %v1143, 0
        %v2668 = vsel %vm1535, %v1335, 0
        %2670 = vmatprep.subr.bf16.mxu0 0
        %2671 = vmatpush1.bf16.xpose.msra.mxu0 %v2668
        %2672 = vmatprep.subr.bf16.mxu0 0
        %2673 = vmatpush1.bf16.xpose.msra.mxu0 0
        %2674 = vmatprep.subr.bf16.mxu0 0
        %2675 = vmatpush1.bf16.xpose.msra.mxu0 0
        %2676 = vmatprep.subr.bf16.mxu0 0
        %2677 = vmatpush1.bf16.xpose.msra.mxu0 0
        %2678 = vmatprep.subr.bf16.mxu0 0
        %2679 = vmatpush1.bf16.xpose.msra.mxu0 0
        %2680 = vmatprep.subr.bf16.mxu0 0
        %2681 = vmatpush1.bf16.xpose.msra.mxu0 0
        %2682 = vmatprep.subr.bf16.mxu0 0
        %2683 = vmatpush1.bf16.xpose.msra.mxu0 0
        %2684 = vmatprep.subr.bf16.mxu0 0
        %2685 = vmatpush1.bf16.xpose.msra.mxu0 0
        %2686 = vmatprep.subr.bf16.mxu0 0
        %2687 = vmatpush1.bf16.xpose.msra.mxu0 0
        %2688 = vmatprep.subr.bf16.mxu0 0
        %2689 = vmatpush1.bf16.xpose.msra.mxu0 0
        %2690 = vmatprep.subr.bf16.mxu0 0
        %2691 = vmatpush1.bf16.xpose.msra.mxu0 0
        %2692 = vmatprep.subr.bf16.mxu0 0
        %2693 = vmatpush1.bf16.xpose.msra.mxu0 0
        %2694 = vmatprep.subr.bf16.mxu0 0
        %2695 = vmatpush1.bf16.xpose.msra.mxu0 0
        %2696 = vmatprep.subr.bf16.mxu0 0
        %2697 = vmatpush1.bf16.xpose.msra.mxu0 0
        %2698 = vmatprep.subr.bf16.mxu0 0
        %2699 = vmatpush1.bf16.xpose.msra.mxu0 0
        %2700 = vmatprep.subr.bf16.mxu0 0
        %2701 = vmatpush1.bf16.xpose.msra.mxu0 0
        %2702 = vmatprep.mubr.bf16.mxu0 0
        %2703 = vmatmul.mubr.bf16.gmra.mrb[0].mxu0 %v2665
        %v2704 = vpop.f32.mrb[0].mxu0
        %v2705 = vadd.f32 0.0, %v2704
        %v2706 = vpop.f32.mrb[0].mxu0
        %v2707 = vpop.f32.mrb[0].mxu0
        %v2708 = vadd.f32 0.0, %v2707
        %v2709 = vpop.f32.mrb[0].mxu0
        %2710 = vdwg.mxu0
        %v2712 = vsel %vm1535, %v1144, 0
        %v2715 = vsel %vm1535, %v1336, 0
        %2717 = vmatprep.subr.bf16.mxu0 0
        %2718 = vmatpush1.bf16.xpose.msra.mxu0 %v2715
        %2719 = vmatprep.subr.bf16.mxu0 0
        %2720 = vmatpush1.bf16.xpose.msra.mxu0 0
        %2721 = vmatprep.subr.bf16.mxu0 0
        %2722 = vmatpush1.bf16.xpose.msra.mxu0 0
        %2723 = vmatprep.subr.bf16.mxu0 0
        %2724 = vmatpush1.bf16.xpose.msra.mxu0 0
        %2725 = vmatprep.subr.bf16.mxu0 0
        %2726 = vmatpush1.bf16.xpose.msra.mxu0 0
        %2727 = vmatprep.subr.bf16.mxu0 0
        %2728 = vmatpush1.bf16.xpose.msra.mxu0 0
        %2729 = vmatprep.subr.bf16.mxu0 0
        %2730 = vmatpush1.bf16.xpose.msra.mxu0 0
        %2731 = vmatprep.subr.bf16.mxu0 0
        %2732 = vmatpush1.bf16.xpose.msra.mxu0 0
        %2733 = vmatprep.subr.bf16.mxu0 0
        %2734 = vmatpush1.bf16.xpose.msra.mxu0 0
        %2735 = vmatprep.subr.bf16.mxu0 0
        %2736 = vmatpush1.bf16.xpose.msra.mxu0 0
        %2737 = vmatprep.subr.bf16.mxu0 0
        %2738 = vmatpush1.bf16.xpose.msra.mxu0 0
        %2739 = vmatprep.subr.bf16.mxu0 0
        %2740 = vmatpush1.bf16.xpose.msra.mxu0 0
        %2741 = vmatprep.subr.bf16.mxu0 0
        %2742 = vmatpush1.bf16.xpose.msra.mxu0 0
        %2743 = vmatprep.subr.bf16.mxu0 0
        %2744 = vmatpush1.bf16.xpose.msra.mxu0 0
        %2745 = vmatprep.subr.bf16.mxu0 0
        %2746 = vmatpush1.bf16.xpose.msra.mxu0 0
        %2747 = vmatprep.subr.bf16.mxu0 0
        %2748 = vmatpush1.bf16.xpose.msra.mxu0 0
        %2749 = vmatprep.mubr.bf16.mxu0 0
        %2750 = vmatmul.mubr.bf16.gmra.mrb[0].mxu0 %v2712
        %v2751 = vpop.f32.mrb[0].mxu0
        %v2752 = vadd.f32 0.0, %v2751
        %v2753 = vpop.f32.mrb[0].mxu0
        %v2754 = vpop.f32.mrb[0].mxu0
        %v2755 = vadd.f32 0.0, %v2754
        %v2756 = vpop.f32.mrb[0].mxu0
        %2757 = vdwg.mxu0
        %v2759 = vsel %vm1535, %v1145, 0
        %v2762 = vsel %vm1535, %v1337, 0
        %2764 = vmatprep.subr.bf16.mxu0 0
        %2765 = vmatpush1.bf16.xpose.msra.mxu0 %v2762
        %2766 = vmatprep.subr.bf16.mxu0 0
        %2767 = vmatpush1.bf16.xpose.msra.mxu0 0
        %2768 = vmatprep.subr.bf16.mxu0 0
        %2769 = vmatpush1.bf16.xpose.msra.mxu0 0
        %2770 = vmatprep.subr.bf16.mxu0 0
        %2771 = vmatpush1.bf16.xpose.msra.mxu0 0
        %2772 = vmatprep.subr.bf16.mxu0 0
        %2773 = vmatpush1.bf16.xpose.msra.mxu0 0
        %2774 = vmatprep.subr.bf16.mxu0 0
        %2775 = vmatpush1.bf16.xpose.msra.mxu0 0
        %2776 = vmatprep.subr.bf16.mxu0 0
        %2777 = vmatpush1.bf16.xpose.msra.mxu0 0
        %2778 = vmatprep.subr.bf16.mxu0 0
        %2779 = vmatpush1.bf16.xpose.msra.mxu0 0
        %2780 = vmatprep.subr.bf16.mxu0 0
        %2781 = vmatpush1.bf16.xpose.msra.mxu0 0
        %2782 = vmatprep.subr.bf16.mxu0 0
        %2783 = vmatpush1.bf16.xpose.msra.mxu0 0
        %2784 = vmatprep.subr.bf16.mxu0 0
        %2785 = vmatpush1.bf16.xpose.msra.mxu0 0
        %2786 = vmatprep.subr.bf16.mxu0 0
        %2787 = vmatpush1.bf16.xpose.msra.mxu0 0
        %2788 = vmatprep.subr.bf16.mxu0 0
        %2789 = vmatpush1.bf16.xpose.msra.mxu0 0
        %2790 = vmatprep.subr.bf16.mxu0 0
        %2791 = vmatpush1.bf16.xpose.msra.mxu0 0
        %2792 = vmatprep.subr.bf16.mxu0 0
        %2793 = vmatpush1.bf16.xpose.msra.mxu0 0
        %2794 = vmatprep.subr.bf16.mxu0 0
        %2795 = vmatpush1.bf16.xpose.msra.mxu0 0
        %2796 = vmatprep.mubr.bf16.mxu0 0
        %2797 = vmatmul.mubr.bf16.gmra.mrb[0].mxu0 %v2759
        %v2798 = vpop.f32.mrb[0].mxu0
        %v2799 = vadd.f32 0.0, %v2798
        %v2800 = vpop.f32.mrb[0].mxu0
        %v2801 = vpop.f32.mrb[0].mxu0
        %v2802 = vadd.f32 0.0, %v2801
        %v2803 = vpop.f32.mrb[0].mxu0
        %2804 = vdwg.mxu0
        %v2806 = vsel %vm1535, %v1146, 0
        %v2809 = vsel %vm1535, %v1338, 0
        %2811 = vmatprep.subr.bf16.mxu0 0
        %2812 = vmatpush1.bf16.xpose.msra.mxu0 %v2809
        %2813 = vmatprep.subr.bf16.mxu0 0
        %2814 = vmatpush1.bf16.xpose.msra.mxu0 0
        %2815 = vmatprep.subr.bf16.mxu0 0
        %2816 = vmatpush1.bf16.xpose.msra.mxu0 0
        %2817 = vmatprep.subr.bf16.mxu0 0
        %2818 = vmatpush1.bf16.xpose.msra.mxu0 0
        %2819 = vmatprep.subr.bf16.mxu0 0
        %2820 = vmatpush1.bf16.xpose.msra.mxu0 0
        %2821 = vmatprep.subr.bf16.mxu0 0
        %2822 = vmatpush1.bf16.xpose.msra.mxu0 0
        %2823 = vmatprep.subr.bf16.mxu0 0
        %2824 = vmatpush1.bf16.xpose.msra.mxu0 0
        %2825 = vmatprep.subr.bf16.mxu0 0
        %2826 = vmatpush1.bf16.xpose.msra.mxu0 0
        %2827 = vmatprep.subr.bf16.mxu0 0
        %2828 = vmatpush1.bf16.xpose.msra.mxu0 0
        %2829 = vmatprep.subr.bf16.mxu0 0
        %2830 = vmatpush1.bf16.xpose.msra.mxu0 0
        %2831 = vmatprep.subr.bf16.mxu0 0
        %2832 = vmatpush1.bf16.xpose.msra.mxu0 0
        %2833 = vmatprep.subr.bf16.mxu0 0
        %2834 = vmatpush1.bf16.xpose.msra.mxu0 0
        %2835 = vmatprep.subr.bf16.mxu0 0
        %2836 = vmatpush1.bf16.xpose.msra.mxu0 0
        %2837 = vmatprep.subr.bf16.mxu0 0
        %2838 = vmatpush1.bf16.xpose.msra.mxu0 0
        %2839 = vmatprep.subr.bf16.mxu0 0
        %2840 = vmatpush1.bf16.xpose.msra.mxu0 0
        %2841 = vmatprep.subr.bf16.mxu0 0
        %2842 = vmatpush1.bf16.xpose.msra.mxu0 0
        %2843 = vmatprep.mubr.bf16.mxu0 0
        %2844 = vmatmul.mubr.bf16.gmra.mrb[0].mxu0 %v2806
        %v2845 = vpop.f32.mrb[0].mxu0
        %v2846 = vadd.f32 0.0, %v2845
        %v2847 = vpop.f32.mrb[0].mxu0
        %v2848 = vpop.f32.mrb[0].mxu0
        %v2849 = vadd.f32 0.0, %v2848
        %v2850 = vpop.f32.mrb[0].mxu0
        %2851 = vdwg.mxu0
        %v2853 = vsel %vm1535, %v1147, 0
        %v2856 = vsel %vm1535, %v1339, 0
        %2858 = vmatprep.subr.bf16.mxu0 0
        %2859 = vmatpush1.bf16.xpose.msra.mxu0 %v2856
        %2860 = vmatprep.subr.bf16.mxu0 0
        %2861 = vmatpush1.bf16.xpose.msra.mxu0 0
        %2862 = vmatprep.subr.bf16.mxu0 0
        %2863 = vmatpush1.bf16.xpose.msra.mxu0 0
        %2864 = vmatprep.subr.bf16.mxu0 0
        %2865 = vmatpush1.bf16.xpose.msra.mxu0 0
        %2866 = vmatprep.subr.bf16.mxu0 0
        %2867 = vmatpush1.bf16.xpose.msra.mxu0 0
        %2868 = vmatprep.subr.bf16.mxu0 0
        %2869 = vmatpush1.bf16.xpose.msra.mxu0 0
        %2870 = vmatprep.subr.bf16.mxu0 0
        %2871 = vmatpush1.bf16.xpose.msra.mxu0 0
        %2872 = vmatprep.subr.bf16.mxu0 0
        %2873 = vmatpush1.bf16.xpose.msra.mxu0 0
        %2874 = vmatprep.subr.bf16.mxu0 0
        %2875 = vmatpush1.bf16.xpose.msra.mxu0 0
        %2876 = vmatprep.subr.bf16.mxu0 0
        %2877 = vmatpush1.bf16.xpose.msra.mxu0 0
        %2878 = vmatprep.subr.bf16.mxu0 0
        %2879 = vmatpush1.bf16.xpose.msra.mxu0 0
        %2880 = vmatprep.subr.bf16.mxu0 0
        %2881 = vmatpush1.bf16.xpose.msra.mxu0 0
        %2882 = vmatprep.subr.bf16.mxu0 0
        %2883 = vmatpush1.bf16.xpose.msra.mxu0 0
        %2884 = vmatprep.subr.bf16.mxu0 0
        %2885 = vmatpush1.bf16.xpose.msra.mxu0 0
        %2886 = vmatprep.subr.bf16.mxu0 0
        %2887 = vmatpush1.bf16.xpose.msra.mxu0 0
        %2888 = vmatprep.subr.bf16.mxu0 0
        %2889 = vmatpush1.bf16.xpose.msra.mxu0 0
        %2890 = vmatprep.mubr.bf16.mxu0 0
        %2891 = vmatmul.mubr.bf16.gmra.mrb[0].mxu0 %v2853
        %v2892 = vpop.f32.mrb[0].mxu0
        %v2893 = vadd.f32 0.0, %v2892
        %v2894 = vpop.f32.mrb[0].mxu0
        %v2895 = vpop.f32.mrb[0].mxu0
        %v2896 = vadd.f32 0.0, %v2895
        %v2897 = vpop.f32.mrb[0].mxu0
        %2898 = vdwg.mxu0
        %v2900 = vsel %vm1535, %v1148, 0
        %v2903 = vsel %vm1535, %v1340, 0
        %2905 = vmatprep.subr.bf16.mxu0 0
        %2906 = vmatpush1.bf16.xpose.msra.mxu0 %v2903
        %2907 = vmatprep.subr.bf16.mxu0 0
        %2908 = vmatpush1.bf16.xpose.msra.mxu0 0
        %2909 = vmatprep.subr.bf16.mxu0 0
        %2910 = vmatpush1.bf16.xpose.msra.mxu0 0
        %2911 = vmatprep.subr.bf16.mxu0 0
        %2912 = vmatpush1.bf16.xpose.msra.mxu0 0
        %2913 = vmatprep.subr.bf16.mxu0 0
        %2914 = vmatpush1.bf16.xpose.msra.mxu0 0
        %2915 = vmatprep.subr.bf16.mxu0 0
        %2916 = vmatpush1.bf16.xpose.msra.mxu0 0
        %2917 = vmatprep.subr.bf16.mxu0 0
        %2918 = vmatpush1.bf16.xpose.msra.mxu0 0
        %2919 = vmatprep.subr.bf16.mxu0 0
        %2920 = vmatpush1.bf16.xpose.msra.mxu0 0
        %2921 = vmatprep.subr.bf16.mxu0 0
        %2922 = vmatpush1.bf16.xpose.msra.mxu0 0
        %2923 = vmatprep.subr.bf16.mxu0 0
        %2924 = vmatpush1.bf16.xpose.msra.mxu0 0
        %2925 = vmatprep.subr.bf16.mxu0 0
        %2926 = vmatpush1.bf16.xpose.msra.mxu0 0
        %2927 = vmatprep.subr.bf16.mxu0 0
        %2928 = vmatpush1.bf16.xpose.msra.mxu0 0
        %2929 = vmatprep.subr.bf16.mxu0 0
        %2930 = vmatpush1.bf16.xpose.msra.mxu0 0
        %2931 = vmatprep.subr.bf16.mxu0 0
        %2932 = vmatpush1.bf16.xpose.msra.mxu0 0
        %2933 = vmatprep.subr.bf16.mxu0 0
        %2934 = vmatpush1.bf16.xpose.msra.mxu0 0
        %2935 = vmatprep.subr.bf16.mxu0 0
        %2936 = vmatpush1.bf16.xpose.msra.mxu0 0
        %2937 = vmatprep.mubr.bf16.mxu0 0
        %2938 = vmatmul.mubr.bf16.gmra.mrb[0].mxu0 %v2900
        %v2939 = vpop.f32.mrb[0].mxu0
        %v2940 = vadd.f32 0.0, %v2939
        %v2941 = vpop.f32.mrb[0].mxu0
        %v2942 = vpop.f32.mrb[0].mxu0
        %v2943 = vadd.f32 0.0, %v2942
        %v2944 = vpop.f32.mrb[0].mxu0
        %2945 = vdwg.mxu0
        %v2947 = vsel %vm1535, %v1149, 0
        %v2950 = vsel %vm1535, %v1341, 0
        %2952 = vmatprep.subr.bf16.mxu0 0
        %2953 = vmatpush1.bf16.xpose.msra.mxu0 %v2950
        %2954 = vmatprep.subr.bf16.mxu0 0
        %2955 = vmatpush1.bf16.xpose.msra.mxu0 0
        %2956 = vmatprep.subr.bf16.mxu0 0
        %2957 = vmatpush1.bf16.xpose.msra.mxu0 0
        %2958 = vmatprep.subr.bf16.mxu0 0
        %2959 = vmatpush1.bf16.xpose.msra.mxu0 0
        %2960 = vmatprep.subr.bf16.mxu0 0
        %2961 = vmatpush1.bf16.xpose.msra.mxu0 0
        %2962 = vmatprep.subr.bf16.mxu0 0
        %2963 = vmatpush1.bf16.xpose.msra.mxu0 0
        %2964 = vmatprep.subr.bf16.mxu0 0
        %2965 = vmatpush1.bf16.xpose.msra.mxu0 0
        %2966 = vmatprep.subr.bf16.mxu0 0
        %2967 = vmatpush1.bf16.xpose.msra.mxu0 0
        %2968 = vmatprep.subr.bf16.mxu0 0
        %2969 = vmatpush1.bf16.xpose.msra.mxu0 0
        %2970 = vmatprep.subr.bf16.mxu0 0
        %2971 = vmatpush1.bf16.xpose.msra.mxu0 0
        %2972 = vmatprep.subr.bf16.mxu0 0
        %2973 = vmatpush1.bf16.xpose.msra.mxu0 0
        %2974 = vmatprep.subr.bf16.mxu0 0
        %2975 = vmatpush1.bf16.xpose.msra.mxu0 0
        %2976 = vmatprep.subr.bf16.mxu0 0
        %2977 = vmatpush1.bf16.xpose.msra.mxu0 0
        %2978 = vmatprep.subr.bf16.mxu0 0
        %2979 = vmatpush1.bf16.xpose.msra.mxu0 0
        %2980 = vmatprep.subr.bf16.mxu0 0
        %2981 = vmatpush1.bf16.xpose.msra.mxu0 0
        %2982 = vmatprep.subr.bf16.mxu0 0
        %2983 = vmatpush1.bf16.xpose.msra.mxu0 0
        %2984 = vmatprep.mubr.bf16.mxu0 0
        %2985 = vmatmul.mubr.bf16.gmra.mrb[0].mxu0 %v2947
        %v2986 = vpop.f32.mrb[0].mxu0
        %v2987 = vadd.f32 0.0, %v2986
        %v2988 = vpop.f32.mrb[0].mxu0
        %v2989 = vpop.f32.mrb[0].mxu0
        %v2990 = vadd.f32 0.0, %v2989
        %v2991 = vpop.f32.mrb[0].mxu0
        %2992 = vdwg.mxu0
        %v2994 = vsel %vm1535, %v1150, 0
        %v2997 = vsel %vm1535, %v1342, 0
        %2999 = vmatprep.subr.bf16.mxu0 0
        %3000 = vmatpush1.bf16.xpose.msra.mxu0 %v2997
        %3001 = vmatprep.subr.bf16.mxu0 0
        %3002 = vmatpush1.bf16.xpose.msra.mxu0 0
        %3003 = vmatprep.subr.bf16.mxu0 0
        %3004 = vmatpush1.bf16.xpose.msra.mxu0 0
        %3005 = vmatprep.subr.bf16.mxu0 0
        %3006 = vmatpush1.bf16.xpose.msra.mxu0 0
        %3007 = vmatprep.subr.bf16.mxu0 0
        %3008 = vmatpush1.bf16.xpose.msra.mxu0 0
        %3009 = vmatprep.subr.bf16.mxu0 0
        %3010 = vmatpush1.bf16.xpose.msra.mxu0 0
        %3011 = vmatprep.subr.bf16.mxu0 0
        %3012 = vmatpush1.bf16.xpose.msra.mxu0 0
        %3013 = vmatprep.subr.bf16.mxu0 0
        %3014 = vmatpush1.bf16.xpose.msra.mxu0 0
        %3015 = vmatprep.subr.bf16.mxu0 0
        %3016 = vmatpush1.bf16.xpose.msra.mxu0 0
        %3017 = vmatprep.subr.bf16.mxu0 0
        %3018 = vmatpush1.bf16.xpose.msra.mxu0 0
        %3019 = vmatprep.subr.bf16.mxu0 0
        %3020 = vmatpush1.bf16.xpose.msra.mxu0 0
        %3021 = vmatprep.subr.bf16.mxu0 0
        %3022 = vmatpush1.bf16.xpose.msra.mxu0 0
        %3023 = vmatprep.subr.bf16.mxu0 0
        %3024 = vmatpush1.bf16.xpose.msra.mxu0 0
        %3025 = vmatprep.subr.bf16.mxu0 0
        %3026 = vmatpush1.bf16.xpose.msra.mxu0 0
        %3027 = vmatprep.subr.bf16.mxu0 0
        %3028 = vmatpush1.bf16.xpose.msra.mxu0 0
        %3029 = vmatprep.subr.bf16.mxu0 0
        %3030 = vmatpush1.bf16.xpose.msra.mxu0 0
        %3031 = vmatprep.mubr.bf16.mxu0 0
        %3032 = vmatmul.mubr.bf16.gmra.mrb[0].mxu0 %v2994
        %v3033 = vpop.f32.mrb[0].mxu0
        %v3034 = vadd.f32 0.0, %v3033
        %v3035 = vpop.f32.mrb[0].mxu0
        %v3036 = vpop.f32.mrb[0].mxu0
        %v3037 = vadd.f32 0.0, %v3036
        %v3038 = vpop.f32.mrb[0].mxu0
        %3039 = vdwg.mxu0
        %vm3040 = vcmask 130048
        %v3041 = vsel %vm3040, %v1577, -inf
        %3042 = vmax.xlane.f32.xlu0 %v3041
        %v3043 = vpop.xlane.xlu0 %3042
        %v3044 = vsel %vm3040, %v1580, -inf
        %3045 = vmax.xlane.f32.xlu0 %v3044
        %v3046 = vpop.xlane.xlu0 %3045
        %v3047 = vsel %vm3040, %v1624, -inf
        %3048 = vmax.xlane.f32.xlu0 %v3047
        %v3049 = vpop.xlane.xlu0 %3048
        %v3050 = vsel %vm3040, %v1627, -inf
        %3051 = vmax.xlane.f32.xlu0 %v3050
        %v3052 = vpop.xlane.xlu0 %3051
        %v3053 = vsel %vm3040, %v1671, -inf
        %3054 = vmax.xlane.f32.xlu0 %v3053
        %v3055 = vpop.xlane.xlu0 %3054
        %v3056 = vsel %vm3040, %v1674, -inf
        %3057 = vmax.xlane.f32.xlu0 %v3056
        %v3058 = vpop.xlane.xlu0 %3057
        %v3059 = vsel %vm3040, %v1718, -inf
        %3060 = vmax.xlane.f32.xlu0 %v3059
        %v3061 = vpop.xlane.xlu0 %3060
        %v3062 = vsel %vm3040, %v1721, -inf
        %3063 = vmax.xlane.f32.xlu0 %v3062
        %v3064 = vpop.xlane.xlu0 %3063
        %v3065 = vsel %vm3040, %v1765, -inf
        %3066 = vmax.xlane.f32.xlu0 %v3065
        %v3067 = vpop.xlane.xlu0 %3066
        %v3068 = vsel %vm3040, %v1768, -inf
        %3069 = vmax.xlane.f32.xlu0 %v3068
        %v3070 = vpop.xlane.xlu0 %3069
        %v3071 = vsel %vm3040, %v1812, -inf
        %3072 = vmax.xlane.f32.xlu0 %v3071
        %v3073 = vpop.xlane.xlu0 %3072
        %v3074 = vsel %vm3040, %v1815, -inf
        %3075 = vmax.xlane.f32.xlu0 %v3074
        %v3076 = vpop.xlane.xlu0 %3075
        %v3077 = vsel %vm3040, %v1859, -inf
        %3078 = vmax.xlane.f32.xlu0 %v3077
        %v3079 = vpop.xlane.xlu0 %3078
        %v3080 = vsel %vm3040, %v1862, -inf
        %3081 = vmax.xlane.f32.xlu0 %v3080
        %v3082 = vpop.xlane.xlu0 %3081
        %v3083 = vsel %vm3040, %v1906, -inf
        %3084 = vmax.xlane.f32.xlu0 %v3083
        %v3085 = vpop.xlane.xlu0 %3084
        %v3086 = vsel %vm3040, %v1909, -inf
        %3087 = vmax.xlane.f32.xlu0 %v3086
        %v3088 = vpop.xlane.xlu0 %3087
        %v3089 = vsel %vm3040, %v1953, -inf
        %3090 = vmax.xlane.f32.xlu0 %v3089
        %v3091 = vpop.xlane.xlu0 %3090
        %v3092 = vsel %vm3040, %v1956, -inf
        %3093 = vmax.xlane.f32.xlu0 %v3092
        %v3094 = vpop.xlane.xlu0 %3093
        %v3095 = vsel %vm3040, %v2000, -inf
        %3096 = vmax.xlane.f32.xlu0 %v3095
        %v3097 = vpop.xlane.xlu0 %3096
        %v3098 = vsel %vm3040, %v2003, -inf
        %3099 = vmax.xlane.f32.xlu0 %v3098
        %v3100 = vpop.xlane.xlu0 %3099
        %v3101 = vsel %vm3040, %v2047, -inf
        %3102 = vmax.xlane.f32.xlu0 %v3101
        %v3103 = vpop.xlane.xlu0 %3102
        %v3104 = vsel %vm3040, %v2050, -inf
        %3105 = vmax.xlane.f32.xlu0 %v3104
        %v3106 = vpop.xlane.xlu0 %3105
        %v3107 = vsel %vm3040, %v2094, -inf
        %3108 = vmax.xlane.f32.xlu0 %v3107
        %v3109 = vpop.xlane.xlu0 %3108
        %v3110 = vsel %vm3040, %v2097, -inf
        %3111 = vmax.xlane.f32.xlu0 %v3110
        %v3112 = vpop.xlane.xlu0 %3111
        %v3113 = vsel %vm3040, %v2141, -inf
        %3114 = vmax.xlane.f32.xlu0 %v3113
        %v3115 = vpop.xlane.xlu0 %3114
        %v3116 = vsel %vm3040, %v2144, -inf
        %3117 = vmax.xlane.f32.xlu0 %v3116
        %v3118 = vpop.xlane.xlu0 %3117
        %v3119 = vsel %vm3040, %v2188, -inf
        %3120 = vmax.xlane.f32.xlu0 %v3119
        %v3121 = vpop.xlane.xlu0 %3120
        %v3122 = vsel %vm3040, %v2191, -inf
        %3123 = vmax.xlane.f32.xlu0 %v3122
        %v3124 = vpop.xlane.xlu0 %3123
        %v3125 = vsel %vm3040, %v2235, -inf
        %3126 = vmax.xlane.f32.xlu0 %v3125
        %v3127 = vpop.xlane.xlu0 %3126
        %v3128 = vsel %vm3040, %v2238, -inf
        %3129 = vmax.xlane.f32.xlu0 %v3128
        %v3130 = vpop.xlane.xlu0 %3129
        %v3131 = vsel %vm3040, %v2282, -inf
        %3132 = vmax.xlane.f32.xlu0 %v3131
        %v3133 = vpop.xlane.xlu0 %3132
        %v3134 = vsel %vm3040, %v2285, -inf
        %3135 = vmax.xlane.f32.xlu0 %v3134
        %v3136 = vpop.xlane.xlu0 %3135
        %v3137 = vsel %vm3040, %v2329, -inf
        %3138 = vmax.xlane.f32.xlu0 %v3137
        %v3139 = vpop.xlane.xlu0 %3138
        %v3140 = vsel %vm3040, %v2332, -inf
        %3141 = vmax.xlane.f32.xlu0 %v3140
        %v3142 = vpop.xlane.xlu0 %3141
        %v3143 = vsel %vm3040, %v2376, -inf
        %3144 = vmax.xlane.f32.xlu0 %v3143
        %v3145 = vpop.xlane.xlu0 %3144
        %v3146 = vsel %vm3040, %v2379, -inf
        %3147 = vmax.xlane.f32.xlu0 %v3146
        %v3148 = vpop.xlane.xlu0 %3147
        %v3149 = vsel %vm3040, %v2423, -inf
        %3150 = vmax.xlane.f32.xlu0 %v3149
        %v3151 = vpop.xlane.xlu0 %3150
        %v3152 = vsel %vm3040, %v2426, -inf
        %3153 = vmax.xlane.f32.xlu0 %v3152
        %v3154 = vpop.xlane.xlu0 %3153
        %v3155 = vsel %vm3040, %v2470, -inf
        %3156 = vmax.xlane.f32.xlu0 %v3155
        %v3157 = vpop.xlane.xlu0 %3156
        %v3158 = vsel %vm3040, %v2473, -inf
        %3159 = vmax.xlane.f32.xlu0 %v3158
        %v3160 = vpop.xlane.xlu0 %3159
        %v3161 = vsel %vm3040, %v2517, -inf
        %3162 = vmax.xlane.f32.xlu0 %v3161
        %v3163 = vpop.xlane.xlu0 %3162
        %v3164 = vsel %vm3040, %v2520, -inf
        %3165 = vmax.xlane.f32.xlu0 %v3164
        %v3166 = vpop.xlane.xlu0 %3165
        %v3167 = vsel %vm3040, %v2564, -inf
        %3168 = vmax.xlane.f32.xlu0 %v3167
        %v3169 = vpop.xlane.xlu0 %3168
        %v3170 = vsel %vm3040, %v2567, -inf
        %3171 = vmax.xlane.f32.xlu0 %v3170
        %v3172 = vpop.xlane.xlu0 %3171
        %v3173 = vsel %vm3040, %v2611, -inf
        %3174 = vmax.xlane.f32.xlu0 %v3173
        %v3175 = vpop.xlane.xlu0 %3174
        %v3176 = vsel %vm3040, %v2614, -inf
        %3177 = vmax.xlane.f32.xlu0 %v3176
        %v3178 = vpop.xlane.xlu0 %3177
        %v3179 = vsel %vm3040, %v2658, -inf
        %3180 = vmax.xlane.f32.xlu0 %v3179
        %v3181 = vpop.xlane.xlu0 %3180
        %v3182 = vsel %vm3040, %v2661, -inf
        %3183 = vmax.xlane.f32.xlu0 %v3182
        %v3184 = vpop.xlane.xlu0 %3183
        %v3185 = vsel %vm3040, %v2705, -inf
        %3186 = vmax.xlane.f32.xlu0 %v3185
        %v3187 = vpop.xlane.xlu0 %3186
        %v3188 = vsel %vm3040, %v2708, -inf
        %3189 = vmax.xlane.f32.xlu0 %v3188
        %v3190 = vpop.xlane.xlu0 %3189
        %v3191 = vsel %vm3040, %v2752, -inf
        %3192 = vmax.xlane.f32.xlu0 %v3191
        %v3193 = vpop.xlane.xlu0 %3192
        %v3194 = vsel %vm3040, %v2755, -inf
        %3195 = vmax.xlane.f32.xlu0 %v3194
        %v3196 = vpop.xlane.xlu0 %3195
        %v3197 = vsel %vm3040, %v2799, -inf
        %3198 = vmax.xlane.f32.xlu0 %v3197
        %v3199 = vpop.xlane.xlu0 %3198
        %v3200 = vsel %vm3040, %v2802, -inf
        %3201 = vmax.xlane.f32.xlu0 %v3200
        %v3202 = vpop.xlane.xlu0 %3201
        %v3203 = vsel %vm3040, %v2846, -inf
        %3204 = vmax.xlane.f32.xlu0 %v3203
        %v3205 = vpop.xlane.xlu0 %3204
        %v3206 = vsel %vm3040, %v2849, -inf
        %3207 = vmax.xlane.f32.xlu0 %v3206
        %v3208 = vpop.xlane.xlu0 %3207
        %v3209 = vsel %vm3040, %v2893, -inf
        %3210 = vmax.xlane.f32.xlu0 %v3209
        %v3211 = vpop.xlane.xlu0 %3210
        %v3212 = vsel %vm3040, %v2896, -inf
        %3213 = vmax.xlane.f32.xlu0 %v3212
        %v3214 = vpop.xlane.xlu0 %3213
        %v3215 = vsel %vm3040, %v2940, -inf
        %3216 = vmax.xlane.f32.xlu0 %v3215
        %v3217 = vpop.xlane.xlu0 %3216
        %v3218 = vsel %vm3040, %v2943, -inf
        %3219 = vmax.xlane.f32.xlu0 %v3218
        %v3220 = vpop.xlane.xlu0 %3219
        %v3221 = vsel %vm3040, %v2987, -inf
        %3222 = vmax.xlane.f32.xlu0 %v3221
        %v3223 = vpop.xlane.xlu0 %3222
        %v3224 = vsel %vm3040, %v2990, -inf
        %3225 = vmax.xlane.f32.xlu0 %v3224
        %v3226 = vpop.xlane.xlu0 %3225
        %v3227 = vsel %vm3040, %v3034, -inf
        %3228 = vmax.xlane.f32.xlu0 %v3227
        %v3229 = vpop.xlane.xlu0 %3228
        %v3230 = vsel %vm3040, %v3037, -inf
        %3231 = vmax.xlane.f32.xlu0 %v3230
        %v3232 = vpop.xlane.xlu0 %3231
        %v3233 = vsub.f32 %v1577, %v3043
        %v3234 = vsub.f32 %v1580, %v3046
        %v3235 = vsub.f32 %v1624, %v3049
        %v3236 = vsub.f32 %v1627, %v3052
        %v3237 = vsub.f32 %v1671, %v3055
        %v3238 = vsub.f32 %v1674, %v3058
        %v3239 = vsub.f32 %v1718, %v3061
        %v3240 = vsub.f32 %v1721, %v3064
        %v3241 = vsub.f32 %v1765, %v3067
        %v3242 = vsub.f32 %v1768, %v3070
        %v3243 = vsub.f32 %v1812, %v3073
        %v3244 = vsub.f32 %v1815, %v3076
        %v3245 = vsub.f32 %v1859, %v3079
        %v3246 = vsub.f32 %v1862, %v3082
        %v3247 = vsub.f32 %v1906, %v3085
        %v3248 = vsub.f32 %v1909, %v3088
        %v3249 = vsub.f32 %v1953, %v3091
        %v3250 = vsub.f32 %v1956, %v3094
        %v3251 = vsub.f32 %v2000, %v3097
        %v3252 = vsub.f32 %v2003, %v3100
        %v3253 = vsub.f32 %v2047, %v3103
        %v3254 = vsub.f32 %v2050, %v3106
        %v3255 = vsub.f32 %v2094, %v3109
        %v3256 = vsub.f32 %v2097, %v3112
        %v3257 = vsub.f32 %v2141, %v3115
        %v3258 = vsub.f32 %v2144, %v3118
        %v3259 = vsub.f32 %v2188, %v3121
        %v3260 = vsub.f32 %v2191, %v3124
        %v3261 = vsub.f32 %v2235, %v3127
        %v3262 = vsub.f32 %v2238, %v3130
        %v3263 = vsub.f32 %v2282, %v3133
        %v3264 = vsub.f32 %v2285, %v3136
        %v3265 = vsub.f32 %v2329, %v3139
        %v3266 = vsub.f32 %v2332, %v3142
        %v3267 = vsub.f32 %v2376, %v3145
        %v3268 = vsub.f32 %v2379, %v3148
        %v3269 = vsub.f32 %v2423, %v3151
        %v3270 = vsub.f32 %v2426, %v3154
        %v3271 = vsub.f32 %v2470, %v3157
        %v3272 = vsub.f32 %v2473, %v3160
        %v3273 = vsub.f32 %v2517, %v3163
        %v3274 = vsub.f32 %v2520, %v3166
        %v3275 = vsub.f32 %v2564, %v3169
        %v3276 = vsub.f32 %v2567, %v3172
        %v3277 = vsub.f32 %v2611, %v3175
        %v3278 = vsub.f32 %v2614, %v3178
        %v3279 = vsub.f32 %v2658, %v3181
        %v3280 = vsub.f32 %v2661, %v3184
        %v3281 = vsub.f32 %v2705, %v3187
        %v3282 = vsub.f32 %v2708, %v3190
        %v3283 = vsub.f32 %v2752, %v3193
        %v3284 = vsub.f32 %v2755, %v3196
        %v3285 = vsub.f32 %v2799, %v3199
        %v3286 = vsub.f32 %v2802, %v3202
        %v3287 = vsub.f32 %v2846, %v3205
        %v3288 = vsub.f32 %v2849, %v3208
        %v3289 = vsub.f32 %v2893, %v3211
        %v3290 = vsub.f32 %v2896, %v3214
        %v3291 = vsub.f32 %v2940, %v3217
        %v3292 = vsub.f32 %v2943, %v3220
        %v3293 = vsub.f32 %v2987, %v3223
        %v3294 = vsub.f32 %v2990, %v3226
        %v3295 = vsub.f32 %v3034, %v3229
        %v3296 = vsub.f32 %v3037, %v3232
        %v3297 = vmul.f32 %v3233, 1.442695
        %v3298 = vpow.pop %v3297
        %v3299 = vmul.f32 %v3234, 1.442695
        %v3300 = vpow.pop %v3299
        %v3301 = vmul.f32 %v3235, 1.442695
        %v3302 = vpow.pop %v3301
        %v3303 = vmul.f32 %v3236, 1.442695
        %v3304 = vpow.pop %v3303
        %v3305 = vmul.f32 %v3237, 1.442695
        %v3306 = vpow.pop %v3305
        %v3307 = vmul.f32 %v3238, 1.442695
        %v3308 = vpow.pop %v3307
        %v3309 = vmul.f32 %v3239, 1.442695
        %v3310 = vpow.pop %v3309
        %v3311 = vmul.f32 %v3240, 1.442695
        %v3312 = vpow.pop %v3311
        %v3313 = vmul.f32 %v3241, 1.442695
        %v3314 = vpow.pop %v3313
        %v3315 = vmul.f32 %v3242, 1.442695
        %v3316 = vpow.pop %v3315
        %v3317 = vmul.f32 %v3243, 1.442695
        %v3318 = vpow.pop %v3317
        %v3319 = vmul.f32 %v3244, 1.442695
        %v3320 = vpow.pop %v3319
        %v3321 = vmul.f32 %v3245, 1.442695
        %v3322 = vpow.pop %v3321
        %v3323 = vmul.f32 %v3246, 1.442695
        %v3324 = vpow.pop %v3323
        %v3325 = vmul.f32 %v3247, 1.442695
        %v3326 = vpow.pop %v3325
        %v3327 = vmul.f32 %v3248, 1.442695
        %v3328 = vpow.pop %v3327
        %v3329 = vmul.f32 %v3249, 1.442695
        %v3330 = vpow.pop %v3329
        %v3331 = vmul.f32 %v3250, 1.442695
        %v3332 = vpow.pop %v3331
        %v3333 = vmul.f32 %v3251, 1.442695
        %v3334 = vpow.pop %v3333
        %v3335 = vmul.f32 %v3252, 1.442695
        %v3336 = vpow.pop %v3335
        %v3337 = vmul.f32 %v3253, 1.442695
        %v3338 = vpow.pop %v3337
        %v3339 = vmul.f32 %v3254, 1.442695
        %v3340 = vpow.pop %v3339
        %v3341 = vmul.f32 %v3255, 1.442695
        %v3342 = vpow.pop %v3341
        %v3343 = vmul.f32 %v3256, 1.442695
        %v3344 = vpow.pop %v3343
        %v3345 = vmul.f32 %v3257, 1.442695
        %v3346 = vpow.pop %v3345
        %v3347 = vmul.f32 %v3258, 1.442695
        %v3348 = vpow.pop %v3347
        %v3349 = vmul.f32 %v3259, 1.442695
        %v3350 = vpow.pop %v3349
        %v3351 = vmul.f32 %v3260, 1.442695
        %v3352 = vpow.pop %v3351
        %v3353 = vmul.f32 %v3261, 1.442695
        %v3354 = vpow.pop %v3353
        %v3355 = vmul.f32 %v3262, 1.442695
        %v3356 = vpow.pop %v3355
        %v3357 = vmul.f32 %v3263, 1.442695
        %v3358 = vpow.pop %v3357
        %v3359 = vmul.f32 %v3264, 1.442695
        %v3360 = vpow.pop %v3359
        %v3361 = vmul.f32 %v3265, 1.442695
        %v3362 = vpow.pop %v3361
        %v3363 = vmul.f32 %v3266, 1.442695
        %v3364 = vpow.pop %v3363
        %v3365 = vmul.f32 %v3267, 1.442695
        %v3366 = vpow.pop %v3365
        %v3367 = vmul.f32 %v3268, 1.442695
        %v3368 = vpow.pop %v3367
        %v3369 = vmul.f32 %v3269, 1.442695
        %v3370 = vpow.pop %v3369
        %v3371 = vmul.f32 %v3270, 1.442695
        %v3372 = vpow.pop %v3371
        %v3373 = vmul.f32 %v3271, 1.442695
        %v3374 = vpow.pop %v3373
        %v3375 = vmul.f32 %v3272, 1.442695
        %v3376 = vpow.pop %v3375
        %v3377 = vmul.f32 %v3273, 1.442695
        %v3378 = vpow.pop %v3377
        %v3379 = vmul.f32 %v3274, 1.442695
        %v3380 = vpow.pop %v3379
        %v3381 = vmul.f32 %v3275, 1.442695
        %v3382 = vpow.pop %v3381
        %v3383 = vmul.f32 %v3276, 1.442695
        %v3384 = vpow.pop %v3383
        %v3385 = vmul.f32 %v3277, 1.442695
        %v3386 = vpow.pop %v3385
        %v3387 = vmul.f32 %v3278, 1.442695
        %v3388 = vpow.pop %v3387
        %v3389 = vmul.f32 %v3279, 1.442695
        %v3390 = vpow.pop %v3389
        %v3391 = vmul.f32 %v3280, 1.442695
        %v3392 = vpow.pop %v3391
        %v3393 = vmul.f32 %v3281, 1.442695
        %v3394 = vpow.pop %v3393
        %v3395 = vmul.f32 %v3282, 1.442695
        %v3396 = vpow.pop %v3395
        %v3397 = vmul.f32 %v3283, 1.442695
        %v3398 = vpow.pop %v3397
        %v3399 = vmul.f32 %v3284, 1.442695
        %v3400 = vpow.pop %v3399
        %v3401 = vmul.f32 %v3285, 1.442695
        %v3402 = vpow.pop %v3401
        %v3403 = vmul.f32 %v3286, 1.442695
        %v3404 = vpow.pop %v3403
        %v3405 = vmul.f32 %v3287, 1.442695
        %v3406 = vpow.pop %v3405
        %v3407 = vmul.f32 %v3288, 1.442695
        %v3408 = vpow.pop %v3407
        %v3409 = vmul.f32 %v3289, 1.442695
        %v3410 = vpow.pop %v3409
        %v3411 = vmul.f32 %v3290, 1.442695
        %v3412 = vpow.pop %v3411
        %v3413 = vmul.f32 %v3291, 1.442695
        %v3414 = vpow.pop %v3413
        %v3415 = vmul.f32 %v3292, 1.442695
        %v3416 = vpow.pop %v3415
        %v3417 = vmul.f32 %v3293, 1.442695
        %v3418 = vpow.pop %v3417
        %v3419 = vmul.f32 %v3294, 1.442695
        %v3420 = vpow.pop %v3419
        %v3421 = vmul.f32 %v3295, 1.442695
        %v3422 = vpow.pop %v3421
        %v3423 = vmul.f32 %v3296, 1.442695
        %v3424 = vpow.pop %v3423
        %v3425 = vsel %vm3040, %v3298, 0.0
        %3426 = vadd.xlane.f32.xlu0 %v3425
        %v3427 = vpop.xlane.xlu0 %3426
        %v3428 = vsel %vm3040, %v3300, 0.0
        %3429 = vadd.xlane.f32.xlu0 %v3428
        %v3430 = vpop.xlane.xlu0 %3429
        %v3431 = vsel %vm3040, %v3302, 0.0
        %3432 = vadd.xlane.f32.xlu0 %v3431
        %v3433 = vpop.xlane.xlu0 %3432
        %v3434 = vsel %vm3040, %v3304, 0.0
        %3435 = vadd.xlane.f32.xlu0 %v3434
        %v3436 = vpop.xlane.xlu0 %3435
        %v3437 = vsel %vm3040, %v3306, 0.0
        %3438 = vadd.xlane.f32.xlu0 %v3437
        %v3439 = vpop.xlane.xlu0 %3438
        %v3440 = vsel %vm3040, %v3308, 0.0
        %3441 = vadd.xlane.f32.xlu0 %v3440
        %v3442 = vpop.xlane.xlu0 %3441
        %v3443 = vsel %vm3040, %v3310, 0.0
        %3444 = vadd.xlane.f32.xlu0 %v3443
        %v3445 = vpop.xlane.xlu0 %3444
        %v3446 = vsel %vm3040, %v3312, 0.0
        %3447 = vadd.xlane.f32.xlu0 %v3446
        %v3448 = vpop.xlane.xlu0 %3447
        %v3449 = vsel %vm3040, %v3314, 0.0
        %3450 = vadd.xlane.f32.xlu0 %v3449
        %v3451 = vpop.xlane.xlu0 %3450
        %v3452 = vsel %vm3040, %v3316, 0.0
        %3453 = vadd.xlane.f32.xlu0 %v3452
        %v3454 = vpop.xlane.xlu0 %3453
        %v3455 = vsel %vm3040, %v3318, 0.0
        %3456 = vadd.xlane.f32.xlu0 %v3455
        %v3457 = vpop.xlane.xlu0 %3456
        %v3458 = vsel %vm3040, %v3320, 0.0
        %3459 = vadd.xlane.f32.xlu0 %v3458
        %v3460 = vpop.xlane.xlu0 %3459
        %v3461 = vsel %vm3040, %v3322, 0.0
        %3462 = vadd.xlane.f32.xlu0 %v3461
        %v3463 = vpop.xlane.xlu0 %3462
        %v3464 = vsel %vm3040, %v3324, 0.0
        %3465 = vadd.xlane.f32.xlu0 %v3464
        %v3466 = vpop.xlane.xlu0 %3465
        %v3467 = vsel %vm3040, %v3326, 0.0
        %3468 = vadd.xlane.f32.xlu0 %v3467
        %v3469 = vpop.xlane.xlu0 %3468
        %v3470 = vsel %vm3040, %v3328, 0.0
        %3471 = vadd.xlane.f32.xlu0 %v3470
        %v3472 = vpop.xlane.xlu0 %3471
        %v3473 = vsel %vm3040, %v3330, 0.0
        %3474 = vadd.xlane.f32.xlu0 %v3473
        %v3475 = vpop.xlane.xlu0 %3474
        %v3476 = vsel %vm3040, %v3332, 0.0
        %3477 = vadd.xlane.f32.xlu0 %v3476
        %v3478 = vpop.xlane.xlu0 %3477
        %v3479 = vsel %vm3040, %v3334, 0.0
        %3480 = vadd.xlane.f32.xlu0 %v3479
        %v3481 = vpop.xlane.xlu0 %3480
        %v3482 = vsel %vm3040, %v3336, 0.0
        %3483 = vadd.xlane.f32.xlu0 %v3482
        %v3484 = vpop.xlane.xlu0 %3483
        %v3485 = vsel %vm3040, %v3338, 0.0
        %3486 = vadd.xlane.f32.xlu0 %v3485
        %v3487 = vpop.xlane.xlu0 %3486
        %v3488 = vsel %vm3040, %v3340, 0.0
        %3489 = vadd.xlane.f32.xlu0 %v3488
        %v3490 = vpop.xlane.xlu0 %3489
        %v3491 = vsel %vm3040, %v3342, 0.0
        %3492 = vadd.xlane.f32.xlu0 %v3491
        %v3493 = vpop.xlane.xlu0 %3492
        %v3494 = vsel %vm3040, %v3344, 0.0
        %3495 = vadd.xlane.f32.xlu0 %v3494
        %v3496 = vpop.xlane.xlu0 %3495
        %v3497 = vsel %vm3040, %v3346, 0.0
        %3498 = vadd.xlane.f32.xlu0 %v3497
        %v3499 = vpop.xlane.xlu0 %3498
        %v3500 = vsel %vm3040, %v3348, 0.0
        %3501 = vadd.xlane.f32.xlu0 %v3500
        %v3502 = vpop.xlane.xlu0 %3501
        %v3503 = vsel %vm3040, %v3350, 0.0
        %3504 = vadd.xlane.f32.xlu0 %v3503
        %v3505 = vpop.xlane.xlu0 %3504
        %v3506 = vsel %vm3040, %v3352, 0.0
        %3507 = vadd.xlane.f32.xlu0 %v3506
        %v3508 = vpop.xlane.xlu0 %3507
        %v3509 = vsel %vm3040, %v3354, 0.0
        %3510 = vadd.xlane.f32.xlu0 %v3509
        %v3511 = vpop.xlane.xlu0 %3510
        %v3512 = vsel %vm3040, %v3356, 0.0
        %3513 = vadd.xlane.f32.xlu0 %v3512
        %v3514 = vpop.xlane.xlu0 %3513
        %v3515 = vsel %vm3040, %v3358, 0.0
        %3516 = vadd.xlane.f32.xlu0 %v3515
        %v3517 = vpop.xlane.xlu0 %3516
        %v3518 = vsel %vm3040, %v3360, 0.0
        %3519 = vadd.xlane.f32.xlu0 %v3518
        %v3520 = vpop.xlane.xlu0 %3519
        %v3521 = vsel %vm3040, %v3362, 0.0
        %3522 = vadd.xlane.f32.xlu0 %v3521
        %v3523 = vpop.xlane.xlu0 %3522
        %v3524 = vsel %vm3040, %v3364, 0.0
        %3525 = vadd.xlane.f32.xlu0 %v3524
        %v3526 = vpop.xlane.xlu0 %3525
        %v3527 = vsel %vm3040, %v3366, 0.0
        %3528 = vadd.xlane.f32.xlu0 %v3527
        %v3529 = vpop.xlane.xlu0 %3528
        %v3530 = vsel %vm3040, %v3368, 0.0
        %3531 = vadd.xlane.f32.xlu0 %v3530
        %v3532 = vpop.xlane.xlu0 %3531
        %v3533 = vsel %vm3040, %v3370, 0.0
        %3534 = vadd.xlane.f32.xlu0 %v3533
        %v3535 = vpop.xlane.xlu0 %3534
        %v3536 = vsel %vm3040, %v3372, 0.0
        %3537 = vadd.xlane.f32.xlu0 %v3536
        %v3538 = vpop.xlane.xlu0 %3537
        %v3539 = vsel %vm3040, %v3374, 0.0
        %3540 = vadd.xlane.f32.xlu0 %v3539
        %v3541 = vpop.xlane.xlu0 %3540
        %v3542 = vsel %vm3040, %v3376, 0.0
        %3543 = vadd.xlane.f32.xlu0 %v3542
        %v3544 = vpop.xlane.xlu0 %3543
        %v3545 = vsel %vm3040, %v3378, 0.0
        %3546 = vadd.xlane.f32.xlu0 %v3545
        %v3547 = vpop.xlane.xlu0 %3546
        %v3548 = vsel %vm3040, %v3380, 0.0
        %3549 = vadd.xlane.f32.xlu0 %v3548
        %v3550 = vpop.xlane.xlu0 %3549
        %v3551 = vsel %vm3040, %v3382, 0.0
        %3552 = vadd.xlane.f32.xlu0 %v3551
        %v3553 = vpop.xlane.xlu0 %3552
        %v3554 = vsel %vm3040, %v3384, 0.0
        %3555 = vadd.xlane.f32.xlu0 %v3554
        %v3556 = vpop.xlane.xlu0 %3555
        %v3557 = vsel %vm3040, %v3386, 0.0
        %3558 = vadd.xlane.f32.xlu0 %v3557
        %v3559 = vpop.xlane.xlu0 %3558
        %v3560 = vsel %vm3040, %v3388, 0.0
        %3561 = vadd.xlane.f32.xlu0 %v3560
        %v3562 = vpop.xlane.xlu0 %3561
        %v3563 = vsel %vm3040, %v3390, 0.0
        %3564 = vadd.xlane.f32.xlu0 %v3563
        %v3565 = vpop.xlane.xlu0 %3564
        %v3566 = vsel %vm3040, %v3392, 0.0
        %3567 = vadd.xlane.f32.xlu0 %v3566
        %v3568 = vpop.xlane.xlu0 %3567
        %v3569 = vsel %vm3040, %v3394, 0.0
        %3570 = vadd.xlane.f32.xlu0 %v3569
        %v3571 = vpop.xlane.xlu0 %3570
        %v3572 = vsel %vm3040, %v3396, 0.0
        %3573 = vadd.xlane.f32.xlu0 %v3572
        %v3574 = vpop.xlane.xlu0 %3573
        %v3575 = vsel %vm3040, %v3398, 0.0
        %3576 = vadd.xlane.f32.xlu0 %v3575
        %v3577 = vpop.xlane.xlu0 %3576
        %v3578 = vsel %vm3040, %v3400, 0.0
        %3579 = vadd.xlane.f32.xlu0 %v3578
        %v3580 = vpop.xlane.xlu0 %3579
        %v3581 = vsel %vm3040, %v3402, 0.0
        %3582 = vadd.xlane.f32.xlu0 %v3581
        %v3583 = vpop.xlane.xlu0 %3582
        %v3584 = vsel %vm3040, %v3404, 0.0
        %3585 = vadd.xlane.f32.xlu0 %v3584
        %v3586 = vpop.xlane.xlu0 %3585
        %v3587 = vsel %vm3040, %v3406, 0.0
        %3588 = vadd.xlane.f32.xlu0 %v3587
        %v3589 = vpop.xlane.xlu0 %3588
        %v3590 = vsel %vm3040, %v3408, 0.0
        %3591 = vadd.xlane.f32.xlu0 %v3590
        %v3592 = vpop.xlane.xlu0 %3591
        %v3593 = vsel %vm3040, %v3410, 0.0
        %3594 = vadd.xlane.f32.xlu0 %v3593
        %v3595 = vpop.xlane.xlu0 %3594
        %v3596 = vsel %vm3040, %v3412, 0.0
        %3597 = vadd.xlane.f32.xlu0 %v3596
        %v3598 = vpop.xlane.xlu0 %3597
        %v3599 = vsel %vm3040, %v3414, 0.0
        %3600 = vadd.xlane.f32.xlu0 %v3599
        %v3601 = vpop.xlane.xlu0 %3600
        %v3602 = vsel %vm3040, %v3416, 0.0
        %3603 = vadd.xlane.f32.xlu0 %v3602
        %v3604 = vpop.xlane.xlu0 %3603
        %v3605 = vsel %vm3040, %v3418, 0.0
        %3606 = vadd.xlane.f32.xlu0 %v3605
        %v3607 = vpop.xlane.xlu0 %3606
        %v3608 = vsel %vm3040, %v3420, 0.0
        %3609 = vadd.xlane.f32.xlu0 %v3608
        %v3610 = vpop.xlane.xlu0 %3609
        %v3611 = vsel %vm3040, %v3422, 0.0
        %3612 = vadd.xlane.f32.xlu0 %v3611
        %v3613 = vpop.xlane.xlu0 %3612
        %v3614 = vsel %vm3040, %v3424, 0.0
        %3615 = vadd.xlane.f32.xlu0 %v3614
        %v3616 = vpop.xlane.xlu0 %3615
        %v3617 = vrcp.pop %v3427
        %v3618 = vrcp.pop %v3430
        %v3619 = vrcp.pop %v3433
        %v3620 = vrcp.pop %v3436
        %v3621 = vrcp.pop %v3439
        %v3622 = vrcp.pop %v3442
        %v3623 = vrcp.pop %v3445
        %v3624 = vrcp.pop %v3448
        %v3625 = vrcp.pop %v3451
        %v3626 = vrcp.pop %v3454
        %v3627 = vrcp.pop %v3457
        %v3628 = vrcp.pop %v3460
        %v3629 = vrcp.pop %v3463
        %v3630 = vrcp.pop %v3466
        %v3631 = vrcp.pop %v3469
        %v3632 = vrcp.pop %v3472
        %v3633 = vrcp.pop %v3475
        %v3634 = vrcp.pop %v3478
        %v3635 = vrcp.pop %v3481
        %v3636 = vrcp.pop %v3484
        %v3637 = vrcp.pop %v3487
        %v3638 = vrcp.pop %v3490
        %v3639 = vrcp.pop %v3493
        %v3640 = vrcp.pop %v3496
        %v3641 = vrcp.pop %v3499
        %v3642 = vrcp.pop %v3502
        %v3643 = vrcp.pop %v3505
        %v3644 = vrcp.pop %v3508
        %v3645 = vrcp.pop %v3511
        %v3646 = vrcp.pop %v3514
        %v3647 = vrcp.pop %v3517
        %v3648 = vrcp.pop %v3520
        %v3649 = vrcp.pop %v3523
        %v3650 = vrcp.pop %v3526
        %v3651 = vrcp.pop %v3529
        %v3652 = vrcp.pop %v3532
        %v3653 = vrcp.pop %v3535
        %v3654 = vrcp.pop %v3538
        %v3655 = vrcp.pop %v3541
        %v3656 = vrcp.pop %v3544
        %v3657 = vrcp.pop %v3547
        %v3658 = vrcp.pop %v3550
        %v3659 = vrcp.pop %v3553
        %v3660 = vrcp.pop %v3556
        %v3661 = vrcp.pop %v3559
        %v3662 = vrcp.pop %v3562
        %v3663 = vrcp.pop %v3565
        %v3664 = vrcp.pop %v3568
        %v3665 = vrcp.pop %v3571
        %v3666 = vrcp.pop %v3574
        %v3667 = vrcp.pop %v3577
        %v3668 = vrcp.pop %v3580
        %v3669 = vrcp.pop %v3583
        %v3670 = vrcp.pop %v3586
        %v3671 = vrcp.pop %v3589
        %v3672 = vrcp.pop %v3592
        %v3673 = vrcp.pop %v3595
        %v3674 = vrcp.pop %v3598
        %v3675 = vrcp.pop %v3601
        %v3676 = vrcp.pop %v3604
        %v3677 = vrcp.pop %v3607
        %v3678 = vrcp.pop %v3610
        %v3679 = vrcp.pop %v3613
        %v3680 = vrcp.pop %v3616
        %v3681 = vmul.f32 %v3298, %v3617
        %v3682 = vmul.f32 %v3300, %v3618
        %v3683 = vmul.f32 %v3302, %v3619
        %v3684 = vmul.f32 %v3304, %v3620
        %v3685 = vmul.f32 %v3306, %v3621
        %v3686 = vmul.f32 %v3308, %v3622
        %v3687 = vmul.f32 %v3310, %v3623
        %v3688 = vmul.f32 %v3312, %v3624
        %v3689 = vmul.f32 %v3314, %v3625
        %v3690 = vmul.f32 %v3316, %v3626
        %v3691 = vmul.f32 %v3318, %v3627
        %v3692 = vmul.f32 %v3320, %v3628
        %v3693 = vmul.f32 %v3322, %v3629
        %v3694 = vmul.f32 %v3324, %v3630
        %v3695 = vmul.f32 %v3326, %v3631
        %v3696 = vmul.f32 %v3328, %v3632
        %v3697 = vmul.f32 %v3330, %v3633
        %v3698 = vmul.f32 %v3332, %v3634
        %v3699 = vmul.f32 %v3334, %v3635
        %v3700 = vmul.f32 %v3336, %v3636
        %v3701 = vmul.f32 %v3338, %v3637
        %v3702 = vmul.f32 %v3340, %v3638
        %v3703 = vmul.f32 %v3342, %v3639
        %v3704 = vmul.f32 %v3344, %v3640
        %v3705 = vmul.f32 %v3346, %v3641
        %v3706 = vmul.f32 %v3348, %v3642
        %v3707 = vmul.f32 %v3350, %v3643
        %v3708 = vmul.f32 %v3352, %v3644
        %v3709 = vmul.f32 %v3354, %v3645
        %v3710 = vmul.f32 %v3356, %v3646
        %v3711 = vmul.f32 %v3358, %v3647
        %v3712 = vmul.f32 %v3360, %v3648
        %v3713 = vmul.f32 %v3362, %v3649
        %v3714 = vmul.f32 %v3364, %v3650
        %v3715 = vmul.f32 %v3366, %v3651
        %v3716 = vmul.f32 %v3368, %v3652
        %v3717 = vmul.f32 %v3370, %v3653
        %v3718 = vmul.f32 %v3372, %v3654
        %v3719 = vmul.f32 %v3374, %v3655
        %v3720 = vmul.f32 %v3376, %v3656
        %v3721 = vmul.f32 %v3378, %v3657
        %v3722 = vmul.f32 %v3380, %v3658
        %v3723 = vmul.f32 %v3382, %v3659
        %v3724 = vmul.f32 %v3384, %v3660
        %v3725 = vmul.f32 %v3386, %v3661
        %v3726 = vmul.f32 %v3388, %v3662
        %v3727 = vmul.f32 %v3390, %v3663
        %v3728 = vmul.f32 %v3392, %v3664
        %v3729 = vmul.f32 %v3394, %v3665
        %v3730 = vmul.f32 %v3396, %v3666
        %v3731 = vmul.f32 %v3398, %v3667
        %v3732 = vmul.f32 %v3400, %v3668
        %v3733 = vmul.f32 %v3402, %v3669
        %v3734 = vmul.f32 %v3404, %v3670
        %v3735 = vmul.f32 %v3406, %v3671
        %v3736 = vmul.f32 %v3408, %v3672
        %v3737 = vmul.f32 %v3410, %v3673
        %v3738 = vmul.f32 %v3412, %v3674
        %v3739 = vmul.f32 %v3414, %v3675
        %v3740 = vmul.f32 %v3416, %v3676
        %v3741 = vmul.f32 %v3418, %v3677
        %v3742 = vmul.f32 %v3420, %v3678
        %v3743 = vmul.f32 %v3422, %v3679
        %v3744 = vmul.f32 %v3424, %v3680
        %v3745 = vpack.c.bf16 %v3682, %v3681
        %v3746 = vpack.c.bf16 %v3684, %v3683
        %v3747 = vpack.c.bf16 %v3686, %v3685
        %v3748 = vpack.c.bf16 %v3688, %v3687
        %v3749 = vpack.c.bf16 %v3690, %v3689
        %v3750 = vpack.c.bf16 %v3692, %v3691
        %v3751 = vpack.c.bf16 %v3694, %v3693
        %v3752 = vpack.c.bf16 %v3696, %v3695
        %v3753 = vpack.c.bf16 %v3698, %v3697
        %v3754 = vpack.c.bf16 %v3700, %v3699
        %v3755 = vpack.c.bf16 %v3702, %v3701
        %v3756 = vpack.c.bf16 %v3704, %v3703
        %v3757 = vpack.c.bf16 %v3706, %v3705
        %v3758 = vpack.c.bf16 %v3708, %v3707
        %v3759 = vpack.c.bf16 %v3710, %v3709
        %v3760 = vpack.c.bf16 %v3712, %v3711
        %v3761 = vpack.c.bf16 %v3714, %v3713
        %v3762 = vpack.c.bf16 %v3716, %v3715
        %v3763 = vpack.c.bf16 %v3718, %v3717
        %v3764 = vpack.c.bf16 %v3720, %v3719
        %v3765 = vpack.c.bf16 %v3722, %v3721
        %v3766 = vpack.c.bf16 %v3724, %v3723
        %v3767 = vpack.c.bf16 %v3726, %v3725
        %v3768 = vpack.c.bf16 %v3728, %v3727
        %v3769 = vpack.c.bf16 %v3730, %v3729
        %v3770 = vpack.c.bf16 %v3732, %v3731
        %v3771 = vpack.c.bf16 %v3734, %v3733
        %v3772 = vpack.c.bf16 %v3736, %v3735
        %v3773 = vpack.c.bf16 %v3738, %v3737
        %v3774 = vpack.c.bf16 %v3740, %v3739
        %v3775 = vpack.c.bf16 %v3742, %v3741
        %v3776 = vpack.c.bf16 %v3744, %v3743
        %v3778 = vsel %vm3040, %v3745, 0
        %3780 = vmatprep.subr.bf16.mxu0 0
        %3781 = vmatpush1.bf16.msra.mxu0 %v1503
        %3782 = vmatprep.subr.bf16.mxu0 0
        %3783 = vmatpush1.bf16.msra.mxu0 0
        %3784 = vmatprep.subr.bf16.mxu0 0
        %3785 = vmatpush1.bf16.msra.mxu0 0
        %3786 = vmatprep.subr.bf16.mxu0 0
        %3787 = vmatpush1.bf16.msra.mxu0 0
        %3788 = vmatprep.subr.bf16.mxu0 0
        %3789 = vmatpush1.bf16.msra.mxu0 0
        %3790 = vmatprep.subr.bf16.mxu0 0
        %3791 = vmatpush1.bf16.msra.mxu0 0
        %3792 = vmatprep.subr.bf16.mxu0 0
        %3793 = vmatpush1.bf16.msra.mxu0 0
        %3794 = vmatprep.subr.bf16.mxu0 0
        %3795 = vmatpush1.bf16.msra.mxu0 0
        %3796 = vmatprep.subr.bf16.mxu0 0
        %3797 = vmatpush1.bf16.msra.mxu0 0
        %3798 = vmatprep.subr.bf16.mxu0 0
        %3799 = vmatpush1.bf16.msra.mxu0 0
        %3800 = vmatprep.subr.bf16.mxu0 0
        %3801 = vmatpush1.bf16.msra.mxu0 0
        %3802 = vmatprep.subr.bf16.mxu0 0
        %3803 = vmatpush1.bf16.msra.mxu0 0
        %3804 = vmatprep.subr.bf16.mxu0 0
        %3805 = vmatpush1.bf16.msra.mxu0 0
        %3806 = vmatprep.subr.bf16.mxu0 0
        %3807 = vmatpush1.bf16.msra.mxu0 0
        %3808 = vmatprep.subr.bf16.mxu0 0
        %3809 = vmatpush1.bf16.msra.mxu0 0
        %3810 = vmatprep.subr.bf16.mxu0 0
        %3811 = vmatpush1.bf16.msra.mxu0 0
        %3812 = vmatprep.mubr.bf16.mxu0 0
        %3813 = vmatmul.mubr.bf16.gmra.mrb[0].mxu0 %v3778
        %v3814 = vpop.f32.mrb[0].mxu0
        %v3815 = vadd.f32 0.0, %v3814
        %v3816 = vpop.f32.mrb[0].mxu0
        %v3817 = vpop.f32.mrb[0].mxu0
        %v3818 = vadd.f32 0.0, %v3817
        %v3819 = vpop.f32.mrb[0].mxu0
        %3820 = vdwg.mxu0
        %v3822 = vsel %vm3040, %v3746, 0
        %3824 = vmatprep.subr.bf16.mxu0 0
        %3825 = vmatpush1.bf16.msra.mxu0 %v1504
        %3826 = vmatprep.subr.bf16.mxu0 0
        %3827 = vmatpush1.bf16.msra.mxu0 0
        %3828 = vmatprep.subr.bf16.mxu0 0
        %3829 = vmatpush1.bf16.msra.mxu0 0
        %3830 = vmatprep.subr.bf16.mxu0 0
        %3831 = vmatpush1.bf16.msra.mxu0 0
        %3832 = vmatprep.subr.bf16.mxu0 0
        %3833 = vmatpush1.bf16.msra.mxu0 0
        %3834 = vmatprep.subr.bf16.mxu0 0
        %3835 = vmatpush1.bf16.msra.mxu0 0
        %3836 = vmatprep.subr.bf16.mxu0 0
        %3837 = vmatpush1.bf16.msra.mxu0 0
        %3838 = vmatprep.subr.bf16.mxu0 0
        %3839 = vmatpush1.bf16.msra.mxu0 0
        %3840 = vmatprep.subr.bf16.mxu0 0
        %3841 = vmatpush1.bf16.msra.mxu0 0
        %3842 = vmatprep.subr.bf16.mxu0 0
        %3843 = vmatpush1.bf16.msra.mxu0 0
        %3844 = vmatprep.subr.bf16.mxu0 0
        %3845 = vmatpush1.bf16.msra.mxu0 0
        %3846 = vmatprep.subr.bf16.mxu0 0
        %3847 = vmatpush1.bf16.msra.mxu0 0
        %3848 = vmatprep.subr.bf16.mxu0 0
        %3849 = vmatpush1.bf16.msra.mxu0 0
        %3850 = vmatprep.subr.bf16.mxu0 0
        %3851 = vmatpush1.bf16.msra.mxu0 0
        %3852 = vmatprep.subr.bf16.mxu0 0
        %3853 = vmatpush1.bf16.msra.mxu0 0
        %3854 = vmatprep.subr.bf16.mxu0 0
        %3855 = vmatpush1.bf16.msra.mxu0 0
        %3856 = vmatprep.mubr.bf16.mxu0 0
        %3857 = vmatmul.mubr.bf16.gmra.mrb[0].mxu0 %v3822
        %v3858 = vpop.f32.mrb[0].mxu0
        %v3859 = vadd.f32 0.0, %v3858
        %v3860 = vpop.f32.mrb[0].mxu0
        %v3861 = vpop.f32.mrb[0].mxu0
        %v3862 = vadd.f32 0.0, %v3861
        %v3863 = vpop.f32.mrb[0].mxu0
        %3864 = vdwg.mxu0
        %v3866 = vsel %vm3040, %v3747, 0
        %3868 = vmatprep.subr.bf16.mxu0 0
        %3869 = vmatpush1.bf16.msra.mxu0 %v1505
        %3870 = vmatprep.subr.bf16.mxu0 0
        %3871 = vmatpush1.bf16.msra.mxu0 0
        %3872 = vmatprep.subr.bf16.mxu0 0
        %3873 = vmatpush1.bf16.msra.mxu0 0
        %3874 = vmatprep.subr.bf16.mxu0 0
        %3875 = vmatpush1.bf16.msra.mxu0 0
        %3876 = vmatprep.subr.bf16.mxu0 0
        %3877 = vmatpush1.bf16.msra.mxu0 0
        %3878 = vmatprep.subr.bf16.mxu0 0
        %3879 = vmatpush1.bf16.msra.mxu0 0
        %3880 = vmatprep.subr.bf16.mxu0 0
        %3881 = vmatpush1.bf16.msra.mxu0 0
        %3882 = vmatprep.subr.bf16.mxu0 0
        %3883 = vmatpush1.bf16.msra.mxu0 0
        %3884 = vmatprep.subr.bf16.mxu0 0
        %3885 = vmatpush1.bf16.msra.mxu0 0
        %3886 = vmatprep.subr.bf16.mxu0 0
        %3887 = vmatpush1.bf16.msra.mxu0 0
        %3888 = vmatprep.subr.bf16.mxu0 0
        %3889 = vmatpush1.bf16.msra.mxu0 0
        %3890 = vmatprep.subr.bf16.mxu0 0
        %3891 = vmatpush1.bf16.msra.mxu0 0
        %3892 = vmatprep.subr.bf16.mxu0 0
        %3893 = vmatpush1.bf16.msra.mxu0 0
        %3894 = vmatprep.subr.bf16.mxu0 0
        %3895 = vmatpush1.bf16.msra.mxu0 0
        %3896 = vmatprep.subr.bf16.mxu0 0
        %3897 = vmatpush1.bf16.msra.mxu0 0
        %3898 = vmatprep.subr.bf16.mxu0 0
        %3899 = vmatpush1.bf16.msra.mxu0 0
        %3900 = vmatprep.mubr.bf16.mxu0 0
        %3901 = vmatmul.mubr.bf16.gmra.mrb[0].mxu0 %v3866
        %v3902 = vpop.f32.mrb[0].mxu0
        %v3903 = vadd.f32 0.0, %v3902
        %v3904 = vpop.f32.mrb[0].mxu0
        %v3905 = vpop.f32.mrb[0].mxu0
        %v3906 = vadd.f32 0.0, %v3905
        %v3907 = vpop.f32.mrb[0].mxu0
        %3908 = vdwg.mxu0
        %v3910 = vsel %vm3040, %v3748, 0
        %3912 = vmatprep.subr.bf16.mxu0 0
        %3913 = vmatpush1.bf16.msra.mxu0 %v1506
        %3914 = vmatprep.subr.bf16.mxu0 0
        %3915 = vmatpush1.bf16.msra.mxu0 0
        %3916 = vmatprep.subr.bf16.mxu0 0
        %3917 = vmatpush1.bf16.msra.mxu0 0
        %3918 = vmatprep.subr.bf16.mxu0 0
        %3919 = vmatpush1.bf16.msra.mxu0 0
        %3920 = vmatprep.subr.bf16.mxu0 0
        %3921 = vmatpush1.bf16.msra.mxu0 0
        %3922 = vmatprep.subr.bf16.mxu0 0
        %3923 = vmatpush1.bf16.msra.mxu0 0
        %3924 = vmatprep.subr.bf16.mxu0 0
        %3925 = vmatpush1.bf16.msra.mxu0 0
        %3926 = vmatprep.subr.bf16.mxu0 0
        %3927 = vmatpush1.bf16.msra.mxu0 0
        %3928 = vmatprep.subr.bf16.mxu0 0
        %3929 = vmatpush1.bf16.msra.mxu0 0
        %3930 = vmatprep.subr.bf16.mxu0 0
        %3931 = vmatpush1.bf16.msra.mxu0 0
        %3932 = vmatprep.subr.bf16.mxu0 0
        %3933 = vmatpush1.bf16.msra.mxu0 0
        %3934 = vmatprep.subr.bf16.mxu0 0
        %3935 = vmatpush1.bf16.msra.mxu0 0
        %3936 = vmatprep.subr.bf16.mxu0 0
        %3937 = vmatpush1.bf16.msra.mxu0 0
        %3938 = vmatprep.subr.bf16.mxu0 0
        %3939 = vmatpush1.bf16.msra.mxu0 0
        %3940 = vmatprep.subr.bf16.mxu0 0
        %3941 = vmatpush1.bf16.msra.mxu0 0
        %3942 = vmatprep.subr.bf16.mxu0 0
        %3943 = vmatpush1.bf16.msra.mxu0 0
        %3944 = vmatprep.mubr.bf16.mxu0 0
        %3945 = vmatmul.mubr.bf16.gmra.mrb[0].mxu0 %v3910
        %v3946 = vpop.f32.mrb[0].mxu0
        %v3947 = vadd.f32 0.0, %v3946
        %v3948 = vpop.f32.mrb[0].mxu0
        %v3949 = vpop.f32.mrb[0].mxu0
        %v3950 = vadd.f32 0.0, %v3949
        %v3951 = vpop.f32.mrb[0].mxu0
        %3952 = vdwg.mxu0
        %v3954 = vsel %vm3040, %v3749, 0
        %3956 = vmatprep.subr.bf16.mxu0 0
        %3957 = vmatpush1.bf16.msra.mxu0 %v1507
        %3958 = vmatprep.subr.bf16.mxu0 0
        %3959 = vmatpush1.bf16.msra.mxu0 0
        %3960 = vmatprep.subr.bf16.mxu0 0
        %3961 = vmatpush1.bf16.msra.mxu0 0
        %3962 = vmatprep.subr.bf16.mxu0 0
        %3963 = vmatpush1.bf16.msra.mxu0 0
        %3964 = vmatprep.subr.bf16.mxu0 0
        %3965 = vmatpush1.bf16.msra.mxu0 0
        %3966 = vmatprep.subr.bf16.mxu0 0
        %3967 = vmatpush1.bf16.msra.mxu0 0
        %3968 = vmatprep.subr.bf16.mxu0 0
        %3969 = vmatpush1.bf16.msra.mxu0 0
        %3970 = vmatprep.subr.bf16.mxu0 0
        %3971 = vmatpush1.bf16.msra.mxu0 0
        %3972 = vmatprep.subr.bf16.mxu0 0
        %3973 = vmatpush1.bf16.msra.mxu0 0
        %3974 = vmatprep.subr.bf16.mxu0 0
        %3975 = vmatpush1.bf16.msra.mxu0 0
        %3976 = vmatprep.subr.bf16.mxu0 0
        %3977 = vmatpush1.bf16.msra.mxu0 0
        %3978 = vmatprep.subr.bf16.mxu0 0
        %3979 = vmatpush1.bf16.msra.mxu0 0
        %3980 = vmatprep.subr.bf16.mxu0 0
        %3981 = vmatpush1.bf16.msra.mxu0 0
        %3982 = vmatprep.subr.bf16.mxu0 0
        %3983 = vmatpush1.bf16.msra.mxu0 0
        %3984 = vmatprep.subr.bf16.mxu0 0
        %3985 = vmatpush1.bf16.msra.mxu0 0
        %3986 = vmatprep.subr.bf16.mxu0 0
        %3987 = vmatpush1.bf16.msra.mxu0 0
        %3988 = vmatprep.mubr.bf16.mxu0 0
        %3989 = vmatmul.mubr.bf16.gmra.mrb[0].mxu0 %v3954
        %v3990 = vpop.f32.mrb[0].mxu0
        %v3991 = vadd.f32 0.0, %v3990
        %v3992 = vpop.f32.mrb[0].mxu0
        %v3993 = vpop.f32.mrb[0].mxu0
        %v3994 = vadd.f32 0.0, %v3993
        %v3995 = vpop.f32.mrb[0].mxu0
        %3996 = vdwg.mxu0
        %v3998 = vsel %vm3040, %v3750, 0
        %4000 = vmatprep.subr.bf16.mxu0 0
        %4001 = vmatpush1.bf16.msra.mxu0 %v1508
        %4002 = vmatprep.subr.bf16.mxu0 0
        %4003 = vmatpush1.bf16.msra.mxu0 0
        %4004 = vmatprep.subr.bf16.mxu0 0
        %4005 = vmatpush1.bf16.msra.mxu0 0
        %4006 = vmatprep.subr.bf16.mxu0 0
        %4007 = vmatpush1.bf16.msra.mxu0 0
        %4008 = vmatprep.subr.bf16.mxu0 0
        %4009 = vmatpush1.bf16.msra.mxu0 0
        %4010 = vmatprep.subr.bf16.mxu0 0
        %4011 = vmatpush1.bf16.msra.mxu0 0
        %4012 = vmatprep.subr.bf16.mxu0 0
        %4013 = vmatpush1.bf16.msra.mxu0 0
        %4014 = vmatprep.subr.bf16.mxu0 0
        %4015 = vmatpush1.bf16.msra.mxu0 0
        %4016 = vmatprep.subr.bf16.mxu0 0
        %4017 = vmatpush1.bf16.msra.mxu0 0
        %4018 = vmatprep.subr.bf16.mxu0 0
        %4019 = vmatpush1.bf16.msra.mxu0 0
        %4020 = vmatprep.subr.bf16.mxu0 0
        %4021 = vmatpush1.bf16.msra.mxu0 0
        %4022 = vmatprep.subr.bf16.mxu0 0
        %4023 = vmatpush1.bf16.msra.mxu0 0
        %4024 = vmatprep.subr.bf16.mxu0 0
        %4025 = vmatpush1.bf16.msra.mxu0 0
        %4026 = vmatprep.subr.bf16.mxu0 0
        %4027 = vmatpush1.bf16.msra.mxu0 0
        %4028 = vmatprep.subr.bf16.mxu0 0
        %4029 = vmatpush1.bf16.msra.mxu0 0
        %4030 = vmatprep.subr.bf16.mxu0 0
        %4031 = vmatpush1.bf16.msra.mxu0 0
        %4032 = vmatprep.mubr.bf16.mxu0 0
        %4033 = vmatmul.mubr.bf16.gmra.mrb[0].mxu0 %v3998
        %v4034 = vpop.f32.mrb[0].mxu0
        %v4035 = vadd.f32 0.0, %v4034
        %v4036 = vpop.f32.mrb[0].mxu0
        %v4037 = vpop.f32.mrb[0].mxu0
        %v4038 = vadd.f32 0.0, %v4037
        %v4039 = vpop.f32.mrb[0].mxu0
        %4040 = vdwg.mxu0
        %v4042 = vsel %vm3040, %v3751, 0
        %4044 = vmatprep.subr.bf16.mxu0 0
        %4045 = vmatpush1.bf16.msra.mxu0 %v1509
        %4046 = vmatprep.subr.bf16.mxu0 0
        %4047 = vmatpush1.bf16.msra.mxu0 0
        %4048 = vmatprep.subr.bf16.mxu0 0
        %4049 = vmatpush1.bf16.msra.mxu0 0
        %4050 = vmatprep.subr.bf16.mxu0 0
        %4051 = vmatpush1.bf16.msra.mxu0 0
        %4052 = vmatprep.subr.bf16.mxu0 0
        %4053 = vmatpush1.bf16.msra.mxu0 0
        %4054 = vmatprep.subr.bf16.mxu0 0
        %4055 = vmatpush1.bf16.msra.mxu0 0
        %4056 = vmatprep.subr.bf16.mxu0 0
        %4057 = vmatpush1.bf16.msra.mxu0 0
        %4058 = vmatprep.subr.bf16.mxu0 0
        %4059 = vmatpush1.bf16.msra.mxu0 0
        %4060 = vmatprep.subr.bf16.mxu0 0
        %4061 = vmatpush1.bf16.msra.mxu0 0
        %4062 = vmatprep.subr.bf16.mxu0 0
        %4063 = vmatpush1.bf16.msra.mxu0 0
        %4064 = vmatprep.subr.bf16.mxu0 0
        %4065 = vmatpush1.bf16.msra.mxu0 0
        %4066 = vmatprep.subr.bf16.mxu0 0
        %4067 = vmatpush1.bf16.msra.mxu0 0
        %4068 = vmatprep.subr.bf16.mxu0 0
        %4069 = vmatpush1.bf16.msra.mxu0 0
        %4070 = vmatprep.subr.bf16.mxu0 0
        %4071 = vmatpush1.bf16.msra.mxu0 0
        %4072 = vmatprep.subr.bf16.mxu0 0
        %4073 = vmatpush1.bf16.msra.mxu0 0
        %4074 = vmatprep.subr.bf16.mxu0 0
        %4075 = vmatpush1.bf16.msra.mxu0 0
        %4076 = vmatprep.mubr.bf16.mxu0 0
        %4077 = vmatmul.mubr.bf16.gmra.mrb[0].mxu0 %v4042
        %v4078 = vpop.f32.mrb[0].mxu0
        %v4079 = vadd.f32 0.0, %v4078
        %v4080 = vpop.f32.mrb[0].mxu0
        %v4081 = vpop.f32.mrb[0].mxu0
        %v4082 = vadd.f32 0.0, %v4081
        %v4083 = vpop.f32.mrb[0].mxu0
        %4084 = vdwg.mxu0
        %v4086 = vsel %vm3040, %v3752, 0
        %4088 = vmatprep.subr.bf16.mxu0 0
        %4089 = vmatpush1.bf16.msra.mxu0 %v1510
        %4090 = vmatprep.subr.bf16.mxu0 0
        %4091 = vmatpush1.bf16.msra.mxu0 0
        %4092 = vmatprep.subr.bf16.mxu0 0
        %4093 = vmatpush1.bf16.msra.mxu0 0
        %4094 = vmatprep.subr.bf16.mxu0 0
        %4095 = vmatpush1.bf16.msra.mxu0 0
        %4096 = vmatprep.subr.bf16.mxu0 0
        %4097 = vmatpush1.bf16.msra.mxu0 0
        %4098 = vmatprep.subr.bf16.mxu0 0
        %4099 = vmatpush1.bf16.msra.mxu0 0
        %4100 = vmatprep.subr.bf16.mxu0 0
        %4101 = vmatpush1.bf16.msra.mxu0 0
        %4102 = vmatprep.subr.bf16.mxu0 0
        %4103 = vmatpush1.bf16.msra.mxu0 0
        %4104 = vmatprep.subr.bf16.mxu0 0
        %4105 = vmatpush1.bf16.msra.mxu0 0
        %4106 = vmatprep.subr.bf16.mxu0 0
        %4107 = vmatpush1.bf16.msra.mxu0 0
        %4108 = vmatprep.subr.bf16.mxu0 0
        %4109 = vmatpush1.bf16.msra.mxu0 0
        %4110 = vmatprep.subr.bf16.mxu0 0
        %4111 = vmatpush1.bf16.msra.mxu0 0
        %4112 = vmatprep.subr.bf16.mxu0 0
        %4113 = vmatpush1.bf16.msra.mxu0 0
        %4114 = vmatprep.subr.bf16.mxu0 0
        %4115 = vmatpush1.bf16.msra.mxu0 0
        %4116 = vmatprep.subr.bf16.mxu0 0
        %4117 = vmatpush1.bf16.msra.mxu0 0
        %4118 = vmatprep.subr.bf16.mxu0 0
        %4119 = vmatpush1.bf16.msra.mxu0 0
        %4120 = vmatprep.mubr.bf16.mxu0 0
        %4121 = vmatmul.mubr.bf16.gmra.mrb[0].mxu0 %v4086
        %v4122 = vpop.f32.mrb[0].mxu0
        %v4123 = vadd.f32 0.0, %v4122
        %v4124 = vpop.f32.mrb[0].mxu0
        %v4125 = vpop.f32.mrb[0].mxu0
        %v4126 = vadd.f32 0.0, %v4125
        %v4127 = vpop.f32.mrb[0].mxu0
        %4128 = vdwg.mxu0
        %v4130 = vsel %vm3040, %v3753, 0
        %4132 = vmatprep.subr.bf16.mxu0 0
        %4133 = vmatpush1.bf16.msra.mxu0 %v1511
        %4134 = vmatprep.subr.bf16.mxu0 0
        %4135 = vmatpush1.bf16.msra.mxu0 0
        %4136 = vmatprep.subr.bf16.mxu0 0
        %4137 = vmatpush1.bf16.msra.mxu0 0
        %4138 = vmatprep.subr.bf16.mxu0 0
        %4139 = vmatpush1.bf16.msra.mxu0 0
        %4140 = vmatprep.subr.bf16.mxu0 0
        %4141 = vmatpush1.bf16.msra.mxu0 0
        %4142 = vmatprep.subr.bf16.mxu0 0
        %4143 = vmatpush1.bf16.msra.mxu0 0
        %4144 = vmatprep.subr.bf16.mxu0 0
        %4145 = vmatpush1.bf16.msra.mxu0 0
        %4146 = vmatprep.subr.bf16.mxu0 0
        %4147 = vmatpush1.bf16.msra.mxu0 0
        %4148 = vmatprep.subr.bf16.mxu0 0
        %4149 = vmatpush1.bf16.msra.mxu0 0
        %4150 = vmatprep.subr.bf16.mxu0 0
        %4151 = vmatpush1.bf16.msra.mxu0 0
        %4152 = vmatprep.subr.bf16.mxu0 0
        %4153 = vmatpush1.bf16.msra.mxu0 0
        %4154 = vmatprep.subr.bf16.mxu0 0
        %4155 = vmatpush1.bf16.msra.mxu0 0
        %4156 = vmatprep.subr.bf16.mxu0 0
        %4157 = vmatpush1.bf16.msra.mxu0 0
        %4158 = vmatprep.subr.bf16.mxu0 0
        %4159 = vmatpush1.bf16.msra.mxu0 0
        %4160 = vmatprep.subr.bf16.mxu0 0
        %4161 = vmatpush1.bf16.msra.mxu0 0
        %4162 = vmatprep.subr.bf16.mxu0 0
        %4163 = vmatpush1.bf16.msra.mxu0 0
        %4164 = vmatprep.mubr.bf16.mxu0 0
        %4165 = vmatmul.mubr.bf16.gmra.mrb[0].mxu0 %v4130
        %v4166 = vpop.f32.mrb[0].mxu0
        %v4167 = vadd.f32 0.0, %v4166
        %v4168 = vpop.f32.mrb[0].mxu0
        %v4169 = vpop.f32.mrb[0].mxu0
        %v4170 = vadd.f32 0.0, %v4169
        %v4171 = vpop.f32.mrb[0].mxu0
        %4172 = vdwg.mxu0
        %v4174 = vsel %vm3040, %v3754, 0
        %4176 = vmatprep.subr.bf16.mxu0 0
        %4177 = vmatpush1.bf16.msra.mxu0 %v1512
        %4178 = vmatprep.subr.bf16.mxu0 0
        %4179 = vmatpush1.bf16.msra.mxu0 0
        %4180 = vmatprep.subr.bf16.mxu0 0
        %4181 = vmatpush1.bf16.msra.mxu0 0
        %4182 = vmatprep.subr.bf16.mxu0 0
        %4183 = vmatpush1.bf16.msra.mxu0 0
        %4184 = vmatprep.subr.bf16.mxu0 0
        %4185 = vmatpush1.bf16.msra.mxu0 0
        %4186 = vmatprep.subr.bf16.mxu0 0
        %4187 = vmatpush1.bf16.msra.mxu0 0
        %4188 = vmatprep.subr.bf16.mxu0 0
        %4189 = vmatpush1.bf16.msra.mxu0 0
        %4190 = vmatprep.subr.bf16.mxu0 0
        %4191 = vmatpush1.bf16.msra.mxu0 0
        %4192 = vmatprep.subr.bf16.mxu0 0
        %4193 = vmatpush1.bf16.msra.mxu0 0
        %4194 = vmatprep.subr.bf16.mxu0 0
        %4195 = vmatpush1.bf16.msra.mxu0 0
        %4196 = vmatprep.subr.bf16.mxu0 0
        %4197 = vmatpush1.bf16.msra.mxu0 0
        %4198 = vmatprep.subr.bf16.mxu0 0
        %4199 = vmatpush1.bf16.msra.mxu0 0
        %4200 = vmatprep.subr.bf16.mxu0 0
        %4201 = vmatpush1.bf16.msra.mxu0 0
        %4202 = vmatprep.subr.bf16.mxu0 0
        %4203 = vmatpush1.bf16.msra.mxu0 0
        %4204 = vmatprep.subr.bf16.mxu0 0
        %4205 = vmatpush1.bf16.msra.mxu0 0
        %4206 = vmatprep.subr.bf16.mxu0 0
        %4207 = vmatpush1.bf16.msra.mxu0 0
        %4208 = vmatprep.mubr.bf16.mxu0 0
        %4209 = vmatmul.mubr.bf16.gmra.mrb[0].mxu0 %v4174
        %v4210 = vpop.f32.mrb[0].mxu0
        %v4211 = vadd.f32 0.0, %v4210
        %v4212 = vpop.f32.mrb[0].mxu0
        %v4213 = vpop.f32.mrb[0].mxu0
        %v4214 = vadd.f32 0.0, %v4213
        %v4215 = vpop.f32.mrb[0].mxu0
        %4216 = vdwg.mxu0
        %v4218 = vsel %vm3040, %v3755, 0
        %4220 = vmatprep.subr.bf16.mxu0 0
        %4221 = vmatpush1.bf16.msra.mxu0 %v1513
        %4222 = vmatprep.subr.bf16.mxu0 0
        %4223 = vmatpush1.bf16.msra.mxu0 0
        %4224 = vmatprep.subr.bf16.mxu0 0
        %4225 = vmatpush1.bf16.msra.mxu0 0
        %4226 = vmatprep.subr.bf16.mxu0 0
        %4227 = vmatpush1.bf16.msra.mxu0 0
        %4228 = vmatprep.subr.bf16.mxu0 0
        %4229 = vmatpush1.bf16.msra.mxu0 0
        %4230 = vmatprep.subr.bf16.mxu0 0
        %4231 = vmatpush1.bf16.msra.mxu0 0
        %4232 = vmatprep.subr.bf16.mxu0 0
        %4233 = vmatpush1.bf16.msra.mxu0 0
        %4234 = vmatprep.subr.bf16.mxu0 0
        %4235 = vmatpush1.bf16.msra.mxu0 0
        %4236 = vmatprep.subr.bf16.mxu0 0
        %4237 = vmatpush1.bf16.msra.mxu0 0
        %4238 = vmatprep.subr.bf16.mxu0 0
        %4239 = vmatpush1.bf16.msra.mxu0 0
        %4240 = vmatprep.subr.bf16.mxu0 0
        %4241 = vmatpush1.bf16.msra.mxu0 0
        %4242 = vmatprep.subr.bf16.mxu0 0
        %4243 = vmatpush1.bf16.msra.mxu0 0
        %4244 = vmatprep.subr.bf16.mxu0 0
        %4245 = vmatpush1.bf16.msra.mxu0 0
        %4246 = vmatprep.subr.bf16.mxu0 0
        %4247 = vmatpush1.bf16.msra.mxu0 0
        %4248 = vmatprep.subr.bf16.mxu0 0
        %4249 = vmatpush1.bf16.msra.mxu0 0
        %4250 = vmatprep.subr.bf16.mxu0 0
        %4251 = vmatpush1.bf16.msra.mxu0 0
        %4252 = vmatprep.mubr.bf16.mxu0 0
        %4253 = vmatmul.mubr.bf16.gmra.mrb[0].mxu0 %v4218
        %v4254 = vpop.f32.mrb[0].mxu0
        %v4255 = vadd.f32 0.0, %v4254
        %v4256 = vpop.f32.mrb[0].mxu0
        %v4257 = vpop.f32.mrb[0].mxu0
        %v4258 = vadd.f32 0.0, %v4257
        %v4259 = vpop.f32.mrb[0].mxu0
        %4260 = vdwg.mxu0
        %v4262 = vsel %vm3040, %v3756, 0
        %4264 = vmatprep.subr.bf16.mxu0 0
        %4265 = vmatpush1.bf16.msra.mxu0 %v1514
        %4266 = vmatprep.subr.bf16.mxu0 0
        %4267 = vmatpush1.bf16.msra.mxu0 0
        %4268 = vmatprep.subr.bf16.mxu0 0
        %4269 = vmatpush1.bf16.msra.mxu0 0
        %4270 = vmatprep.subr.bf16.mxu0 0
        %4271 = vmatpush1.bf16.msra.mxu0 0
        %4272 = vmatprep.subr.bf16.mxu0 0
        %4273 = vmatpush1.bf16.msra.mxu0 0
        %4274 = vmatprep.subr.bf16.mxu0 0
        %4275 = vmatpush1.bf16.msra.mxu0 0
        %4276 = vmatprep.subr.bf16.mxu0 0
        %4277 = vmatpush1.bf16.msra.mxu0 0
        %4278 = vmatprep.subr.bf16.mxu0 0
        %4279 = vmatpush1.bf16.msra.mxu0 0
        %4280 = vmatprep.subr.bf16.mxu0 0
        %4281 = vmatpush1.bf16.msra.mxu0 0
        %4282 = vmatprep.subr.bf16.mxu0 0
        %4283 = vmatpush1.bf16.msra.mxu0 0
        %4284 = vmatprep.subr.bf16.mxu0 0
        %4285 = vmatpush1.bf16.msra.mxu0 0
        %4286 = vmatprep.subr.bf16.mxu0 0
        %4287 = vmatpush1.bf16.msra.mxu0 0
        %4288 = vmatprep.subr.bf16.mxu0 0
        %4289 = vmatpush1.bf16.msra.mxu0 0
        %4290 = vmatprep.subr.bf16.mxu0 0
        %4291 = vmatpush1.bf16.msra.mxu0 0
        %4292 = vmatprep.subr.bf16.mxu0 0
        %4293 = vmatpush1.bf16.msra.mxu0 0
        %4294 = vmatprep.subr.bf16.mxu0 0
        %4295 = vmatpush1.bf16.msra.mxu0 0
        %4296 = vmatprep.mubr.bf16.mxu0 0
        %4297 = vmatmul.mubr.bf16.gmra.mrb[0].mxu0 %v4262
        %v4298 = vpop.f32.mrb[0].mxu0
        %v4299 = vadd.f32 0.0, %v4298
        %v4300 = vpop.f32.mrb[0].mxu0
        %v4301 = vpop.f32.mrb[0].mxu0
        %v4302 = vadd.f32 0.0, %v4301
        %v4303 = vpop.f32.mrb[0].mxu0
        %4304 = vdwg.mxu0
        %v4306 = vsel %vm3040, %v3757, 0
        %4308 = vmatprep.subr.bf16.mxu0 0
        %4309 = vmatpush1.bf16.msra.mxu0 %v1515
        %4310 = vmatprep.subr.bf16.mxu0 0
        %4311 = vmatpush1.bf16.msra.mxu0 0
        %4312 = vmatprep.subr.bf16.mxu0 0
        %4313 = vmatpush1.bf16.msra.mxu0 0
        %4314 = vmatprep.subr.bf16.mxu0 0
        %4315 = vmatpush1.bf16.msra.mxu0 0
        %4316 = vmatprep.subr.bf16.mxu0 0
        %4317 = vmatpush1.bf16.msra.mxu0 0
        %4318 = vmatprep.subr.bf16.mxu0 0
        %4319 = vmatpush1.bf16.msra.mxu0 0
        %4320 = vmatprep.subr.bf16.mxu0 0
        %4321 = vmatpush1.bf16.msra.mxu0 0
        %4322 = vmatprep.subr.bf16.mxu0 0
        %4323 = vmatpush1.bf16.msra.mxu0 0
        %4324 = vmatprep.subr.bf16.mxu0 0
        %4325 = vmatpush1.bf16.msra.mxu0 0
        %4326 = vmatprep.subr.bf16.mxu0 0
        %4327 = vmatpush1.bf16.msra.mxu0 0
        %4328 = vmatprep.subr.bf16.mxu0 0
        %4329 = vmatpush1.bf16.msra.mxu0 0
        %4330 = vmatprep.subr.bf16.mxu0 0
        %4331 = vmatpush1.bf16.msra.mxu0 0
        %4332 = vmatprep.subr.bf16.mxu0 0
        %4333 = vmatpush1.bf16.msra.mxu0 0
        %4334 = vmatprep.subr.bf16.mxu0 0
        %4335 = vmatpush1.bf16.msra.mxu0 0
        %4336 = vmatprep.subr.bf16.mxu0 0
        %4337 = vmatpush1.bf16.msra.mxu0 0
        %4338 = vmatprep.subr.bf16.mxu0 0
        %4339 = vmatpush1.bf16.msra.mxu0 0
        %4340 = vmatprep.mubr.bf16.mxu0 0
        %4341 = vmatmul.mubr.bf16.gmra.mrb[0].mxu0 %v4306
        %v4342 = vpop.f32.mrb[0].mxu0
        %v4343 = vadd.f32 0.0, %v4342
        %v4344 = vpop.f32.mrb[0].mxu0
        %v4345 = vpop.f32.mrb[0].mxu0
        %v4346 = vadd.f32 0.0, %v4345
        %v4347 = vpop.f32.mrb[0].mxu0
        %4348 = vdwg.mxu0
        %v4350 = vsel %vm3040, %v3758, 0
        %4352 = vmatprep.subr.bf16.mxu0 0
        %4353 = vmatpush1.bf16.msra.mxu0 %v1516
        %4354 = vmatprep.subr.bf16.mxu0 0
        %4355 = vmatpush1.bf16.msra.mxu0 0
        %4356 = vmatprep.subr.bf16.mxu0 0
        %4357 = vmatpush1.bf16.msra.mxu0 0
        %4358 = vmatprep.subr.bf16.mxu0 0
        %4359 = vmatpush1.bf16.msra.mxu0 0
        %4360 = vmatprep.subr.bf16.mxu0 0
        %4361 = vmatpush1.bf16.msra.mxu0 0
        %4362 = vmatprep.subr.bf16.mxu0 0
        %4363 = vmatpush1.bf16.msra.mxu0 0
        %4364 = vmatprep.subr.bf16.mxu0 0
        %4365 = vmatpush1.bf16.msra.mxu0 0
        %4366 = vmatprep.subr.bf16.mxu0 0
        %4367 = vmatpush1.bf16.msra.mxu0 0
        %4368 = vmatprep.subr.bf16.mxu0 0
        %4369 = vmatpush1.bf16.msra.mxu0 0
        %4370 = vmatprep.subr.bf16.mxu0 0
        %4371 = vmatpush1.bf16.msra.mxu0 0
        %4372 = vmatprep.subr.bf16.mxu0 0
        %4373 = vmatpush1.bf16.msra.mxu0 0
        %4374 = vmatprep.subr.bf16.mxu0 0
        %4375 = vmatpush1.bf16.msra.mxu0 0
        %4376 = vmatprep.subr.bf16.mxu0 0
        %4377 = vmatpush1.bf16.msra.mxu0 0
        %4378 = vmatprep.subr.bf16.mxu0 0
        %4379 = vmatpush1.bf16.msra.mxu0 0
        %4380 = vmatprep.subr.bf16.mxu0 0
        %4381 = vmatpush1.bf16.msra.mxu0 0
        %4382 = vmatprep.subr.bf16.mxu0 0
        %4383 = vmatpush1.bf16.msra.mxu0 0
        %4384 = vmatprep.mubr.bf16.mxu0 0
        %4385 = vmatmul.mubr.bf16.gmra.mrb[0].mxu0 %v4350
        %v4386 = vpop.f32.mrb[0].mxu0
        %v4387 = vadd.f32 0.0, %v4386
        %v4388 = vpop.f32.mrb[0].mxu0
        %v4389 = vpop.f32.mrb[0].mxu0
        %v4390 = vadd.f32 0.0, %v4389
        %v4391 = vpop.f32.mrb[0].mxu0
        %4392 = vdwg.mxu0
        %v4394 = vsel %vm3040, %v3759, 0
        %4396 = vmatprep.subr.bf16.mxu0 0
        %4397 = vmatpush1.bf16.msra.mxu0 %v1517
        %4398 = vmatprep.subr.bf16.mxu0 0
        %4399 = vmatpush1.bf16.msra.mxu0 0
        %4400 = vmatprep.subr.bf16.mxu0 0
        %4401 = vmatpush1.bf16.msra.mxu0 0
        %4402 = vmatprep.subr.bf16.mxu0 0
        %4403 = vmatpush1.bf16.msra.mxu0 0
        %4404 = vmatprep.subr.bf16.mxu0 0
        %4405 = vmatpush1.bf16.msra.mxu0 0
        %4406 = vmatprep.subr.bf16.mxu0 0
        %4407 = vmatpush1.bf16.msra.mxu0 0
        %4408 = vmatprep.subr.bf16.mxu0 0
        %4409 = vmatpush1.bf16.msra.mxu0 0
        %4410 = vmatprep.subr.bf16.mxu0 0
        %4411 = vmatpush1.bf16.msra.mxu0 0
        %4412 = vmatprep.subr.bf16.mxu0 0
        %4413 = vmatpush1.bf16.msra.mxu0 0
        %4414 = vmatprep.subr.bf16.mxu0 0
        %4415 = vmatpush1.bf16.msra.mxu0 0
        %4416 = vmatprep.subr.bf16.mxu0 0
        %4417 = vmatpush1.bf16.msra.mxu0 0
        %4418 = vmatprep.subr.bf16.mxu0 0
        %4419 = vmatpush1.bf16.msra.mxu0 0
        %4420 = vmatprep.subr.bf16.mxu0 0
        %4421 = vmatpush1.bf16.msra.mxu0 0
        %4422 = vmatprep.subr.bf16.mxu0 0
        %4423 = vmatpush1.bf16.msra.mxu0 0
        %4424 = vmatprep.subr.bf16.mxu0 0
        %4425 = vmatpush1.bf16.msra.mxu0 0
        %4426 = vmatprep.subr.bf16.mxu0 0
        %4427 = vmatpush1.bf16.msra.mxu0 0
        %4428 = vmatprep.mubr.bf16.mxu0 0
        %4429 = vmatmul.mubr.bf16.gmra.mrb[0].mxu0 %v4394
        %v4430 = vpop.f32.mrb[0].mxu0
        %v4431 = vadd.f32 0.0, %v4430
        %v4432 = vpop.f32.mrb[0].mxu0
        %v4433 = vpop.f32.mrb[0].mxu0
        %v4434 = vadd.f32 0.0, %v4433
        %v4435 = vpop.f32.mrb[0].mxu0
        %4436 = vdwg.mxu0
        %v4438 = vsel %vm3040, %v3760, 0
        %4440 = vmatprep.subr.bf16.mxu0 0
        %4441 = vmatpush1.bf16.msra.mxu0 %v1518
        %4442 = vmatprep.subr.bf16.mxu0 0
        %4443 = vmatpush1.bf16.msra.mxu0 0
        %4444 = vmatprep.subr.bf16.mxu0 0
        %4445 = vmatpush1.bf16.msra.mxu0 0
        %4446 = vmatprep.subr.bf16.mxu0 0
        %4447 = vmatpush1.bf16.msra.mxu0 0
        %4448 = vmatprep.subr.bf16.mxu0 0
        %4449 = vmatpush1.bf16.msra.mxu0 0
        %4450 = vmatprep.subr.bf16.mxu0 0
        %4451 = vmatpush1.bf16.msra.mxu0 0
        %4452 = vmatprep.subr.bf16.mxu0 0
        %4453 = vmatpush1.bf16.msra.mxu0 0
        %4454 = vmatprep.subr.bf16.mxu0 0
        %4455 = vmatpush1.bf16.msra.mxu0 0
        %4456 = vmatprep.subr.bf16.mxu0 0
        %4457 = vmatpush1.bf16.msra.mxu0 0
        %4458 = vmatprep.subr.bf16.mxu0 0
        %4459 = vmatpush1.bf16.msra.mxu0 0
        %4460 = vmatprep.subr.bf16.mxu0 0
        %4461 = vmatpush1.bf16.msra.mxu0 0
        %4462 = vmatprep.subr.bf16.mxu0 0
        %4463 = vmatpush1.bf16.msra.mxu0 0
        %4464 = vmatprep.subr.bf16.mxu0 0
        %4465 = vmatpush1.bf16.msra.mxu0 0
        %4466 = vmatprep.subr.bf16.mxu0 0
        %4467 = vmatpush1.bf16.msra.mxu0 0
        %4468 = vmatprep.subr.bf16.mxu0 0
        %4469 = vmatpush1.bf16.msra.mxu0 0
        %4470 = vmatprep.subr.bf16.mxu0 0
        %4471 = vmatpush1.bf16.msra.mxu0 0
        %4472 = vmatprep.mubr.bf16.mxu0 0
        %4473 = vmatmul.mubr.bf16.gmra.mrb[0].mxu0 %v4438
        %v4474 = vpop.f32.mrb[0].mxu0
        %v4475 = vadd.f32 0.0, %v4474
        %v4476 = vpop.f32.mrb[0].mxu0
        %v4477 = vpop.f32.mrb[0].mxu0
        %v4478 = vadd.f32 0.0, %v4477
        %v4479 = vpop.f32.mrb[0].mxu0
        %4480 = vdwg.mxu0
        %v4482 = vsel %vm3040, %v3761, 0
        %4484 = vmatprep.subr.bf16.mxu0 0
        %4485 = vmatpush1.bf16.msra.mxu0 %v1519
        %4486 = vmatprep.subr.bf16.mxu0 0
        %4487 = vmatpush1.bf16.msra.mxu0 0
        %4488 = vmatprep.subr.bf16.mxu0 0
        %4489 = vmatpush1.bf16.msra.mxu0 0
        %4490 = vmatprep.subr.bf16.mxu0 0
        %4491 = vmatpush1.bf16.msra.mxu0 0
        %4492 = vmatprep.subr.bf16.mxu0 0
        %4493 = vmatpush1.bf16.msra.mxu0 0
        %4494 = vmatprep.subr.bf16.mxu0 0
        %4495 = vmatpush1.bf16.msra.mxu0 0
        %4496 = vmatprep.subr.bf16.mxu0 0
        %4497 = vmatpush1.bf16.msra.mxu0 0
        %4498 = vmatprep.subr.bf16.mxu0 0
        %4499 = vmatpush1.bf16.msra.mxu0 0
        %4500 = vmatprep.subr.bf16.mxu0 0
        %4501 = vmatpush1.bf16.msra.mxu0 0
        %4502 = vmatprep.subr.bf16.mxu0 0
        %4503 = vmatpush1.bf16.msra.mxu0 0
        %4504 = vmatprep.subr.bf16.mxu0 0
        %4505 = vmatpush1.bf16.msra.mxu0 0
        %4506 = vmatprep.subr.bf16.mxu0 0
        %4507 = vmatpush1.bf16.msra.mxu0 0
        %4508 = vmatprep.subr.bf16.mxu0 0
        %4509 = vmatpush1.bf16.msra.mxu0 0
        %4510 = vmatprep.subr.bf16.mxu0 0
        %4511 = vmatpush1.bf16.msra.mxu0 0
        %4512 = vmatprep.subr.bf16.mxu0 0
        %4513 = vmatpush1.bf16.msra.mxu0 0
        %4514 = vmatprep.subr.bf16.mxu0 0
        %4515 = vmatpush1.bf16.msra.mxu0 0
        %4516 = vmatprep.mubr.bf16.mxu0 0
        %4517 = vmatmul.mubr.bf16.gmra.mrb[0].mxu0 %v4482
        %v4518 = vpop.f32.mrb[0].mxu0
        %v4519 = vadd.f32 0.0, %v4518
        %v4520 = vpop.f32.mrb[0].mxu0
        %v4521 = vpop.f32.mrb[0].mxu0
        %v4522 = vadd.f32 0.0, %v4521
        %v4523 = vpop.f32.mrb[0].mxu0
        %4524 = vdwg.mxu0
        %v4526 = vsel %vm3040, %v3762, 0
        %4528 = vmatprep.subr.bf16.mxu0 0
        %4529 = vmatpush1.bf16.msra.mxu0 %v1520
        %4530 = vmatprep.subr.bf16.mxu0 0
        %4531 = vmatpush1.bf16.msra.mxu0 0
        %4532 = vmatprep.subr.bf16.mxu0 0
        %4533 = vmatpush1.bf16.msra.mxu0 0
        %4534 = vmatprep.subr.bf16.mxu0 0
        %4535 = vmatpush1.bf16.msra.mxu0 0
        %4536 = vmatprep.subr.bf16.mxu0 0
        %4537 = vmatpush1.bf16.msra.mxu0 0
        %4538 = vmatprep.subr.bf16.mxu0 0
        %4539 = vmatpush1.bf16.msra.mxu0 0
        %4540 = vmatprep.subr.bf16.mxu0 0
        %4541 = vmatpush1.bf16.msra.mxu0 0
        %4542 = vmatprep.subr.bf16.mxu0 0
        %4543 = vmatpush1.bf16.msra.mxu0 0
        %4544 = vmatprep.subr.bf16.mxu0 0
        %4545 = vmatpush1.bf16.msra.mxu0 0
        %4546 = vmatprep.subr.bf16.mxu0 0
        %4547 = vmatpush1.bf16.msra.mxu0 0
        %4548 = vmatprep.subr.bf16.mxu0 0
        %4549 = vmatpush1.bf16.msra.mxu0 0
        %4550 = vmatprep.subr.bf16.mxu0 0
        %4551 = vmatpush1.bf16.msra.mxu0 0
        %4552 = vmatprep.subr.bf16.mxu0 0
        %4553 = vmatpush1.bf16.msra.mxu0 0
        %4554 = vmatprep.subr.bf16.mxu0 0
        %4555 = vmatpush1.bf16.msra.mxu0 0
        %4556 = vmatprep.subr.bf16.mxu0 0
        %4557 = vmatpush1.bf16.msra.mxu0 0
        %4558 = vmatprep.subr.bf16.mxu0 0
        %4559 = vmatpush1.bf16.msra.mxu0 0
        %4560 = vmatprep.mubr.bf16.mxu0 0
        %4561 = vmatmul.mubr.bf16.gmra.mrb[0].mxu0 %v4526
        %v4562 = vpop.f32.mrb[0].mxu0
        %v4563 = vadd.f32 0.0, %v4562
        %v4564 = vpop.f32.mrb[0].mxu0
        %v4565 = vpop.f32.mrb[0].mxu0
        %v4566 = vadd.f32 0.0, %v4565
        %v4567 = vpop.f32.mrb[0].mxu0
        %4568 = vdwg.mxu0
        %v4570 = vsel %vm3040, %v3763, 0
        %4572 = vmatprep.subr.bf16.mxu0 0
        %4573 = vmatpush1.bf16.msra.mxu0 %v1521
        %4574 = vmatprep.subr.bf16.mxu0 0
        %4575 = vmatpush1.bf16.msra.mxu0 0
        %4576 = vmatprep.subr.bf16.mxu0 0
        %4577 = vmatpush1.bf16.msra.mxu0 0
        %4578 = vmatprep.subr.bf16.mxu0 0
        %4579 = vmatpush1.bf16.msra.mxu0 0
        %4580 = vmatprep.subr.bf16.mxu0 0
        %4581 = vmatpush1.bf16.msra.mxu0 0
        %4582 = vmatprep.subr.bf16.mxu0 0
        %4583 = vmatpush1.bf16.msra.mxu0 0
        %4584 = vmatprep.subr.bf16.mxu0 0
        %4585 = vmatpush1.bf16.msra.mxu0 0
        %4586 = vmatprep.subr.bf16.mxu0 0
        %4587 = vmatpush1.bf16.msra.mxu0 0
        %4588 = vmatprep.subr.bf16.mxu0 0
        %4589 = vmatpush1.bf16.msra.mxu0 0
        %4590 = vmatprep.subr.bf16.mxu0 0
        %4591 = vmatpush1.bf16.msra.mxu0 0
        %4592 = vmatprep.subr.bf16.mxu0 0
        %4593 = vmatpush1.bf16.msra.mxu0 0
        %4594 = vmatprep.subr.bf16.mxu0 0
        %4595 = vmatpush1.bf16.msra.mxu0 0
        %4596 = vmatprep.subr.bf16.mxu0 0
        %4597 = vmatpush1.bf16.msra.mxu0 0
        %4598 = vmatprep.subr.bf16.mxu0 0
        %4599 = vmatpush1.bf16.msra.mxu0 0
        %4600 = vmatprep.subr.bf16.mxu0 0
        %4601 = vmatpush1.bf16.msra.mxu0 0
        %4602 = vmatprep.subr.bf16.mxu0 0
        %4603 = vmatpush1.bf16.msra.mxu0 0
        %4604 = vmatprep.mubr.bf16.mxu0 0
        %4605 = vmatmul.mubr.bf16.gmra.mrb[0].mxu0 %v4570
        %v4606 = vpop.f32.mrb[0].mxu0
        %v4607 = vadd.f32 0.0, %v4606
        %v4608 = vpop.f32.mrb[0].mxu0
        %v4609 = vpop.f32.mrb[0].mxu0
        %v4610 = vadd.f32 0.0, %v4609
        %v4611 = vpop.f32.mrb[0].mxu0
        %4612 = vdwg.mxu0
        %v4614 = vsel %vm3040, %v3764, 0
        %4616 = vmatprep.subr.bf16.mxu0 0
        %4617 = vmatpush1.bf16.msra.mxu0 %v1522
        %4618 = vmatprep.subr.bf16.mxu0 0
        %4619 = vmatpush1.bf16.msra.mxu0 0
        %4620 = vmatprep.subr.bf16.mxu0 0
        %4621 = vmatpush1.bf16.msra.mxu0 0
        %4622 = vmatprep.subr.bf16.mxu0 0
        %4623 = vmatpush1.bf16.msra.mxu0 0
        %4624 = vmatprep.subr.bf16.mxu0 0
        %4625 = vmatpush1.bf16.msra.mxu0 0
        %4626 = vmatprep.subr.bf16.mxu0 0
        %4627 = vmatpush1.bf16.msra.mxu0 0
        %4628 = vmatprep.subr.bf16.mxu0 0
        %4629 = vmatpush1.bf16.msra.mxu0 0
        %4630 = vmatprep.subr.bf16.mxu0 0
        %4631 = vmatpush1.bf16.msra.mxu0 0
        %4632 = vmatprep.subr.bf16.mxu0 0
        %4633 = vmatpush1.bf16.msra.mxu0 0
        %4634 = vmatprep.subr.bf16.mxu0 0
        %4635 = vmatpush1.bf16.msra.mxu0 0
        %4636 = vmatprep.subr.bf16.mxu0 0
        %4637 = vmatpush1.bf16.msra.mxu0 0
        %4638 = vmatprep.subr.bf16.mxu0 0
        %4639 = vmatpush1.bf16.msra.mxu0 0
        %4640 = vmatprep.subr.bf16.mxu0 0
        %4641 = vmatpush1.bf16.msra.mxu0 0
        %4642 = vmatprep.subr.bf16.mxu0 0
        %4643 = vmatpush1.bf16.msra.mxu0 0
        %4644 = vmatprep.subr.bf16.mxu0 0
        %4645 = vmatpush1.bf16.msra.mxu0 0
        %4646 = vmatprep.subr.bf16.mxu0 0
        %4647 = vmatpush1.bf16.msra.mxu0 0
        %4648 = vmatprep.mubr.bf16.mxu0 0
        %4649 = vmatmul.mubr.bf16.gmra.mrb[0].mxu0 %v4614
        %v4650 = vpop.f32.mrb[0].mxu0
        %v4651 = vadd.f32 0.0, %v4650
        %v4652 = vpop.f32.mrb[0].mxu0
        %v4653 = vpop.f32.mrb[0].mxu0
        %v4654 = vadd.f32 0.0, %v4653
        %v4655 = vpop.f32.mrb[0].mxu0
        %4656 = vdwg.mxu0
        %v4658 = vsel %vm3040, %v3765, 0
        %4660 = vmatprep.subr.bf16.mxu0 0
        %4661 = vmatpush1.bf16.msra.mxu0 %v1523
        %4662 = vmatprep.subr.bf16.mxu0 0
        %4663 = vmatpush1.bf16.msra.mxu0 0
        %4664 = vmatprep.subr.bf16.mxu0 0
        %4665 = vmatpush1.bf16.msra.mxu0 0
        %4666 = vmatprep.subr.bf16.mxu0 0
        %4667 = vmatpush1.bf16.msra.mxu0 0
        %4668 = vmatprep.subr.bf16.mxu0 0
        %4669 = vmatpush1.bf16.msra.mxu0 0
        %4670 = vmatprep.subr.bf16.mxu0 0
        %4671 = vmatpush1.bf16.msra.mxu0 0
        %4672 = vmatprep.subr.bf16.mxu0 0
        %4673 = vmatpush1.bf16.msra.mxu0 0
        %4674 = vmatprep.subr.bf16.mxu0 0
        %4675 = vmatpush1.bf16.msra.mxu0 0
        %4676 = vmatprep.subr.bf16.mxu0 0
        %4677 = vmatpush1.bf16.msra.mxu0 0
        %4678 = vmatprep.subr.bf16.mxu0 0
        %4679 = vmatpush1.bf16.msra.mxu0 0
        %4680 = vmatprep.subr.bf16.mxu0 0
        %4681 = vmatpush1.bf16.msra.mxu0 0
        %4682 = vmatprep.subr.bf16.mxu0 0
        %4683 = vmatpush1.bf16.msra.mxu0 0
        %4684 = vmatprep.subr.bf16.mxu0 0
        %4685 = vmatpush1.bf16.msra.mxu0 0
        %4686 = vmatprep.subr.bf16.mxu0 0
        %4687 = vmatpush1.bf16.msra.mxu0 0
        %4688 = vmatprep.subr.bf16.mxu0 0
        %4689 = vmatpush1.bf16.msra.mxu0 0
        %4690 = vmatprep.subr.bf16.mxu0 0
        %4691 = vmatpush1.bf16.msra.mxu0 0
        %4692 = vmatprep.mubr.bf16.mxu0 0
        %4693 = vmatmul.mubr.bf16.gmra.mrb[0].mxu0 %v4658
        %v4694 = vpop.f32.mrb[0].mxu0
        %v4695 = vadd.f32 0.0, %v4694
        %v4696 = vpop.f32.mrb[0].mxu0
        %v4697 = vpop.f32.mrb[0].mxu0
        %v4698 = vadd.f32 0.0, %v4697
        %v4699 = vpop.f32.mrb[0].mxu0
        %4700 = vdwg.mxu0
        %v4702 = vsel %vm3040, %v3766, 0
        %4704 = vmatprep.subr.bf16.mxu0 0
        %4705 = vmatpush1.bf16.msra.mxu0 %v1524
        %4706 = vmatprep.subr.bf16.mxu0 0
        %4707 = vmatpush1.bf16.msra.mxu0 0
        %4708 = vmatprep.subr.bf16.mxu0 0
        %4709 = vmatpush1.bf16.msra.mxu0 0
        %4710 = vmatprep.subr.bf16.mxu0 0
        %4711 = vmatpush1.bf16.msra.mxu0 0
        %4712 = vmatprep.subr.bf16.mxu0 0
        %4713 = vmatpush1.bf16.msra.mxu0 0
        %4714 = vmatprep.subr.bf16.mxu0 0
        %4715 = vmatpush1.bf16.msra.mxu0 0
        %4716 = vmatprep.subr.bf16.mxu0 0
        %4717 = vmatpush1.bf16.msra.mxu0 0
        %4718 = vmatprep.subr.bf16.mxu0 0
        %4719 = vmatpush1.bf16.msra.mxu0 0
        %4720 = vmatprep.subr.bf16.mxu0 0
        %4721 = vmatpush1.bf16.msra.mxu0 0
        %4722 = vmatprep.subr.bf16.mxu0 0
        %4723 = vmatpush1.bf16.msra.mxu0 0
        %4724 = vmatprep.subr.bf16.mxu0 0
        %4725 = vmatpush1.bf16.msra.mxu0 0
        %4726 = vmatprep.subr.bf16.mxu0 0
        %4727 = vmatpush1.bf16.msra.mxu0 0
        %4728 = vmatprep.subr.bf16.mxu0 0
        %4729 = vmatpush1.bf16.msra.mxu0 0
        %4730 = vmatprep.subr.bf16.mxu0 0
        %4731 = vmatpush1.bf16.msra.mxu0 0
        %4732 = vmatprep.subr.bf16.mxu0 0
        %4733 = vmatpush1.bf16.msra.mxu0 0
        %4734 = vmatprep.subr.bf16.mxu0 0
        %4735 = vmatpush1.bf16.msra.mxu0 0
        %4736 = vmatprep.mubr.bf16.mxu0 0
        %4737 = vmatmul.mubr.bf16.gmra.mrb[0].mxu0 %v4702
        %v4738 = vpop.f32.mrb[0].mxu0
        %v4739 = vadd.f32 0.0, %v4738
        %v4740 = vpop.f32.mrb[0].mxu0
        %v4741 = vpop.f32.mrb[0].mxu0
        %v4742 = vadd.f32 0.0, %v4741
        %v4743 = vpop.f32.mrb[0].mxu0
        %4744 = vdwg.mxu0
        %v4746 = vsel %vm3040, %v3767, 0
        %4748 = vmatprep.subr.bf16.mxu0 0
        %4749 = vmatpush1.bf16.msra.mxu0 %v1525
        %4750 = vmatprep.subr.bf16.mxu0 0
        %4751 = vmatpush1.bf16.msra.mxu0 0
        %4752 = vmatprep.subr.bf16.mxu0 0
        %4753 = vmatpush1.bf16.msra.mxu0 0
        %4754 = vmatprep.subr.bf16.mxu0 0
        %4755 = vmatpush1.bf16.msra.mxu0 0
        %4756 = vmatprep.subr.bf16.mxu0 0
        %4757 = vmatpush1.bf16.msra.mxu0 0
        %4758 = vmatprep.subr.bf16.mxu0 0
        %4759 = vmatpush1.bf16.msra.mxu0 0
        %4760 = vmatprep.subr.bf16.mxu0 0
        %4761 = vmatpush1.bf16.msra.mxu0 0
        %4762 = vmatprep.subr.bf16.mxu0 0
        %4763 = vmatpush1.bf16.msra.mxu0 0
        %4764 = vmatprep.subr.bf16.mxu0 0
        %4765 = vmatpush1.bf16.msra.mxu0 0
        %4766 = vmatprep.subr.bf16.mxu0 0
        %4767 = vmatpush1.bf16.msra.mxu0 0
        %4768 = vmatprep.subr.bf16.mxu0 0
        %4769 = vmatpush1.bf16.msra.mxu0 0
        %4770 = vmatprep.subr.bf16.mxu0 0
        %4771 = vmatpush1.bf16.msra.mxu0 0
        %4772 = vmatprep.subr.bf16.mxu0 0
        %4773 = vmatpush1.bf16.msra.mxu0 0
        %4774 = vmatprep.subr.bf16.mxu0 0
        %4775 = vmatpush1.bf16.msra.mxu0 0
        %4776 = vmatprep.subr.bf16.mxu0 0
        %4777 = vmatpush1.bf16.msra.mxu0 0
        %4778 = vmatprep.subr.bf16.mxu0 0
        %4779 = vmatpush1.bf16.msra.mxu0 0
        %4780 = vmatprep.mubr.bf16.mxu0 0
        %4781 = vmatmul.mubr.bf16.gmra.mrb[0].mxu0 %v4746
        %v4782 = vpop.f32.mrb[0].mxu0
        %v4783 = vadd.f32 0.0, %v4782
        %v4784 = vpop.f32.mrb[0].mxu0
        %v4785 = vpop.f32.mrb[0].mxu0
        %v4786 = vadd.f32 0.0, %v4785
        %v4787 = vpop.f32.mrb[0].mxu0
        %4788 = vdwg.mxu0
        %v4790 = vsel %vm3040, %v3768, 0
        %4792 = vmatprep.subr.bf16.mxu0 0
        %4793 = vmatpush1.bf16.msra.mxu0 %v1526
        %4794 = vmatprep.subr.bf16.mxu0 0
        %4795 = vmatpush1.bf16.msra.mxu0 0
        %4796 = vmatprep.subr.bf16.mxu0 0
        %4797 = vmatpush1.bf16.msra.mxu0 0
        %4798 = vmatprep.subr.bf16.mxu0 0
        %4799 = vmatpush1.bf16.msra.mxu0 0
        %4800 = vmatprep.subr.bf16.mxu0 0
        %4801 = vmatpush1.bf16.msra.mxu0 0
        %4802 = vmatprep.subr.bf16.mxu0 0
        %4803 = vmatpush1.bf16.msra.mxu0 0
        %4804 = vmatprep.subr.bf16.mxu0 0
        %4805 = vmatpush1.bf16.msra.mxu0 0
        %4806 = vmatprep.subr.bf16.mxu0 0
        %4807 = vmatpush1.bf16.msra.mxu0 0
        %4808 = vmatprep.subr.bf16.mxu0 0
        %4809 = vmatpush1.bf16.msra.mxu0 0
        %4810 = vmatprep.subr.bf16.mxu0 0
        %4811 = vmatpush1.bf16.msra.mxu0 0
        %4812 = vmatprep.subr.bf16.mxu0 0
        %4813 = vmatpush1.bf16.msra.mxu0 0
        %4814 = vmatprep.subr.bf16.mxu0 0
        %4815 = vmatpush1.bf16.msra.mxu0 0
        %4816 = vmatprep.subr.bf16.mxu0 0
        %4817 = vmatpush1.bf16.msra.mxu0 0
        %4818 = vmatprep.subr.bf16.mxu0 0
        %4819 = vmatpush1.bf16.msra.mxu0 0
        %4820 = vmatprep.subr.bf16.mxu0 0
        %4821 = vmatpush1.bf16.msra.mxu0 0
        %4822 = vmatprep.subr.bf16.mxu0 0
        %4823 = vmatpush1.bf16.msra.mxu0 0
        %4824 = vmatprep.mubr.bf16.mxu0 0
        %4825 = vmatmul.mubr.bf16.gmra.mrb[0].mxu0 %v4790
        %v4826 = vpop.f32.mrb[0].mxu0
        %v4827 = vadd.f32 0.0, %v4826
        %v4828 = vpop.f32.mrb[0].mxu0
        %v4829 = vpop.f32.mrb[0].mxu0
        %v4830 = vadd.f32 0.0, %v4829
        %v4831 = vpop.f32.mrb[0].mxu0
        %4832 = vdwg.mxu0
        %v4834 = vsel %vm3040, %v3769, 0
        %4836 = vmatprep.subr.bf16.mxu0 0
        %4837 = vmatpush1.bf16.msra.mxu0 %v1527
        %4838 = vmatprep.subr.bf16.mxu0 0
        %4839 = vmatpush1.bf16.msra.mxu0 0
        %4840 = vmatprep.subr.bf16.mxu0 0
        %4841 = vmatpush1.bf16.msra.mxu0 0
        %4842 = vmatprep.subr.bf16.mxu0 0
        %4843 = vmatpush1.bf16.msra.mxu0 0
        %4844 = vmatprep.subr.bf16.mxu0 0
        %4845 = vmatpush1.bf16.msra.mxu0 0
        %4846 = vmatprep.subr.bf16.mxu0 0
        %4847 = vmatpush1.bf16.msra.mxu0 0
        %4848 = vmatprep.subr.bf16.mxu0 0
        %4849 = vmatpush1.bf16.msra.mxu0 0
        %4850 = vmatprep.subr.bf16.mxu0 0
        %4851 = vmatpush1.bf16.msra.mxu0 0
        %4852 = vmatprep.subr.bf16.mxu0 0
        %4853 = vmatpush1.bf16.msra.mxu0 0
        %4854 = vmatprep.subr.bf16.mxu0 0
        %4855 = vmatpush1.bf16.msra.mxu0 0
        %4856 = vmatprep.subr.bf16.mxu0 0
        %4857 = vmatpush1.bf16.msra.mxu0 0
        %4858 = vmatprep.subr.bf16.mxu0 0
        %4859 = vmatpush1.bf16.msra.mxu0 0
        %4860 = vmatprep.subr.bf16.mxu0 0
        %4861 = vmatpush1.bf16.msra.mxu0 0
        %4862 = vmatprep.subr.bf16.mxu0 0
        %4863 = vmatpush1.bf16.msra.mxu0 0
        %4864 = vmatprep.subr.bf16.mxu0 0
        %4865 = vmatpush1.bf16.msra.mxu0 0
        %4866 = vmatprep.subr.bf16.mxu0 0
        %4867 = vmatpush1.bf16.msra.mxu0 0
        %4868 = vmatprep.mubr.bf16.mxu0 0
        %4869 = vmatmul.mubr.bf16.gmra.mrb[0].mxu0 %v4834
        %v4870 = vpop.f32.mrb[0].mxu0
        %v4871 = vadd.f32 0.0, %v4870
        %v4872 = vpop.f32.mrb[0].mxu0
        %v4873 = vpop.f32.mrb[0].mxu0
        %v4874 = vadd.f32 0.0, %v4873
        %v4875 = vpop.f32.mrb[0].mxu0
        %4876 = vdwg.mxu0
        %v4878 = vsel %vm3040, %v3770, 0
        %4880 = vmatprep.subr.bf16.mxu0 0
        %4881 = vmatpush1.bf16.msra.mxu0 %v1528
        %4882 = vmatprep.subr.bf16.mxu0 0
        %4883 = vmatpush1.bf16.msra.mxu0 0
        %4884 = vmatprep.subr.bf16.mxu0 0
        %4885 = vmatpush1.bf16.msra.mxu0 0
        %4886 = vmatprep.subr.bf16.mxu0 0
        %4887 = vmatpush1.bf16.msra.mxu0 0
        %4888 = vmatprep.subr.bf16.mxu0 0
        %4889 = vmatpush1.bf16.msra.mxu0 0
        %4890 = vmatprep.subr.bf16.mxu0 0
        %4891 = vmatpush1.bf16.msra.mxu0 0
        %4892 = vmatprep.subr.bf16.mxu0 0
        %4893 = vmatpush1.bf16.msra.mxu0 0
        %4894 = vmatprep.subr.bf16.mxu0 0
        %4895 = vmatpush1.bf16.msra.mxu0 0
        %4896 = vmatprep.subr.bf16.mxu0 0
        %4897 = vmatpush1.bf16.msra.mxu0 0
        %4898 = vmatprep.subr.bf16.mxu0 0
        %4899 = vmatpush1.bf16.msra.mxu0 0
        %4900 = vmatprep.subr.bf16.mxu0 0
        %4901 = vmatpush1.bf16.msra.mxu0 0
        %4902 = vmatprep.subr.bf16.mxu0 0
        %4903 = vmatpush1.bf16.msra.mxu0 0
        %4904 = vmatprep.subr.bf16.mxu0 0
        %4905 = vmatpush1.bf16.msra.mxu0 0
        %4906 = vmatprep.subr.bf16.mxu0 0
        %4907 = vmatpush1.bf16.msra.mxu0 0
        %4908 = vmatprep.subr.bf16.mxu0 0
        %4909 = vmatpush1.bf16.msra.mxu0 0
        %4910 = vmatprep.subr.bf16.mxu0 0
        %4911 = vmatpush1.bf16.msra.mxu0 0
        %4912 = vmatprep.mubr.bf16.mxu0 0
        %4913 = vmatmul.mubr.bf16.gmra.mrb[0].mxu0 %v4878
        %v4914 = vpop.f32.mrb[0].mxu0
        %v4915 = vadd.f32 0.0, %v4914
        %v4916 = vpop.f32.mrb[0].mxu0
        %v4917 = vpop.f32.mrb[0].mxu0
        %v4918 = vadd.f32 0.0, %v4917
        %v4919 = vpop.f32.mrb[0].mxu0
        %4920 = vdwg.mxu0
        %v4922 = vsel %vm3040, %v3771, 0
        %4924 = vmatprep.subr.bf16.mxu0 0
        %4925 = vmatpush1.bf16.msra.mxu0 %v1529
        %4926 = vmatprep.subr.bf16.mxu0 0
        %4927 = vmatpush1.bf16.msra.mxu0 0
        %4928 = vmatprep.subr.bf16.mxu0 0
        %4929 = vmatpush1.bf16.msra.mxu0 0
        %4930 = vmatprep.subr.bf16.mxu0 0
        %4931 = vmatpush1.bf16.msra.mxu0 0
        %4932 = vmatprep.subr.bf16.mxu0 0
        %4933 = vmatpush1.bf16.msra.mxu0 0
        %4934 = vmatprep.subr.bf16.mxu0 0
        %4935 = vmatpush1.bf16.msra.mxu0 0
        %4936 = vmatprep.subr.bf16.mxu0 0
        %4937 = vmatpush1.bf16.msra.mxu0 0
        %4938 = vmatprep.subr.bf16.mxu0 0
        %4939 = vmatpush1.bf16.msra.mxu0 0
        %4940 = vmatprep.subr.bf16.mxu0 0
        %4941 = vmatpush1.bf16.msra.mxu0 0
        %4942 = vmatprep.subr.bf16.mxu0 0
        %4943 = vmatpush1.bf16.msra.mxu0 0
        %4944 = vmatprep.subr.bf16.mxu0 0
        %4945 = vmatpush1.bf16.msra.mxu0 0
        %4946 = vmatprep.subr.bf16.mxu0 0
        %4947 = vmatpush1.bf16.msra.mxu0 0
        %4948 = vmatprep.subr.bf16.mxu0 0
        %4949 = vmatpush1.bf16.msra.mxu0 0
        %4950 = vmatprep.subr.bf16.mxu0 0
        %4951 = vmatpush1.bf16.msra.mxu0 0
        %4952 = vmatprep.subr.bf16.mxu0 0
        %4953 = vmatpush1.bf16.msra.mxu0 0
        %4954 = vmatprep.subr.bf16.mxu0 0
        %4955 = vmatpush1.bf16.msra.mxu0 0
        %4956 = vmatprep.mubr.bf16.mxu0 0
        %4957 = vmatmul.mubr.bf16.gmra.mrb[0].mxu0 %v4922
        %v4958 = vpop.f32.mrb[0].mxu0
        %v4959 = vadd.f32 0.0, %v4958
        %v4960 = vpop.f32.mrb[0].mxu0
        %v4961 = vpop.f32.mrb[0].mxu0
        %v4962 = vadd.f32 0.0, %v4961
        %v4963 = vpop.f32.mrb[0].mxu0
        %4964 = vdwg.mxu0
        %v4966 = vsel %vm3040, %v3772, 0
        %4968 = vmatprep.subr.bf16.mxu0 0
        %4969 = vmatpush1.bf16.msra.mxu0 %v1530
        %4970 = vmatprep.subr.bf16.mxu0 0
        %4971 = vmatpush1.bf16.msra.mxu0 0
        %4972 = vmatprep.subr.bf16.mxu0 0
        %4973 = vmatpush1.bf16.msra.mxu0 0
        %4974 = vmatprep.subr.bf16.mxu0 0
        %4975 = vmatpush1.bf16.msra.mxu0 0
        %4976 = vmatprep.subr.bf16.mxu0 0
        %4977 = vmatpush1.bf16.msra.mxu0 0
        %4978 = vmatprep.subr.bf16.mxu0 0
        %4979 = vmatpush1.bf16.msra.mxu0 0
        %4980 = vmatprep.subr.bf16.mxu0 0
        %4981 = vmatpush1.bf16.msra.mxu0 0
        %4982 = vmatprep.subr.bf16.mxu0 0
        %4983 = vmatpush1.bf16.msra.mxu0 0
        %4984 = vmatprep.subr.bf16.mxu0 0
        %4985 = vmatpush1.bf16.msra.mxu0 0
        %4986 = vmatprep.subr.bf16.mxu0 0
        %4987 = vmatpush1.bf16.msra.mxu0 0
        %4988 = vmatprep.subr.bf16.mxu0 0
        %4989 = vmatpush1.bf16.msra.mxu0 0
        %4990 = vmatprep.subr.bf16.mxu0 0
        %4991 = vmatpush1.bf16.msra.mxu0 0
        %4992 = vmatprep.subr.bf16.mxu0 0
        %4993 = vmatpush1.bf16.msra.mxu0 0
        %4994 = vmatprep.subr.bf16.mxu0 0
        %4995 = vmatpush1.bf16.msra.mxu0 0
        %4996 = vmatprep.subr.bf16.mxu0 0
        %4997 = vmatpush1.bf16.msra.mxu0 0
        %4998 = vmatprep.subr.bf16.mxu0 0
        %4999 = vmatpush1.bf16.msra.mxu0 0
        %5000 = vmatprep.mubr.bf16.mxu0 0
        %5001 = vmatmul.mubr.bf16.gmra.mrb[0].mxu0 %v4966
        %v5002 = vpop.f32.mrb[0].mxu0
        %v5003 = vadd.f32 0.0, %v5002
        %v5004 = vpop.f32.mrb[0].mxu0
        %v5005 = vpop.f32.mrb[0].mxu0
        %v5006 = vadd.f32 0.0, %v5005
        %v5007 = vpop.f32.mrb[0].mxu0
        %5008 = vdwg.mxu0
        %v5010 = vsel %vm3040, %v3773, 0
        %5012 = vmatprep.subr.bf16.mxu0 0
        %5013 = vmatpush1.bf16.msra.mxu0 %v1531
        %5014 = vmatprep.subr.bf16.mxu0 0
        %5015 = vmatpush1.bf16.msra.mxu0 0
        %5016 = vmatprep.subr.bf16.mxu0 0
        %5017 = vmatpush1.bf16.msra.mxu0 0
        %5018 = vmatprep.subr.bf16.mxu0 0
        %5019 = vmatpush1.bf16.msra.mxu0 0
        %5020 = vmatprep.subr.bf16.mxu0 0
        %5021 = vmatpush1.bf16.msra.mxu0 0
        %5022 = vmatprep.subr.bf16.mxu0 0
        %5023 = vmatpush1.bf16.msra.mxu0 0
        %5024 = vmatprep.subr.bf16.mxu0 0
        %5025 = vmatpush1.bf16.msra.mxu0 0
        %5026 = vmatprep.subr.bf16.mxu0 0
        %5027 = vmatpush1.bf16.msra.mxu0 0
        %5028 = vmatprep.subr.bf16.mxu0 0
        %5029 = vmatpush1.bf16.msra.mxu0 0
        %5030 = vmatprep.subr.bf16.mxu0 0
        %5031 = vmatpush1.bf16.msra.mxu0 0
        %5032 = vmatprep.subr.bf16.mxu0 0
        %5033 = vmatpush1.bf16.msra.mxu0 0
        %5034 = vmatprep.subr.bf16.mxu0 0
        %5035 = vmatpush1.bf16.msra.mxu0 0
        %5036 = vmatprep.subr.bf16.mxu0 0
        %5037 = vmatpush1.bf16.msra.mxu0 0
        %5038 = vmatprep.subr.bf16.mxu0 0
        %5039 = vmatpush1.bf16.msra.mxu0 0
        %5040 = vmatprep.subr.bf16.mxu0 0
        %5041 = vmatpush1.bf16.msra.mxu0 0
        %5042 = vmatprep.subr.bf16.mxu0 0
        %5043 = vmatpush1.bf16.msra.mxu0 0
        %5044 = vmatprep.mubr.bf16.mxu0 0
        %5045 = vmatmul.mubr.bf16.gmra.mrb[0].mxu0 %v5010
        %v5046 = vpop.f32.mrb[0].mxu0
        %v5047 = vadd.f32 0.0, %v5046
        %v5048 = vpop.f32.mrb[0].mxu0
        %v5049 = vpop.f32.mrb[0].mxu0
        %v5050 = vadd.f32 0.0, %v5049
        %v5051 = vpop.f32.mrb[0].mxu0
        %5052 = vdwg.mxu0
        %v5054 = vsel %vm3040, %v3774, 0
        %5056 = vmatprep.subr.bf16.mxu0 0
        %5057 = vmatpush1.bf16.msra.mxu0 %v1532
        %5058 = vmatprep.subr.bf16.mxu0 0
        %5059 = vmatpush1.bf16.msra.mxu0 0
        %5060 = vmatprep.subr.bf16.mxu0 0
        %5061 = vmatpush1.bf16.msra.mxu0 0
        %5062 = vmatprep.subr.bf16.mxu0 0
        %5063 = vmatpush1.bf16.msra.mxu0 0
        %5064 = vmatprep.subr.bf16.mxu0 0
        %5065 = vmatpush1.bf16.msra.mxu0 0
        %5066 = vmatprep.subr.bf16.mxu0 0
        %5067 = vmatpush1.bf16.msra.mxu0 0
        %5068 = vmatprep.subr.bf16.mxu0 0
        %5069 = vmatpush1.bf16.msra.mxu0 0
        %5070 = vmatprep.subr.bf16.mxu0 0
        %5071 = vmatpush1.bf16.msra.mxu0 0
        %5072 = vmatprep.subr.bf16.mxu0 0
        %5073 = vmatpush1.bf16.msra.mxu0 0
        %5074 = vmatprep.subr.bf16.mxu0 0
        %5075 = vmatpush1.bf16.msra.mxu0 0
        %5076 = vmatprep.subr.bf16.mxu0 0
        %5077 = vmatpush1.bf16.msra.mxu0 0
        %5078 = vmatprep.subr.bf16.mxu0 0
        %5079 = vmatpush1.bf16.msra.mxu0 0
        %5080 = vmatprep.subr.bf16.mxu0 0
        %5081 = vmatpush1.bf16.msra.mxu0 0
        %5082 = vmatprep.subr.bf16.mxu0 0
        %5083 = vmatpush1.bf16.msra.mxu0 0
        %5084 = vmatprep.subr.bf16.mxu0 0
        %5085 = vmatpush1.bf16.msra.mxu0 0
        %5086 = vmatprep.subr.bf16.mxu0 0
        %5087 = vmatpush1.bf16.msra.mxu0 0
        %5088 = vmatprep.mubr.bf16.mxu0 0
        %5089 = vmatmul.mubr.bf16.gmra.mrb[0].mxu0 %v5054
        %v5090 = vpop.f32.mrb[0].mxu0
        %v5091 = vadd.f32 0.0, %v5090
        %v5092 = vpop.f32.mrb[0].mxu0
        %v5093 = vpop.f32.mrb[0].mxu0
        %v5094 = vadd.f32 0.0, %v5093
        %v5095 = vpop.f32.mrb[0].mxu0
        %5096 = vdwg.mxu0
        %v5098 = vsel %vm3040, %v3775, 0
        %5100 = vmatprep.subr.bf16.mxu0 0
        %5101 = vmatpush1.bf16.msra.mxu0 %v1533
        %5102 = vmatprep.subr.bf16.mxu0 0
        %5103 = vmatpush1.bf16.msra.mxu0 0
        %5104 = vmatprep.subr.bf16.mxu0 0
        %5105 = vmatpush1.bf16.msra.mxu0 0
        %5106 = vmatprep.subr.bf16.mxu0 0
        %5107 = vmatpush1.bf16.msra.mxu0 0
        %5108 = vmatprep.subr.bf16.mxu0 0
        %5109 = vmatpush1.bf16.msra.mxu0 0
        %5110 = vmatprep.subr.bf16.mxu0 0
        %5111 = vmatpush1.bf16.msra.mxu0 0
        %5112 = vmatprep.subr.bf16.mxu0 0
        %5113 = vmatpush1.bf16.msra.mxu0 0
        %5114 = vmatprep.subr.bf16.mxu0 0
        %5115 = vmatpush1.bf16.msra.mxu0 0
        %5116 = vmatprep.subr.bf16.mxu0 0
        %5117 = vmatpush1.bf16.msra.mxu0 0
        %5118 = vmatprep.subr.bf16.mxu0 0
        %5119 = vmatpush1.bf16.msra.mxu0 0
        %5120 = vmatprep.subr.bf16.mxu0 0
        %5121 = vmatpush1.bf16.msra.mxu0 0
        %5122 = vmatprep.subr.bf16.mxu0 0
        %5123 = vmatpush1.bf16.msra.mxu0 0
        %5124 = vmatprep.subr.bf16.mxu0 0
        %5125 = vmatpush1.bf16.msra.mxu0 0
        %5126 = vmatprep.subr.bf16.mxu0 0
        %5127 = vmatpush1.bf16.msra.mxu0 0
        %5128 = vmatprep.subr.bf16.mxu0 0
        %5129 = vmatpush1.bf16.msra.mxu0 0
        %5130 = vmatprep.subr.bf16.mxu0 0
        %5131 = vmatpush1.bf16.msra.mxu0 0
        %5132 = vmatprep.mubr.bf16.mxu0 0
        %5133 = vmatmul.mubr.bf16.gmra.mrb[0].mxu0 %v5098
        %v5134 = vpop.f32.mrb[0].mxu0
        %v5135 = vadd.f32 0.0, %v5134
        %v5136 = vpop.f32.mrb[0].mxu0
        %v5137 = vpop.f32.mrb[0].mxu0
        %v5138 = vadd.f32 0.0, %v5137
        %v5139 = vpop.f32.mrb[0].mxu0
        %5140 = vdwg.mxu0
        %v5142 = vsel %vm3040, %v3776, 0
        %5144 = vmatprep.subr.bf16.mxu0 0
        %5145 = vmatpush1.bf16.msra.mxu0 %v1534
        %5146 = vmatprep.subr.bf16.mxu0 0
        %5147 = vmatpush1.bf16.msra.mxu0 0
        %5148 = vmatprep.subr.bf16.mxu0 0
        %5149 = vmatpush1.bf16.msra.mxu0 0
        %5150 = vmatprep.subr.bf16.mxu0 0
        %5151 = vmatpush1.bf16.msra.mxu0 0
        %5152 = vmatprep.subr.bf16.mxu0 0
        %5153 = vmatpush1.bf16.msra.mxu0 0
        %5154 = vmatprep.subr.bf16.mxu0 0
        %5155 = vmatpush1.bf16.msra.mxu0 0
        %5156 = vmatprep.subr.bf16.mxu0 0
        %5157 = vmatpush1.bf16.msra.mxu0 0
        %5158 = vmatprep.subr.bf16.mxu0 0
        %5159 = vmatpush1.bf16.msra.mxu0 0
        %5160 = vmatprep.subr.bf16.mxu0 0
        %5161 = vmatpush1.bf16.msra.mxu0 0
        %5162 = vmatprep.subr.bf16.mxu0 0
        %5163 = vmatpush1.bf16.msra.mxu0 0
        %5164 = vmatprep.subr.bf16.mxu0 0
        %5165 = vmatpush1.bf16.msra.mxu0 0
        %5166 = vmatprep.subr.bf16.mxu0 0
        %5167 = vmatpush1.bf16.msra.mxu0 0
        %5168 = vmatprep.subr.bf16.mxu0 0
        %5169 = vmatpush1.bf16.msra.mxu0 0
        %5170 = vmatprep.subr.bf16.mxu0 0
        %5171 = vmatpush1.bf16.msra.mxu0 0
        %5172 = vmatprep.subr.bf16.mxu0 0
        %5173 = vmatpush1.bf16.msra.mxu0 0
        %5174 = vmatprep.subr.bf16.mxu0 0
        %5175 = vmatpush1.bf16.msra.mxu0 0
        %5176 = vmatprep.mubr.bf16.mxu0 0
        %5177 = vmatmul.mubr.bf16.gmra.mrb[0].mxu0 %v5142
        %v5178 = vpop.f32.mrb[0].mxu0
        %v5179 = vadd.f32 0.0, %v5178
        %v5180 = vpop.f32.mrb[0].mxu0
        %v5181 = vpop.f32.mrb[0].mxu0
        %v5182 = vadd.f32 0.0, %v5181
        %v5183 = vpop.f32.mrb[0].mxu0
        %5184 = vdwg.mxu0
        %5201 = vrot.lane.b32.xlu0 %v4167, 32
        %v5202 = vpop.permute.xlu0 %5201
        %5203 = vrot.lane.b32.xlu0 %v4170, 32
        %v5204 = vpop.permute.xlu0 %5203
        %5205 = vrot.lane.b32.xlu0 %v4211, 32
        %v5206 = vpop.permute.xlu0 %5205
        %5207 = vrot.lane.b32.xlu0 %v4214, 32
        %v5208 = vpop.permute.xlu0 %5207
        %5209 = vrot.lane.b32.xlu0 %v4255, 32
        %v5210 = vpop.permute.xlu0 %5209
        %5211 = vrot.lane.b32.xlu0 %v4258, 32
        %v5212 = vpop.permute.xlu0 %5211
        %5213 = vrot.lane.b32.xlu0 %v4299, 32
        %v5214 = vpop.permute.xlu0 %5213
        %5215 = vrot.lane.b32.xlu0 %v4302, 32
        %v5216 = vpop.permute.xlu0 %5215
        %5217 = vrot.lane.b32.xlu0 %v4343, 32
        %v5218 = vpop.permute.xlu0 %5217
        %5219 = vrot.lane.b32.xlu0 %v4346, 32
        %v5220 = vpop.permute.xlu0 %5219
        %5221 = vrot.lane.b32.xlu0 %v4387, 32
        %v5222 = vpop.permute.xlu0 %5221
        %5223 = vrot.lane.b32.xlu0 %v4390, 32
        %v5224 = vpop.permute.xlu0 %5223
        %5225 = vrot.lane.b32.xlu0 %v4431, 32
        %v5226 = vpop.permute.xlu0 %5225
        %5227 = vrot.lane.b32.xlu0 %v4434, 32
        %v5228 = vpop.permute.xlu0 %5227
        %5229 = vrot.lane.b32.xlu0 %v4475, 32
        %v5230 = vpop.permute.xlu0 %5229
        %5231 = vrot.lane.b32.xlu0 %v4478, 32
        %v5232 = vpop.permute.xlu0 %5231
        %5265 = vrot.lane.b32.xlu0 %v4519, 64
        %v5266 = vpop.permute.xlu0 %5265
        %5267 = vrot.lane.b32.xlu0 %v4522, 64
        %v5268 = vpop.permute.xlu0 %5267
        %5269 = vrot.lane.b32.xlu0 %v4563, 64
        %v5270 = vpop.permute.xlu0 %5269
        %5271 = vrot.lane.b32.xlu0 %v4566, 64
        %v5272 = vpop.permute.xlu0 %5271
        %5273 = vrot.lane.b32.xlu0 %v4607, 64
        %v5274 = vpop.permute.xlu0 %5273
        %5275 = vrot.lane.b32.xlu0 %v4610, 64
        %v5276 = vpop.permute.xlu0 %5275
        %5277 = vrot.lane.b32.xlu0 %v4651, 64
        %v5278 = vpop.permute.xlu0 %5277
        %5279 = vrot.lane.b32.xlu0 %v4654, 64
        %v5280 = vpop.permute.xlu0 %5279
        %5281 = vrot.lane.b32.xlu0 %v4695, 64
        %v5282 = vpop.permute.xlu0 %5281
        %5283 = vrot.lane.b32.xlu0 %v4698, 64
        %v5284 = vpop.permute.xlu0 %5283
        %5285 = vrot.lane.b32.xlu0 %v4739, 64
        %v5286 = vpop.permute.xlu0 %5285
        %5287 = vrot.lane.b32.xlu0 %v4742, 64
        %v5288 = vpop.permute.xlu0 %5287
        %5289 = vrot.lane.b32.xlu0 %v4783, 64
        %v5290 = vpop.permute.xlu0 %5289
        %5291 = vrot.lane.b32.xlu0 %v4786, 64
        %v5292 = vpop.permute.xlu0 %5291
        %5293 = vrot.lane.b32.xlu0 %v4827, 64
        %v5294 = vpop.permute.xlu0 %5293
        %5295 = vrot.lane.b32.xlu0 %v4830, 64
        %v5296 = vpop.permute.xlu0 %5295
        %5329 = vrot.lane.b32.xlu0 %v4871, 96
        %v5330 = vpop.permute.xlu0 %5329
        %5331 = vrot.lane.b32.xlu0 %v4874, 96
        %v5332 = vpop.permute.xlu0 %5331
        %5333 = vrot.lane.b32.xlu0 %v4915, 96
        %v5334 = vpop.permute.xlu0 %5333
        %5335 = vrot.lane.b32.xlu0 %v4918, 96
        %v5336 = vpop.permute.xlu0 %5335
        %5337 = vrot.lane.b32.xlu0 %v4959, 96
        %v5338 = vpop.permute.xlu0 %5337
        %5339 = vrot.lane.b32.xlu0 %v4962, 96
        %v5340 = vpop.permute.xlu0 %5339
        %5341 = vrot.lane.b32.xlu0 %v5003, 96
        %v5342 = vpop.permute.xlu0 %5341
        %5343 = vrot.lane.b32.xlu0 %v5006, 96
        %v5344 = vpop.permute.xlu0 %5343
        %5345 = vrot.lane.b32.xlu0 %v5047, 96
        %v5346 = vpop.permute.xlu0 %5345
        %5347 = vrot.lane.b32.xlu0 %v5050, 96
        %v5348 = vpop.permute.xlu0 %5347
        %5349 = vrot.lane.b32.xlu0 %v5091, 96
        %v5350 = vpop.permute.xlu0 %5349
        %5351 = vrot.lane.b32.xlu0 %v5094, 96
        %v5352 = vpop.permute.xlu0 %5351
        %5353 = vrot.lane.b32.xlu0 %v5135, 96
        %v5354 = vpop.permute.xlu0 %5353
        %5355 = vrot.lane.b32.xlu0 %v5138, 96
        %v5356 = vpop.permute.xlu0 %5355
        %5357 = vrot.lane.b32.xlu0 %v5179, 96
        %v5358 = vpop.permute.xlu0 %5357
        %5359 = vrot.lane.b32.xlu0 %v5182, 96
        %v5360 = vpop.permute.xlu0 %5359
        %v5377 = vsel %vm1535, %v3815, %v5202
        %v5378 = vsel %vm1535, %v3818, %v5204
        %v5379 = vsel %vm1535, %v3859, %v5206
        %v5380 = vsel %vm1535, %v3862, %v5208
        %v5381 = vsel %vm1535, %v3903, %v5210
        %v5382 = vsel %vm1535, %v3906, %v5212
        %v5383 = vsel %vm1535, %v3947, %v5214
        %v5384 = vsel %vm1535, %v3950, %v5216
        %v5385 = vsel %vm1535, %v3991, %v5218
        %v5386 = vsel %vm1535, %v3994, %v5220
        %v5387 = vsel %vm1535, %v4035, %v5222
        %v5388 = vsel %vm1535, %v4038, %v5224
        %v5389 = vsel %vm1535, %v4079, %v5226
        %v5390 = vsel %vm1535, %v4082, %v5228
        %v5391 = vsel %vm1535, %v4123, %v5230
        %v5392 = vsel %vm1535, %v4126, %v5232
        %vm5393 = vcmask 523264
        %v5394 = vsel %vm5393, %v5377, %v5266
        %v5395 = vsel %vm5393, %v5378, %v5268
        %v5396 = vsel %vm5393, %v5379, %v5270
        %v5397 = vsel %vm5393, %v5380, %v5272
        %v5398 = vsel %vm5393, %v5381, %v5274
        %v5399 = vsel %vm5393, %v5382, %v5276
        %v5400 = vsel %vm5393, %v5383, %v5278
        %v5401 = vsel %vm5393, %v5384, %v5280
        %v5402 = vsel %vm5393, %v5385, %v5282
        %v5403 = vsel %vm5393, %v5386, %v5284
        %v5404 = vsel %vm5393, %v5387, %v5286
        %v5405 = vsel %vm5393, %v5388, %v5288
        %v5406 = vsel %vm5393, %v5389, %v5290
        %v5407 = vsel %vm5393, %v5390, %v5292
        %v5408 = vsel %vm5393, %v5391, %v5294
        %v5409 = vsel %vm5393, %v5392, %v5296
        %vm5410 = vcmask 785408
        %v5411 = vsel %vm5410, %v5394, %v5330
        %v5412 = vsel %vm5410, %v5395, %v5332
        %v5413 = vsel %vm5410, %v5396, %v5334
        %v5414 = vsel %vm5410, %v5397, %v5336
        %v5415 = vsel %vm5410, %v5398, %v5338
        %v5416 = vsel %vm5410, %v5399, %v5340
        %v5417 = vsel %vm5410, %v5400, %v5342
        %v5418 = vsel %vm5410, %v5401, %v5344
        %v5419 = vsel %vm5410, %v5402, %v5346
        %v5420 = vsel %vm5410, %v5403, %v5348
        %v5421 = vsel %vm5410, %v5404, %v5350
        %v5422 = vsel %vm5410, %v5405, %v5352
        %v5423 = vsel %vm5410, %v5406, %v5354
        %v5424 = vsel %vm5410, %v5407, %v5356
        %v5425 = vsel %vm5410, %v5408, %v5358
        %v5426 = vsel %vm5410, %v5409, %v5360
        %v5427 = vpack.c.bf16 %v5412, %v5411
        %v5428 = vpack.c.bf16 %v5414, %v5413
        %v5429 = vpack.c.bf16 %v5416, %v5415
        %v5430 = vpack.c.bf16 %v5418, %v5417
        %v5431 = vpack.c.bf16 %v5420, %v5419
        %v5432 = vpack.c.bf16 %v5422, %v5421
        %v5433 = vpack.c.bf16 %v5424, %v5423
        %v5434 = vpack.c.bf16 %v5426, %v5425
        %v5435 = vld [vmem:[#allocation7] sm:$0xf]
        %v5436 = vld [vmem:[#allocation7 + $0x4] sm:$0xf]
        %v5437 = vld [vmem:[#allocation7 + $0x8] sm:$0xf]
        %v5438 = vld [vmem:[#allocation7 + $0xc] sm:$0xf]
        %v5439 = vld [vmem:[#allocation7 + $0x10] sm:$0xf]
        %v5440 = vld [vmem:[#allocation7 + $0x14] sm:$0xf]
        %v5441 = vld [vmem:[#allocation7 + $0x18] sm:$0xf]
        %v5442 = vld [vmem:[#allocation7 + $0x1c] sm:$0xf]
        %v5443 = vld [vmem:[#allocation7 + $0x20] sm:$0xf]
        %v5444 = vld [vmem:[#allocation7 + $0x24] sm:$0xf]
        %v5445 = vld [vmem:[#allocation7 + $0x28] sm:$0xf]
        %v5446 = vld [vmem:[#allocation7 + $0x2c] sm:$0xf]
        %v5447 = vld [vmem:[#allocation7 + $0x30] sm:$0xf]
        %v5448 = vld [vmem:[#allocation7 + $0x34] sm:$0xf]
        %v5449 = vld [vmem:[#allocation7 + $0x38] sm:$0xf]
        %v5450 = vld [vmem:[#allocation7 + $0x3c] sm:$0xf]
        %v5467 = vunpack.c.l.b16 %v5435
        %v5468 = vunpack.c.l.b16 %v5436
        %v5469 = vunpack.c.l.b16 %v5437
        %v5470 = vunpack.c.l.b16 %v5438
        %v5471 = vunpack.c.l.b16 %v5439
        %v5472 = vunpack.c.l.b16 %v5440
        %v5473 = vunpack.c.l.b16 %v5441
        %v5474 = vunpack.c.l.b16 %v5442
        %v5475 = vunpack.c.l.b16 %v5443
        %v5476 = vunpack.c.l.b16 %v5444
        %v5477 = vunpack.c.l.b16 %v5445
        %v5478 = vunpack.c.l.b16 %v5446
        %v5479 = vunpack.c.l.b16 %v5447
        %v5480 = vunpack.c.l.b16 %v5448
        %v5481 = vunpack.c.l.b16 %v5449
        %v5482 = vunpack.c.l.b16 %v5450
        %v5483 = vpack.c.b16 %v5468, %v5467
        %v5484 = vpack.c.b16 %v5470, %v5469
        %v5485 = vpack.c.b16 %v5472, %v5471
        %v5486 = vpack.c.b16 %v5474, %v5473
        %v5487 = vpack.c.b16 %v5476, %v5475
        %v5488 = vpack.c.b16 %v5478, %v5477
        %v5489 = vpack.c.b16 %v5480, %v5479
        %v5490 = vpack.c.b16 %v5482, %v5481
        %5499 = vmatprep.subr.bf16.mxu0 0
        %5500 = vmatpush1.bf16.msra.mxu0 %v5483
        %5501 = vmatprep.subr.bf16.mxu0 0
        %5502 = vmatpush1.bf16.msra.mxu0 %v5484
        %5503 = vmatprep.subr.bf16.mxu0 0
        %5504 = vmatpush1.bf16.msra.mxu0 %v5485
        %5505 = vmatprep.subr.bf16.mxu0 0
        %5506 = vmatpush1.bf16.msra.mxu0 %v5486
        %5507 = vmatprep.subr.bf16.mxu0 0
        %5508 = vmatpush1.bf16.msra.mxu0 %v5487
        %5509 = vmatprep.subr.bf16.mxu0 0
        %5510 = vmatpush1.bf16.msra.mxu0 %v5488
        %5511 = vmatprep.subr.bf16.mxu0 0
        %5512 = vmatpush1.bf16.msra.mxu0 %v5489
        %5513 = vmatprep.subr.bf16.mxu0 0
        %5514 = vmatpush1.bf16.msra.mxu0 %v5490
        %5515 = vmatprep.subr.bf16.mxu0 0
        %5516 = vmatpush1.bf16.msra.mxu0 0
        %5517 = vmatprep.subr.bf16.mxu0 0
        %5518 = vmatpush1.bf16.msra.mxu0 0
        %5519 = vmatprep.subr.bf16.mxu0 0
        %5520 = vmatpush1.bf16.msra.mxu0 0
        %5521 = vmatprep.subr.bf16.mxu0 0
        %5522 = vmatpush1.bf16.msra.mxu0 0
        %5523 = vmatprep.subr.bf16.mxu0 0
        %5524 = vmatpush1.bf16.msra.mxu0 0
        %5525 = vmatprep.subr.bf16.mxu0 0
        %5526 = vmatpush1.bf16.msra.mxu0 0
        %5527 = vmatprep.subr.bf16.mxu0 0
        %5528 = vmatpush1.bf16.msra.mxu0 0
        %5529 = vmatprep.subr.bf16.mxu0 0
        %5530 = vmatpush1.bf16.msra.mxu0 0
        %5531 = vmatprep.mubr.bf16.mxu0 0
        %5532 = vmatmul.mubr.bf16.gmra.mrb[0].mxu0 %v5427
        %v5533 = vpop.f32.mrb[0].mxu0
        %v5534 = vadd.f32 0.0, %v5533
        %v5535 = vpop.f32.mrb[0].mxu0
        %v5536 = vpop.f32.mrb[0].mxu0
        %v5537 = vadd.f32 0.0, %v5536
        %v5538 = vpop.f32.mrb[0].mxu0
        %5539 = vmatprep.mubr.bf16.mxu0 0
        %5540 = vmatmul.mubr.bf16.gmra.mrb[0].mxu0 %v5428
        %v5541 = vpop.f32.mrb[0].mxu0
        %v5542 = vadd.f32 0.0, %v5541
        %v5543 = vpop.f32.mrb[0].mxu0
        %v5544 = vpop.f32.mrb[0].mxu0
        %v5545 = vadd.f32 0.0, %v5544
        %v5546 = vpop.f32.mrb[0].mxu0
        %5547 = vmatprep.mubr.bf16.mxu0 0
        %5548 = vmatmul.mubr.bf16.gmra.mrb[0].mxu0 %v5429
        %v5549 = vpop.f32.mrb[0].mxu0
        %v5550 = vadd.f32 0.0, %v5549
        %v5551 = vpop.f32.mrb[0].mxu0
        %v5552 = vpop.f32.mrb[0].mxu0
        %v5553 = vadd.f32 0.0, %v5552
        %v5554 = vpop.f32.mrb[0].mxu0
        %5555 = vmatprep.mubr.bf16.mxu0 0
        %5556 = vmatmul.mubr.bf16.gmra.mrb[0].mxu0 %v5430
        %v5557 = vpop.f32.mrb[0].mxu0
        %v5558 = vadd.f32 0.0, %v5557
        %v5559 = vpop.f32.mrb[0].mxu0
        %v5560 = vpop.f32.mrb[0].mxu0
        %v5561 = vadd.f32 0.0, %v5560
        %v5562 = vpop.f32.mrb[0].mxu0
        %5563 = vmatprep.mubr.bf16.mxu0 0
        %5564 = vmatmul.mubr.bf16.gmra.mrb[0].mxu0 %v5431
        %v5565 = vpop.f32.mrb[0].mxu0
        %v5566 = vadd.f32 0.0, %v5565
        %v5567 = vpop.f32.mrb[0].mxu0
        %v5568 = vpop.f32.mrb[0].mxu0
        %v5569 = vadd.f32 0.0, %v5568
        %v5570 = vpop.f32.mrb[0].mxu0
        %5571 = vmatprep.mubr.bf16.mxu0 0
        %5572 = vmatmul.mubr.bf16.gmra.mrb[0].mxu0 %v5432
        %v5573 = vpop.f32.mrb[0].mxu0
        %v5574 = vadd.f32 0.0, %v5573
        %v5575 = vpop.f32.mrb[0].mxu0
        %v5576 = vpop.f32.mrb[0].mxu0
        %v5577 = vadd.f32 0.0, %v5576
        %v5578 = vpop.f32.mrb[0].mxu0
        %5579 = vmatprep.mubr.bf16.mxu0 0
        %5580 = vmatmul.mubr.bf16.gmra.mrb[0].mxu0 %v5433
        %v5581 = vpop.f32.mrb[0].mxu0
        %v5582 = vadd.f32 0.0, %v5581
        %v5583 = vpop.f32.mrb[0].mxu0
        %v5584 = vpop.f32.mrb[0].mxu0
        %v5585 = vadd.f32 0.0, %v5584
        %v5586 = vpop.f32.mrb[0].mxu0
        %5587 = vmatprep.mubr.bf16.mxu0 0
        %5588 = vmatmul.mubr.bf16.gmra.mrb[0].mxu0 %v5434
        %v5589 = vpop.f32.mrb[0].mxu0
        %v5590 = vadd.f32 0.0, %v5589
        %v5591 = vpop.f32.mrb[0].mxu0
        %v5592 = vpop.f32.mrb[0].mxu0
        %v5593 = vadd.f32 0.0, %v5592
        %v5594 = vpop.f32.mrb[0].mxu0
        %5595 = vdwg.mxu0
        %v5596 = vadd.f32 %v340, %v5534
        %v5597 = vadd.f32 %v341, %v5537
        %v5598 = vadd.f32 %v342, %v5542
        %v5599 = vadd.f32 %v343, %v5545
        %v5600 = vadd.f32 %v344, %v5550
        %v5601 = vadd.f32 %v345, %v5553
        %v5602 = vadd.f32 %v346, %v5558
        %v5603 = vadd.f32 %v347, %v5561
        %v5604 = vadd.f32 %v348, %v5566
        %v5605 = vadd.f32 %v349, %v5569
        %v5606 = vadd.f32 %v350, %v5574
        %v5607 = vadd.f32 %v351, %v5577
        %v5608 = vadd.f32 %v352, %v5582
        %v5609 = vadd.f32 %v353, %v5585
        %v5610 = vadd.f32 %v354, %v5590
        %v5611 = vadd.f32 %v355, %v5593
        %v5612 = vadd.f32 %v5596, %v336
        %v5613 = vadd.f32 %v5597, %v336
        %v5614 = vadd.f32 %v5598, %v336
        %v5615 = vadd.f32 %v5599, %v336
        %v5616 = vadd.f32 %v5600, %v336
        %v5617 = vadd.f32 %v5601, %v336
        %v5618 = vadd.f32 %v5602, %v336
        %v5619 = vadd.f32 %v5603, %v336
        %v5620 = vadd.f32 %v5604, %v336
        %v5621 = vadd.f32 %v5605, %v336
        %v5622 = vadd.f32 %v5606, %v336
        %v5623 = vadd.f32 %v5607, %v336
        %v5624 = vadd.f32 %v5608, %v336
        %v5625 = vadd.f32 %v5609, %v336
        %v5626 = vadd.f32 %v5610, %v336
        %v5627 = vadd.f32 %v5611, %v336
        %5628 = vadd.xlane.f32.xlu0 %v5612
        %v5629 = vpop.xlane.xlu0 %5628
        %5630 = vadd.xlane.f32.xlu0 %v5613
        %v5631 = vpop.xlane.xlu0 %5630
        %5632 = vadd.xlane.f32.xlu0 %v5614
        %v5633 = vpop.xlane.xlu0 %5632
        %5634 = vadd.xlane.f32.xlu0 %v5615
        %v5635 = vpop.xlane.xlu0 %5634
        %5636 = vadd.xlane.f32.xlu0 %v5616
        %v5637 = vpop.xlane.xlu0 %5636
        %5638 = vadd.xlane.f32.xlu0 %v5617
        %v5639 = vpop.xlane.xlu0 %5638
        %5640 = vadd.xlane.f32.xlu0 %v5618
        %v5641 = vpop.xlane.xlu0 %5640
        %5642 = vadd.xlane.f32.xlu0 %v5619
        %v5643 = vpop.xlane.xlu0 %5642
        %5644 = vadd.xlane.f32.xlu0 %v5620
        %v5645 = vpop.xlane.xlu0 %5644
        %5646 = vadd.xlane.f32.xlu0 %v5621
        %v5647 = vpop.xlane.xlu0 %5646
        %5648 = vadd.xlane.f32.xlu0 %v5622
        %v5649 = vpop.xlane.xlu0 %5648
        %5650 = vadd.xlane.f32.xlu0 %v5623
        %v5651 = vpop.xlane.xlu0 %5650
        %5652 = vadd.xlane.f32.xlu0 %v5624
        %v5653 = vpop.xlane.xlu0 %5652
        %5654 = vadd.xlane.f32.xlu0 %v5625
        %v5655 = vpop.xlane.xlu0 %5654
        %5656 = vadd.xlane.f32.xlu0 %v5626
        %v5657 = vpop.xlane.xlu0 %5656
        %5658 = vadd.xlane.f32.xlu0 %v5627
        %v5659 = vpop.xlane.xlu0 %5658
        %v5660 = vmul.f32 %v5629, %v388
        %v5661 = vmul.f32 %v5631, %v388
        %v5662 = vmul.f32 %v5633, %v388
        %v5663 = vmul.f32 %v5635, %v388
        %v5664 = vmul.f32 %v5637, %v388
        %v5665 = vmul.f32 %v5639, %v388
        %v5666 = vmul.f32 %v5641, %v388
        %v5667 = vmul.f32 %v5643, %v388
        %v5668 = vmul.f32 %v5645, %v388
        %v5669 = vmul.f32 %v5647, %v388
        %v5670 = vmul.f32 %v5649, %v388
        %v5671 = vmul.f32 %v5651, %v388
        %v5672 = vmul.f32 %v5653, %v388
        %v5673 = vmul.f32 %v5655, %v388
        %v5674 = vmul.f32 %v5657, %v388
        %v5675 = vmul.f32 %v5659, %v388
        %v5676 = vsub.f32 %v5612, %v5660
        %v5677 = vsub.f32 %v5613, %v5661
        %v5678 = vsub.f32 %v5614, %v5662
        %v5679 = vsub.f32 %v5615, %v5663
        %v5680 = vsub.f32 %v5616, %v5664
        %v5681 = vsub.f32 %v5617, %v5665
        %v5682 = vsub.f32 %v5618, %v5666
        %v5683 = vsub.f32 %v5619, %v5667
        %v5684 = vsub.f32 %v5620, %v5668
        %v5685 = vsub.f32 %v5621, %v5669
        %v5686 = vsub.f32 %v5622, %v5670
        %v5687 = vsub.f32 %v5623, %v5671
        %v5688 = vsub.f32 %v5624, %v5672
        %v5689 = vsub.f32 %v5625, %v5673
        %v5690 = vsub.f32 %v5626, %v5674
        %v5691 = vsub.f32 %v5627, %v5675
        %v5692 = vmul.f32 %v5676, %v5676
        %v5693 = vmul.f32 %v5677, %v5677
        %v5694 = vmul.f32 %v5678, %v5678
        %v5695 = vmul.f32 %v5679, %v5679
        %v5696 = vmul.f32 %v5680, %v5680
        %v5697 = vmul.f32 %v5681, %v5681
        %v5698 = vmul.f32 %v5682, %v5682
        %v5699 = vmul.f32 %v5683, %v5683
        %v5700 = vmul.f32 %v5684, %v5684
        %v5701 = vmul.f32 %v5685, %v5685
        %v5702 = vmul.f32 %v5686, %v5686
        %v5703 = vmul.f32 %v5687, %v5687
        %v5704 = vmul.f32 %v5688, %v5688
        %v5705 = vmul.f32 %v5689, %v5689
        %v5706 = vmul.f32 %v5690, %v5690
        %v5707 = vmul.f32 %v5691, %v5691
        %5708 = vadd.xlane.f32.xlu0 %v5692
        %v5709 = vpop.xlane.xlu0 %5708
        %5710 = vadd.xlane.f32.xlu0 %v5693
        %v5711 = vpop.xlane.xlu0 %5710
        %5712 = vadd.xlane.f32.xlu0 %v5694
        %v5713 = vpop.xlane.xlu0 %5712
        %5714 = vadd.xlane.f32.xlu0 %v5695
        %v5715 = vpop.xlane.xlu0 %5714
        %5716 = vadd.xlane.f32.xlu0 %v5696
        %v5717 = vpop.xlane.xlu0 %5716
        %5718 = vadd.xlane.f32.xlu0 %v5697
        %v5719 = vpop.xlane.xlu0 %5718
        %5720 = vadd.xlane.f32.xlu0 %v5698
        %v5721 = vpop.xlane.xlu0 %5720
        %5722 = vadd.xlane.f32.xlu0 %v5699
        %v5723 = vpop.xlane.xlu0 %5722
        %5724 = vadd.xlane.f32.xlu0 %v5700
        %v5725 = vpop.xlane.xlu0 %5724
        %5726 = vadd.xlane.f32.xlu0 %v5701
        %v5727 = vpop.xlane.xlu0 %5726
        %5728 = vadd.xlane.f32.xlu0 %v5702
        %v5729 = vpop.xlane.xlu0 %5728
        %5730 = vadd.xlane.f32.xlu0 %v5703
        %v5731 = vpop.xlane.xlu0 %5730
        %5732 = vadd.xlane.f32.xlu0 %v5704
        %v5733 = vpop.xlane.xlu0 %5732
        %5734 = vadd.xlane.f32.xlu0 %v5705
        %v5735 = vpop.xlane.xlu0 %5734
        %5736 = vadd.xlane.f32.xlu0 %v5706
        %v5737 = vpop.xlane.xlu0 %5736
        %5738 = vadd.xlane.f32.xlu0 %v5707
        %v5739 = vpop.xlane.xlu0 %5738
        %v5740 = vmul.f32 %v5709, %v388
        %v5741 = vmul.f32 %v5711, %v388
        %v5742 = vmul.f32 %v5713, %v388
        %v5743 = vmul.f32 %v5715, %v388
        %v5744 = vmul.f32 %v5717, %v388
        %v5745 = vmul.f32 %v5719, %v388
        %v5746 = vmul.f32 %v5721, %v388
        %v5747 = vmul.f32 %v5723, %v388
        %v5748 = vmul.f32 %v5725, %v388
        %v5749 = vmul.f32 %v5727, %v388
        %v5750 = vmul.f32 %v5729, %v388
        %v5751 = vmul.f32 %v5731, %v388
        %v5752 = vmul.f32 %v5733, %v388
        %v5753 = vmul.f32 %v5735, %v388
        %v5754 = vmul.f32 %v5737, %v388
        %v5755 = vmul.f32 %v5739, %v388
        %v5756 = vadd.f32 %v5740, 1e-05
        %v5757 = vadd.f32 %v5741, 1e-05
        %v5758 = vadd.f32 %v5742, 1e-05
        %v5759 = vadd.f32 %v5743, 1e-05
        %v5760 = vadd.f32 %v5744, 1e-05
        %v5761 = vadd.f32 %v5745, 1e-05
        %v5762 = vadd.f32 %v5746, 1e-05
        %v5763 = vadd.f32 %v5747, 1e-05
        %v5764 = vadd.f32 %v5748, 1e-05
        %v5765 = vadd.f32 %v5749, 1e-05
        %v5766 = vadd.f32 %v5750, 1e-05
        %v5767 = vadd.f32 %v5751, 1e-05
        %v5768 = vadd.f32 %v5752, 1e-05
        %v5769 = vadd.f32 %v5753, 1e-05
        %v5770 = vadd.f32 %v5754, 1e-05
        %v5771 = vadd.f32 %v5755, 1e-05
        %v5772 = vrsqrt.pop %v5756
        %v5773 = vrsqrt.pop %v5757
        %v5774 = vrsqrt.pop %v5758
        %v5775 = vrsqrt.pop %v5759
        %v5776 = vrsqrt.pop %v5760
        %v5777 = vrsqrt.pop %v5761
        %v5778 = vrsqrt.pop %v5762
        %v5779 = vrsqrt.pop %v5763
        %v5780 = vrsqrt.pop %v5764
        %v5781 = vrsqrt.pop %v5765
        %v5782 = vrsqrt.pop %v5766
        %v5783 = vrsqrt.pop %v5767
        %v5784 = vrsqrt.pop %v5768
        %v5785 = vrsqrt.pop %v5769
        %v5786 = vrsqrt.pop %v5770
        %v5787 = vrsqrt.pop %v5771
        %v5788 = vmul.f32 %v5676, %v5772
        %v5789 = vmul.f32 %v5677, %v5773
        %v5790 = vmul.f32 %v5678, %v5774
        %v5791 = vmul.f32 %v5679, %v5775
        %v5792 = vmul.f32 %v5680, %v5776
        %v5793 = vmul.f32 %v5681, %v5777
        %v5794 = vmul.f32 %v5682, %v5778
        %v5795 = vmul.f32 %v5683, %v5779
        %v5796 = vmul.f32 %v5684, %v5780
        %v5797 = vmul.f32 %v5685, %v5781
        %v5798 = vmul.f32 %v5686, %v5782
        %v5799 = vmul.f32 %v5687, %v5783
        %v5800 = vmul.f32 %v5688, %v5784
        %v5801 = vmul.f32 %v5689, %v5785
        %v5802 = vmul.f32 %v5690, %v5786
        %v5803 = vmul.f32 %v5691, %v5787
        %v5804 = vmul.f32 %v5788, %v334
        %v5805 = vmul.f32 %v5789, %v334
        %v5806 = vmul.f32 %v5790, %v334
        %v5807 = vmul.f32 %v5791, %v334
        %v5808 = vmul.f32 %v5792, %v334
        %v5809 = vmul.f32 %v5793, %v334
        %v5810 = vmul.f32 %v5794, %v334
        %v5811 = vmul.f32 %v5795, %v334
        %v5812 = vmul.f32 %v5796, %v334
        %v5813 = vmul.f32 %v5797, %v334
        %v5814 = vmul.f32 %v5798, %v334
        %v5815 = vmul.f32 %v5799, %v334
        %v5816 = vmul.f32 %v5800, %v334
        %v5817 = vmul.f32 %v5801, %v334
        %v5818 = vmul.f32 %v5802, %v334
        %v5819 = vmul.f32 %v5803, %v334
        %v5820 = vadd.f32 %v5804, %v335
        %v5821 = vadd.f32 %v5805, %v335
        %v5822 = vadd.f32 %v5806, %v335
        %v5823 = vadd.f32 %v5807, %v335
        %v5824 = vadd.f32 %v5808, %v335
        %v5825 = vadd.f32 %v5809, %v335
        %v5826 = vadd.f32 %v5810, %v335
        %v5827 = vadd.f32 %v5811, %v335
        %v5828 = vadd.f32 %v5812, %v335
        %v5829 = vadd.f32 %v5813, %v335
        %v5830 = vadd.f32 %v5814, %v335
        %v5831 = vadd.f32 %v5815, %v335
        %v5832 = vadd.f32 %v5816, %v335
        %v5833 = vadd.f32 %v5817, %v335
        %v5834 = vadd.f32 %v5818, %v335
        %v5835 = vadd.f32 %v5819, %v335
        %v5836 = vpack.c.bf16 %v5821, %v5820
        %v5837 = vpack.c.bf16 %v5823, %v5822
        %v5838 = vpack.c.bf16 %v5825, %v5824
        %v5839 = vpack.c.bf16 %v5827, %v5826
        %v5840 = vpack.c.bf16 %v5829, %v5828
        %v5841 = vpack.c.bf16 %v5831, %v5830
        %v5842 = vpack.c.bf16 %v5833, %v5832
        %v5843 = vpack.c.bf16 %v5835, %v5834
        %v5844 = vld [vmem:[#allocation8] sm:$0xff]
        %v5845 = vld [vmem:[#allocation8 + $0x8] sm:$0xff]
        %v5846 = vld [vmem:[#allocation8 + $0x10] sm:$0xff]
        %v5847 = vld [vmem:[#allocation8 + $0x18] sm:$0xff]
        %v5848 = vld [vmem:[#allocation8 + $0x20] sm:$0xff]
        %v5849 = vld [vmem:[#allocation8 + $0x28] sm:$0xff]
        %v5850 = vld [vmem:[#allocation8 + $0x30] sm:$0xff]
        %v5851 = vld [vmem:[#allocation8 + $0x38] sm:$0xff]
        %v5852 = vld [vmem:[#allocation8 + $0x40] sm:$0xff]
        %v5853 = vld [vmem:[#allocation8 + $0x48] sm:$0xff]
        %v5854 = vld [vmem:[#allocation8 + $0x50] sm:$0xff]
        %v5855 = vld [vmem:[#allocation8 + $0x58] sm:$0xff]
        %v5856 = vld [vmem:[#allocation8 + $0x60] sm:$0xff]
        %v5857 = vld [vmem:[#allocation8 + $0x68] sm:$0xff]
        %v5858 = vld [vmem:[#allocation8 + $0x70] sm:$0xff]
        %v5859 = vld [vmem:[#allocation8 + $0x78] sm:$0xff]
        %v5861 = vlaneseq
        %v5862 = vshrl.u32 %v5861, 7
        %v5863 = vsub.s32 0, %v5862
        %v5864 = vrot.slane %v339, %v5863
        %v5865 = vlaneseq
        %v5866 = vshrl.u32 %v5865, 7
        %v5867 = vsub.s32 1, %v5866
        %v5868 = vrot.slane %v339, %v5867
        %v5887 = vunpack.c.l.b16 %v5844
        %v5888 = vunpack.c.h.b16 %v5844
        %v5889 = vunpack.c.l.b16 %v5845
        %v5890 = vunpack.c.h.b16 %v5845
        %v5891 = vunpack.c.l.b16 %v5846
        %v5892 = vunpack.c.h.b16 %v5846
        %v5893 = vunpack.c.l.b16 %v5847
        %v5894 = vunpack.c.h.b16 %v5847
        %v5895 = vunpack.c.l.b16 %v5848
        %v5896 = vunpack.c.h.b16 %v5848
        %v5897 = vunpack.c.l.b16 %v5849
        %v5898 = vunpack.c.h.b16 %v5849
        %v5899 = vunpack.c.l.b16 %v5850
        %v5900 = vunpack.c.h.b16 %v5850
        %v5901 = vunpack.c.l.b16 %v5851
        %v5902 = vunpack.c.h.b16 %v5851
        %v5903 = vunpack.c.l.b16 %v5852
        %v5904 = vunpack.c.h.b16 %v5852
        %v5905 = vunpack.c.l.b16 %v5853
        %v5906 = vunpack.c.h.b16 %v5853
        %v5907 = vunpack.c.l.b16 %v5854
        %v5908 = vunpack.c.h.b16 %v5854
        %v5909 = vunpack.c.l.b16 %v5855
        %v5910 = vunpack.c.h.b16 %v5855
        %v5911 = vunpack.c.l.b16 %v5856
        %v5912 = vunpack.c.h.b16 %v5856
        %v5913 = vunpack.c.l.b16 %v5857
        %v5914 = vunpack.c.h.b16 %v5857
        %v5915 = vunpack.c.l.b16 %v5858
        %v5916 = vunpack.c.h.b16 %v5858
        %v5917 = vunpack.c.l.b16 %v5859
        %v5918 = vunpack.c.h.b16 %v5859
        %v5919 = vpack.c.b16 %v5889, %v5887
        %v5920 = vpack.c.b16 %v5890, %v5888
        %v5921 = vpack.c.b16 %v5893, %v5891
        %v5922 = vpack.c.b16 %v5894, %v5892
        %v5923 = vpack.c.b16 %v5897, %v5895
        %v5924 = vpack.c.b16 %v5898, %v5896
        %v5925 = vpack.c.b16 %v5901, %v5899
        %v5926 = vpack.c.b16 %v5902, %v5900
        %v5927 = vpack.c.b16 %v5905, %v5903
        %v5928 = vpack.c.b16 %v5906, %v5904
        %v5929 = vpack.c.b16 %v5909, %v5907
        %v5930 = vpack.c.b16 %v5910, %v5908
        %v5931 = vpack.c.b16 %v5913, %v5911
        %v5932 = vpack.c.b16 %v5914, %v5912
        %v5933 = vpack.c.b16 %v5917, %v5915
        %v5934 = vpack.c.b16 %v5918, %v5916
        %5951 = vmatprep.subr.bf16.mxu0 %v5920
        %5952 = vmatpush1.bf16.msra.mxu0 %v5919
        %5953 = vmatprep.subr.bf16.mxu0 %v5922
        %5954 = vmatpush1.bf16.msra.mxu0 %v5921
        %5955 = vmatprep.subr.bf16.mxu0 %v5924
        %5956 = vmatpush1.bf16.msra.mxu0 %v5923
        %5957 = vmatprep.subr.bf16.mxu0 %v5926
        %5958 = vmatpush1.bf16.msra.mxu0 %v5925
        %5959 = vmatprep.subr.bf16.mxu0 %v5928
        %5960 = vmatpush1.bf16.msra.mxu0 %v5927
        %5961 = vmatprep.subr.bf16.mxu0 %v5930
        %5962 = vmatpush1.bf16.msra.mxu0 %v5929
        %5963 = vmatprep.subr.bf16.mxu0 %v5932
        %5964 = vmatpush1.bf16.msra.mxu0 %v5931
        %5965 = vmatprep.subr.bf16.mxu0 %v5934
        %5966 = vmatpush1.bf16.msra.mxu0 %v5933
        %5967 = vmatprep.subr.bf16.mxu0 0
        %5968 = vmatpush1.bf16.msra.mxu0 0
        %5969 = vmatprep.subr.bf16.mxu0 0
        %5970 = vmatpush1.bf16.msra.mxu0 0
        %5971 = vmatprep.subr.bf16.mxu0 0
        %5972 = vmatpush1.bf16.msra.mxu0 0
        %5973 = vmatprep.subr.bf16.mxu0 0
        %5974 = vmatpush1.bf16.msra.mxu0 0
        %5975 = vmatprep.subr.bf16.mxu0 0
        %5976 = vmatpush1.bf16.msra.mxu0 0
        %5977 = vmatprep.subr.bf16.mxu0 0
        %5978 = vmatpush1.bf16.msra.mxu0 0
        %5979 = vmatprep.subr.bf16.mxu0 0
        %5980 = vmatpush1.bf16.msra.mxu0 0
        %5981 = vmatprep.subr.bf16.mxu0 0
        %5982 = vmatpush1.bf16.msra.mxu0 0
        %5983 = vmatprep.mubr.bf16.mxu0 0
        %5984 = vmatmul.mubr.bf16.gmra.mrb[0].mxu0 %v5836
        %v5985 = vpop.f32.mrb[0].mxu0
        %v5986 = vadd.f32 %v5864, %v5985
        %v5987 = vpop.f32.mrb[0].mxu0
        %v5988 = vadd.f32 %v5868, %v5987
        %v5989 = vpop.f32.mrb[0].mxu0
        %v5990 = vadd.f32 %v5864, %v5989
        %v5991 = vpop.f32.mrb[0].mxu0
        %v5992 = vadd.f32 %v5868, %v5991
        %5993 = vmatprep.mubr.bf16.mxu0 0
        %5994 = vmatmul.mubr.bf16.gmra.mrb[0].mxu0 %v5837
        %v5995 = vpop.f32.mrb[0].mxu0
        %v5996 = vadd.f32 %v5864, %v5995
        %v5997 = vpop.f32.mrb[0].mxu0
        %v5998 = vadd.f32 %v5868, %v5997
        %v5999 = vpop.f32.mrb[0].mxu0
        %v6000 = vadd.f32 %v5864, %v5999
        %v6001 = vpop.f32.mrb[0].mxu0
        %v6002 = vadd.f32 %v5868, %v6001
        %6003 = vmatprep.mubr.bf16.mxu0 0
        %6004 = vmatmul.mubr.bf16.gmra.mrb[0].mxu0 %v5838
        %v6005 = vpop.f32.mrb[0].mxu0
        %v6006 = vadd.f32 %v5864, %v6005
        %v6007 = vpop.f32.mrb[0].mxu0
        %v6008 = vadd.f32 %v5868, %v6007
        %v6009 = vpop.f32.mrb[0].mxu0
        %v6010 = vadd.f32 %v5864, %v6009
        %v6011 = vpop.f32.mrb[0].mxu0
        %v6012 = vadd.f32 %v5868, %v6011
        %6013 = vmatprep.mubr.bf16.mxu0 0
        %6014 = vmatmul.mubr.bf16.gmra.mrb[0].mxu0 %v5839
        %v6015 = vpop.f32.mrb[0].mxu0
        %v6016 = vadd.f32 %v5864, %v6015
        %v6017 = vpop.f32.mrb[0].mxu0
        %v6018 = vadd.f32 %v5868, %v6017
        %v6019 = vpop.f32.mrb[0].mxu0
        %v6020 = vadd.f32 %v5864, %v6019
        %v6021 = vpop.f32.mrb[0].mxu0
        %v6022 = vadd.f32 %v5868, %v6021
        %6023 = vmatprep.mubr.bf16.mxu0 0
        %6024 = vmatmul.mubr.bf16.gmra.mrb[0].mxu0 %v5840
        %v6025 = vpop.f32.mrb[0].mxu0
        %v6026 = vadd.f32 %v5864, %v6025
        %v6027 = vpop.f32.mrb[0].mxu0
        %v6028 = vadd.f32 %v5868, %v6027
        %v6029 = vpop.f32.mrb[0].mxu0
        %v6030 = vadd.f32 %v5864, %v6029
        %v6031 = vpop.f32.mrb[0].mxu0
        %v6032 = vadd.f32 %v5868, %v6031
        %6033 = vmatprep.mubr.bf16.mxu0 0
        %6034 = vmatmul.mubr.bf16.gmra.mrb[0].mxu0 %v5841
        %v6035 = vpop.f32.mrb[0].mxu0
        %v6036 = vadd.f32 %v5864, %v6035
        %v6037 = vpop.f32.mrb[0].mxu0
        %v6038 = vadd.f32 %v5868, %v6037
        %v6039 = vpop.f32.mrb[0].mxu0
        %v6040 = vadd.f32 %v5864, %v6039
        %v6041 = vpop.f32.mrb[0].mxu0
        %v6042 = vadd.f32 %v5868, %v6041
        %6043 = vmatprep.mubr.bf16.mxu0 0
        %6044 = vmatmul.mubr.bf16.gmra.mrb[0].mxu0 %v5842
        %v6045 = vpop.f32.mrb[0].mxu0
        %v6046 = vadd.f32 %v5864, %v6045
        %v6047 = vpop.f32.mrb[0].mxu0
        %v6048 = vadd.f32 %v5868, %v6047
        %v6049 = vpop.f32.mrb[0].mxu0
        %v6050 = vadd.f32 %v5864, %v6049
        %v6051 = vpop.f32.mrb[0].mxu0
        %v6052 = vadd.f32 %v5868, %v6051
        %6053 = vmatprep.mubr.bf16.mxu0 0
        %6054 = vmatmul.mubr.bf16.gmra.mrb[0].mxu0 %v5843
        %v6055 = vpop.f32.mrb[0].mxu0
        %v6056 = vadd.f32 %v5864, %v6055
        %v6057 = vpop.f32.mrb[0].mxu0
        %v6058 = vadd.f32 %v5868, %v6057
        %v6059 = vpop.f32.mrb[0].mxu0
        %v6060 = vadd.f32 %v5864, %v6059
        %v6061 = vpop.f32.mrb[0].mxu0
        %v6062 = vadd.f32 %v5868, %v6061
        %6063 = vdwg.mxu0
        %v6064 = vmax.f32 %v5986, 0.0
        %v6065 = vmax.f32 %v5988, 0.0
        %v6066 = vmax.f32 %v5990, 0.0
        %v6067 = vmax.f32 %v5992, 0.0
        %v6068 = vmax.f32 %v5996, 0.0
        %v6069 = vmax.f32 %v5998, 0.0
        %v6070 = vmax.f32 %v6000, 0.0
        %v6071 = vmax.f32 %v6002, 0.0
        %v6072 = vmax.f32 %v6006, 0.0
        %v6073 = vmax.f32 %v6008, 0.0
        %v6074 = vmax.f32 %v6010, 0.0
        %v6075 = vmax.f32 %v6012, 0.0
        %v6076 = vmax.f32 %v6016, 0.0
        %v6077 = vmax.f32 %v6018, 0.0
        %v6078 = vmax.f32 %v6020, 0.0
        %v6079 = vmax.f32 %v6022, 0.0
        %v6080 = vmax.f32 %v6026, 0.0
        %v6081 = vmax.f32 %v6028, 0.0
        %v6082 = vmax.f32 %v6030, 0.0
        %v6083 = vmax.f32 %v6032, 0.0
        %v6084 = vmax.f32 %v6036, 0.0
        %v6085 = vmax.f32 %v6038, 0.0
        %v6086 = vmax.f32 %v6040, 0.0
        %v6087 = vmax.f32 %v6042, 0.0
        %v6088 = vmax.f32 %v6046, 0.0
        %v6089 = vmax.f32 %v6048, 0.0
        %v6090 = vmax.f32 %v6050, 0.0
        %v6091 = vmax.f32 %v6052, 0.0
        %v6092 = vmax.f32 %v6056, 0.0
        %v6093 = vmax.f32 %v6058, 0.0
        %v6094 = vmax.f32 %v6060, 0.0
        %v6095 = vmax.f32 %v6062, 0.0
        %v6096 = vpack.c.bf16 %v6066, %v6064
        %v6097 = vpack.c.bf16 %v6067, %v6065
        %v6098 = vpack.c.bf16 %v6070, %v6068
        %v6099 = vpack.c.bf16 %v6071, %v6069
        %v6100 = vpack.c.bf16 %v6074, %v6072
        %v6101 = vpack.c.bf16 %v6075, %v6073
        %v6102 = vpack.c.bf16 %v6078, %v6076
        %v6103 = vpack.c.bf16 %v6079, %v6077
        %v6104 = vpack.c.bf16 %v6082, %v6080
        %v6105 = vpack.c.bf16 %v6083, %v6081
        %v6106 = vpack.c.bf16 %v6086, %v6084
        %v6107 = vpack.c.bf16 %v6087, %v6085
        %v6108 = vpack.c.bf16 %v6090, %v6088
        %v6109 = vpack.c.bf16 %v6091, %v6089
        %v6110 = vpack.c.bf16 %v6094, %v6092
        %v6111 = vpack.c.bf16 %v6095, %v6093
        %v6112 = vld [vmem:[#allocation10] sm:$0xf]
        %v6113 = vld [vmem:[#allocation10 + $0x4] sm:$0xf]
        %v6114 = vld [vmem:[#allocation10 + $0x8] sm:$0xf]
        %v6115 = vld [vmem:[#allocation10 + $0xc] sm:$0xf]
        %v6116 = vld [vmem:[#allocation10 + $0x10] sm:$0xf]
        %v6117 = vld [vmem:[#allocation10 + $0x14] sm:$0xf]
        %v6118 = vld [vmem:[#allocation10 + $0x18] sm:$0xf]
        %v6119 = vld [vmem:[#allocation10 + $0x1c] sm:$0xf]
        %v6120 = vld [vmem:[#allocation10 + $0x20] sm:$0xf]
        %v6121 = vld [vmem:[#allocation10 + $0x24] sm:$0xf]
        %v6122 = vld [vmem:[#allocation10 + $0x28] sm:$0xf]
        %v6123 = vld [vmem:[#allocation10 + $0x2c] sm:$0xf]
        %v6124 = vld [vmem:[#allocation10 + $0x30] sm:$0xf]
        %v6125 = vld [vmem:[#allocation10 + $0x34] sm:$0xf]
        %v6126 = vld [vmem:[#allocation10 + $0x38] sm:$0xf]
        %v6127 = vld [vmem:[#allocation10 + $0x3c] sm:$0xf]
        %v6128 = vld [vmem:[#allocation10 + $0x40] sm:$0xf]
        %v6129 = vld [vmem:[#allocation10 + $0x44] sm:$0xf]
        %v6130 = vld [vmem:[#allocation10 + $0x48] sm:$0xf]
        %v6131 = vld [vmem:[#allocation10 + $0x4c] sm:$0xf]
        %v6132 = vld [vmem:[#allocation10 + $0x50] sm:$0xf]
        %v6133 = vld [vmem:[#allocation10 + $0x54] sm:$0xf]
        %v6134 = vld [vmem:[#allocation10 + $0x58] sm:$0xf]
        %v6135 = vld [vmem:[#allocation10 + $0x5c] sm:$0xf]
        %v6136 = vld [vmem:[#allocation10 + $0x60] sm:$0xf]
        %v6137 = vld [vmem:[#allocation10 + $0x64] sm:$0xf]
        %v6138 = vld [vmem:[#allocation10 + $0x68] sm:$0xf]
        %v6139 = vld [vmem:[#allocation10 + $0x6c] sm:$0xf]
        %v6140 = vld [vmem:[#allocation10 + $0x70] sm:$0xf]
        %v6141 = vld [vmem:[#allocation10 + $0x74] sm:$0xf]
        %v6142 = vld [vmem:[#allocation10 + $0x78] sm:$0xf]
        %v6143 = vld [vmem:[#allocation10 + $0x7c] sm:$0xf]
        %v6176 = vunpack.c.l.b16 %v6112
        %v6177 = vunpack.c.l.b16 %v6113
        %v6178 = vunpack.c.l.b16 %v6114
        %v6179 = vunpack.c.l.b16 %v6115
        %v6180 = vunpack.c.l.b16 %v6116
        %v6181 = vunpack.c.l.b16 %v6117
        %v6182 = vunpack.c.l.b16 %v6118
        %v6183 = vunpack.c.l.b16 %v6119
        %v6184 = vunpack.c.l.b16 %v6120
        %v6185 = vunpack.c.l.b16 %v6121
        %v6186 = vunpack.c.l.b16 %v6122
        %v6187 = vunpack.c.l.b16 %v6123
        %v6188 = vunpack.c.l.b16 %v6124
        %v6189 = vunpack.c.l.b16 %v6125
        %v6190 = vunpack.c.l.b16 %v6126
        %v6191 = vunpack.c.l.b16 %v6127
        %v6192 = vunpack.c.l.b16 %v6128
        %v6193 = vunpack.c.l.b16 %v6129
        %v6194 = vunpack.c.l.b16 %v6130
        %v6195 = vunpack.c.l.b16 %v6131
        %v6196 = vunpack.c.l.b16 %v6132
        %v6197 = vunpack.c.l.b16 %v6133
        %v6198 = vunpack.c.l.b16 %v6134
        %v6199 = vunpack.c.l.b16 %v6135
        %v6200 = vunpack.c.l.b16 %v6136
        %v6201 = vunpack.c.l.b16 %v6137
        %v6202 = vunpack.c.l.b16 %v6138
        %v6203 = vunpack.c.l.b16 %v6139
        %v6204 = vunpack.c.l.b16 %v6140
        %v6205 = vunpack.c.l.b16 %v6141
        %v6206 = vunpack.c.l.b16 %v6142
        %v6207 = vunpack.c.l.b16 %v6143
        %v6208 = vpack.c.b16 %v6177, %v6176
        %v6209 = vpack.c.b16 %v6179, %v6178
        %v6210 = vpack.c.b16 %v6181, %v6180
        %v6211 = vpack.c.b16 %v6183, %v6182
        %v6212 = vpack.c.b16 %v6185, %v6184
        %v6213 = vpack.c.b16 %v6187, %v6186
        %v6214 = vpack.c.b16 %v6189, %v6188
        %v6215 = vpack.c.b16 %v6191, %v6190
        %v6216 = vpack.c.b16 %v6193, %v6192
        %v6217 = vpack.c.b16 %v6195, %v6194
        %v6218 = vpack.c.b16 %v6197, %v6196
        %v6219 = vpack.c.b16 %v6199, %v6198
        %v6220 = vpack.c.b16 %v6201, %v6200
        %v6221 = vpack.c.b16 %v6203, %v6202
        %v6222 = vpack.c.b16 %v6205, %v6204
        %v6223 = vpack.c.b16 %v6207, %v6206
        %6240 = vmatprep.subr.bf16.mxu0 0
        %6241 = vmatpush1.bf16.msra.mxu0 %v6208
        %6242 = vmatprep.subr.bf16.mxu0 0
        %6243 = vmatpush1.bf16.msra.mxu0 %v6209
        %6244 = vmatprep.subr.bf16.mxu0 0
        %6245 = vmatpush1.bf16.msra.mxu0 %v6210
        %6246 = vmatprep.subr.bf16.mxu0 0
        %6247 = vmatpush1.bf16.msra.mxu0 %v6211
        %6248 = vmatprep.subr.bf16.mxu0 0
        %6249 = vmatpush1.bf16.msra.mxu0 %v6212
        %6250 = vmatprep.subr.bf16.mxu0 0
        %6251 = vmatpush1.bf16.msra.mxu0 %v6213
        %6252 = vmatprep.subr.bf16.mxu0 0
        %6253 = vmatpush1.bf16.msra.mxu0 %v6214
        %6254 = vmatprep.subr.bf16.mxu0 0
        %6255 = vmatpush1.bf16.msra.mxu0 %v6215
        %6256 = vmatprep.subr.bf16.mxu0 0
        %6257 = vmatpush1.bf16.msra.mxu0 %v6216
        %6258 = vmatprep.subr.bf16.mxu0 0
        %6259 = vmatpush1.bf16.msra.mxu0 %v6217
        %6260 = vmatprep.subr.bf16.mxu0 0
        %6261 = vmatpush1.bf16.msra.mxu0 %v6218
        %6262 = vmatprep.subr.bf16.mxu0 0
        %6263 = vmatpush1.bf16.msra.mxu0 %v6219
        %6264 = vmatprep.subr.bf16.mxu0 0
        %6265 = vmatpush1.bf16.msra.mxu0 %v6220
        %6266 = vmatprep.subr.bf16.mxu0 0
        %6267 = vmatpush1.bf16.msra.mxu0 %v6221
        %6268 = vmatprep.subr.bf16.mxu0 0
        %6269 = vmatpush1.bf16.msra.mxu0 %v6222
        %6270 = vmatprep.subr.bf16.mxu0 0
        %6271 = vmatpush1.bf16.msra.mxu0 %v6223
        %6272 = vmatprep.mubr.bf16.mxu0 %v6097
        %6273 = vmatmul.mubr.bf16.gmra.mrb[0].mxu0 %v6096
        %v6274 = vpop.f32.mrb[0].mxu0
        %v6275 = vadd.f32 0.0, %v6274
        %v6276 = vpop.f32.mrb[0].mxu0
        %v6277 = vpop.f32.mrb[0].mxu0
        %v6278 = vadd.f32 0.0, %v6277
        %v6279 = vpop.f32.mrb[0].mxu0
        %6280 = vmatprep.mubr.bf16.mxu0 %v6099
        %6281 = vmatmul.mubr.bf16.gmra.mrb[0].mxu0 %v6098
        %v6282 = vpop.f32.mrb[0].mxu0
        %v6283 = vadd.f32 0.0, %v6282
        %v6284 = vpop.f32.mrb[0].mxu0
        %v6285 = vpop.f32.mrb[0].mxu0
        %v6286 = vadd.f32 0.0, %v6285
        %v6287 = vpop.f32.mrb[0].mxu0
        %6288 = vmatprep.mubr.bf16.mxu0 %v6101
        %6289 = vmatmul.mubr.bf16.gmra.mrb[0].mxu0 %v6100
        %v6290 = vpop.f32.mrb[0].mxu0
        %v6291 = vadd.f32 0.0, %v6290
        %v6292 = vpop.f32.mrb[0].mxu0
        %v6293 = vpop.f32.mrb[0].mxu0
        %v6294 = vadd.f32 0.0, %v6293
        %v6295 = vpop.f32.mrb[0].mxu0
        %6296 = vmatprep.mubr.bf16.mxu0 %v6103
        %6297 = vmatmul.mubr.bf16.gmra.mrb[0].mxu0 %v6102
        %v6298 = vpop.f32.mrb[0].mxu0
        %v6299 = vadd.f32 0.0, %v6298
        %v6300 = vpop.f32.mrb[0].mxu0
        %v6301 = vpop.f32.mrb[0].mxu0
        %v6302 = vadd.f32 0.0, %v6301
        %v6303 = vpop.f32.mrb[0].mxu0
        %6304 = vmatprep.mubr.bf16.mxu0 %v6105
        %6305 = vmatmul.mubr.bf16.gmra.mrb[0].mxu0 %v6104
        %v6306 = vpop.f32.mrb[0].mxu0
        %v6307 = vadd.f32 0.0, %v6306
        %v6308 = vpop.f32.mrb[0].mxu0
        %v6309 = vpop.f32.mrb[0].mxu0
        %v6310 = vadd.f32 0.0, %v6309
        %v6311 = vpop.f32.mrb[0].mxu0
        %6312 = vmatprep.mubr.bf16.mxu0 %v6107
        %6313 = vmatmul.mubr.bf16.gmra.mrb[0].mxu0 %v6106
        %v6314 = vpop.f32.mrb[0].mxu0
        %v6315 = vadd.f32 0.0, %v6314
        %v6316 = vpop.f32.mrb[0].mxu0
        %v6317 = vpop.f32.mrb[0].mxu0
        %v6318 = vadd.f32 0.0, %v6317
        %v6319 = vpop.f32.mrb[0].mxu0
        %6320 = vmatprep.mubr.bf16.mxu0 %v6109
        %6321 = vmatmul.mubr.bf16.gmra.mrb[0].mxu0 %v6108
        %v6322 = vpop.f32.mrb[0].mxu0
        %v6323 = vadd.f32 0.0, %v6322
        %v6324 = vpop.f32.mrb[0].mxu0
        %v6325 = vpop.f32.mrb[0].mxu0
        %v6326 = vadd.f32 0.0, %v6325
        %v6327 = vpop.f32.mrb[0].mxu0
        %6328 = vmatprep.mubr.bf16.mxu0 %v6111
        %6329 = vmatmul.mubr.bf16.gmra.mrb[0].mxu0 %v6110
        %v6330 = vpop.f32.mrb[0].mxu0
        %v6331 = vadd.f32 0.0, %v6330
        %v6332 = vpop.f32.mrb[0].mxu0
        %v6333 = vpop.f32.mrb[0].mxu0
        %v6334 = vadd.f32 0.0, %v6333
        %v6335 = vpop.f32.mrb[0].mxu0
        %6336 = vdwg.mxu0
        %v6337 = vadd.f32 %v5612, %v6275
        %v6338 = vadd.f32 %v5613, %v6278
        %v6339 = vadd.f32 %v5614, %v6283
        %v6340 = vadd.f32 %v5615, %v6286
        %v6341 = vadd.f32 %v5616, %v6291
        %v6342 = vadd.f32 %v5617, %v6294
        %v6343 = vadd.f32 %v5618, %v6299
        %v6344 = vadd.f32 %v5619, %v6302
        %v6345 = vadd.f32 %v5620, %v6307
        %v6346 = vadd.f32 %v5621, %v6310
        %v6347 = vadd.f32 %v5622, %v6315
        %v6348 = vadd.f32 %v5623, %v6318
        %v6349 = vadd.f32 %v5624, %v6323
        %v6350 = vadd.f32 %v5625, %v6326
        %v6351 = vadd.f32 %v5626, %v6331
        %v6352 = vadd.f32 %v5627, %v6334
        %v6353 = vadd.f32 %v6337, %v337
        %v6354 = vadd.f32 %v6338, %v337
        %v6355 = vadd.f32 %v6339, %v337
        %v6356 = vadd.f32 %v6340, %v337
        %v6357 = vadd.f32 %v6341, %v337
        %v6358 = vadd.f32 %v6342, %v337
        %v6359 = vadd.f32 %v6343, %v337
        %v6360 = vadd.f32 %v6344, %v337
        %v6361 = vadd.f32 %v6345, %v337
        %v6362 = vadd.f32 %v6346, %v337
        %v6363 = vadd.f32 %v6347, %v337
        %v6364 = vadd.f32 %v6348, %v337
        %v6365 = vadd.f32 %v6349, %v337
        %v6366 = vadd.f32 %v6350, %v337
        %v6367 = vadd.f32 %v6351, %v337
        %v6368 = vadd.f32 %v6352, %v337
        %6369 = vst [vmem:[%s328] sm:$0xff] %v6353
        %6370 = vst [vmem:[%s328 + $0x8] sm:$0xff] %v6354
        %6371 = vst [vmem:[%s328 + $0x10] sm:$0xff] %v6355
        %6372 = vst [vmem:[%s328 + $0x18] sm:$0xff] %v6356
        %6373 = vst [vmem:[%s328 + $0x20] sm:$0xff] %v6357
        %6374 = vst [vmem:[%s328 + $0x28] sm:$0xff] %v6358
        %6375 = vst [vmem:[%s328 + $0x30] sm:$0xff] %v6359
        %6376 = vst [vmem:[%s328 + $0x38] sm:$0xff] %v6360
        %6377 = vst [vmem:[%s328 + $0x40] sm:$0xff] %v6361
        %6378 = vst [vmem:[%s328 + $0x48] sm:$0xff] %v6362
        %6379 = vst [vmem:[%s328 + $0x50] sm:$0xff] %v6363
        %6380 = vst [vmem:[%s328 + $0x58] sm:$0xff] %v6364
        %6381 = vst [vmem:[%s328 + $0x60] sm:$0xff] %v6365
        %6382 = vst [vmem:[%s328 + $0x68] sm:$0xff] %v6366
        %6383 = vst [vmem:[%s328 + $0x70] sm:$0xff] %v6367
        %6384 = vst [vmem:[%s328 + $0x78] sm:$0xff] %v6368
        %s6385 = sand.u32 %s164, 1
        %s6386 = scalar_lea.sflag [#allocation4], %s6385
        %s6387 = sand.u32 %s164, 1
        %s6388 = smul.addr %s6387, 128
        %s6389 = scalar_lea.vmem [#allocation11], %s6388
        // Predicated region
        $region65: #{tpu_custom_call.1} parent=43 // pred_check
          %p6390 = pneg %p174
        $region66: #{tpu_custom_call.1} parent=43 // pred_check_branch
          %6392 = sbr.rel (%p6390) target = $region68
        $region67: #{tpu_custom_call.1} parent=43 // pred_region
          %s6393 = smul.u32 8, %s25
          %s6395 = ssub.s32 2048, 2048
          %6396 = vsyncadd %s6386, %s6395
          %s6397 = smul.addr %s6393, 2
          %s6398 = smul.addr %s6397, 128
          %s6399 = scalar_lea.hbm %s6, %s6398
          %s6400 = sshll.u32 %s6389, 4
          %s6401 = int_to_ptr.vmem [resolvable:$true] %s6400
          %6406 = dma.vmem_to_hbm [thread:$0]  %s6401, 2048, %s6399, %s6386, 128, 128, 8
        $region68: #{tpu_custom_call.1} parent=43 // pred_fallthru
          _
      $region44: #{tpu_custom_call.1} parent=5 // pred_fallthru
        _
      %p6407 = scmp.le.s32.totalorder 2, %s20
      // Predicated region
      $region69: #{tpu_custom_call.1} parent=5 // pred_check
        %p6408 = pneg %p6407
      $region70: #{tpu_custom_call.1} parent=5 // pred_check_branch
        %6410 = sbr.rel (%p6408) target = $region72
      $region71: #{tpu_custom_call.1} parent=5 // pred_region
        %s6411 = ssub.s32 %s20, 2
        // Predicated region
        $region73: #{tpu_custom_call.1} parent=71 // pred_check
          %p6412 = pneg %p180
        $region74: #{tpu_custom_call.1} parent=71 // pred_check_branch
          %6414 = sbr.rel (%p6412) target = $region76
        $region75: #{tpu_custom_call.1} parent=71 // pred_region
          %s6415 = sand.u32 %s165, 1
          %s6416 = scalar_lea.sflag [#allocation4], %s6415
          %s6417 = sand.u32 %s165, 1
          %s6418 = smul.addr %s6417, 128
          %s6419 = scalar_lea.vmem [#allocation11], %s6418
          %6420 = dma.done %s6416, 2048
        $region76: #{tpu_custom_call.1} parent=71 // pred_fallthru
          _
      $region72: #{tpu_custom_call.1} parent=5 // pred_fallthru
        _
    $region6: #{tpu_custom_call.1} parent=1 // loop_footer
      %s24 = sadd.s32 1, %s20
    $region7: #{tpu_custom_call.1} parent=1 // loop_footer_branch
      %19 = sbr.rel target = $region3
    $region8: #{tpu_custom_call.1} parent=1 // loop_exit
      _
    %6421 = vsyncpa [#allocation3], 1
    %s6422 = scalar_lea.sflag [#allocation3], 1
    %6423 = vsyncpa %s6422, 1
    %6424 = vsyncpa [#allocation6], 1
    %6425 = vsyncpa [#allocation9], 1
    %6426 = vsyncpa [#allocation4], 1
    %s6427 = scalar_lea.sflag [#allocation4], 1
    %6428 = vsyncpa %s6427, 1

</llo_original>
